<compile_context>
chip_gen: v6e
topology: v6e:2x2x1
jax: 0.10.0
libtpu: 0.0.40
codegen_flags: <defaults>
</compile_context>

<pallas_src>
import functools
import math

import numpy as np
import jax
import jax.numpy as jnp
from jax.experimental import pallas as pl
from jax.experimental.pallas import tpu as pltpu


# ----------------------------------------------------------------------------
# In-kernel helpers
# ----------------------------------------------------------------------------

def _layernorm(x, g, b, eps):
    mean = jnp.mean(x, axis=-1, keepdims=True)
    c = x - mean
    var = jnp.mean(c * c, axis=-1, keepdims=True)
    return c * jax.lax.rsqrt(var + eps) * g + b


def _mm(a, b):
    """bf16-input / f32-accumulate MXU matmul."""
    return jnp.dot(a.astype(jnp.bfloat16), b.astype(jnp.bfloat16),
                   preferred_element_type=jnp.float32)


# ----------------------------------------------------------------------------
# Kernel 1: fused input stem (one batch row per grid step)
#   mask = (sum(input, -1) == padding_idx)                      [torch-exact]
#   out  = LayerNorm(relu(input @ fc_w + fc_b))                 [dropout = id]
# ----------------------------------------------------------------------------

def _stem_kernel(x_ref, w_ref, b_ref, g_ref, beta_ref, o_ref, m_ref,
                 *, padding_idx, eps):
    f32 = jnp.float32
    xb = x_ref[...].astype(f32)                                 # (1, S, d_in)

    # Padding mask, same semantics as torch (exact float equality on the sum).
    s = jnp.sum(xb, axis=-1)                                    # (1, S)
    m_ref[0] = (s == jnp.float32(padding_idx)).astype(f32)

    x = xb[0]                                                   # (S, d_in)
    y = _mm(x, w_ref[...]) + b_ref[...]                         # (S, d_model)
    y = jnp.maximum(y, 0.0)                                     # relu
    o_ref[0] = _layernorm(y, g_ref[...], beta_ref[...], eps).astype(o_ref.dtype)


# ----------------------------------------------------------------------------
# Kernel 2: fused EncoderLayer_Box (one batch row per grid step)
#   q_in = k_in = x + pos ; v_in = x
#   att  = MHA(q_in, k_in, v_in, mask) ; att_ln = LN(q_in + att @ Wo)
#   out  = LN(att_ln + W2 relu(W1 att_ln))
# ----------------------------------------------------------------------------

def _layer_kernel(x_ref, pos_ref, mask_ref,
                  wqk_ref, bqk_ref, wv_ref, bv_ref, wo_ref, bo_ref,
                  ln1g_ref, ln1b_ref,
                  w1_ref, b1_ref, w2_ref, b2_ref, ln2g_ref, ln2b_ref,
                  o_ref, *, h, d_k, d_v, eps, scale):
    f32 = jnp.float32
    x = x_ref[0].astype(f32)                                    # (S, D)
    pos = pos_ref[...].astype(f32)                              # (S, D)
    km = mask_ref[0]                                            # (1, S) 1.0 = padded key

    xp = x + pos                                                # queries = keys

    # Fused Q|K projection (lane width 2*h*d_k) on x+pos; V projection on x.
    qk = _mm(xp, wqk_ref[...]) + bqk_ref[...]                   # (S, 2*h*d_k)
    v = _mm(x, wv_ref[...]) + bv_ref[...]                       # (S, h*d_v)

    # Per-head scaled dot-product attention, heads unrolled, all in vregs.
    hk = h * d_k
    heads = []
    for i in range(h):
        qh = qk[:, i * d_k:(i + 1) * d_k].astype(jnp.bfloat16)          # (S, d_k)
        kh = qk[:, hk + i * d_k: hk + (i + 1) * d_k].astype(jnp.bfloat16)
        vh = v[:, i * d_v:(i + 1) * d_v]                                # (S, d_v)
        att = jax.lax.dot_general(qh, kh, (((1,), (1,)), ((), ())),
                                  preferred_element_type=f32) * scale   # (S, S)
        # masked_fill(mask, -inf): huge negative so exp underflows to 0.
        att = jnp.where(km > 0.5, jnp.float32(-1e30), att)
        att = att - jnp.max(att, axis=-1, keepdims=True)
        p = jnp.exp(att)
        p = p * pl.reciprocal(jnp.sum(p, axis=-1, keepdims=True), approx=True)
        heads.append(_mm(p, vh))                                        # (S, d_v)
    att_out = jnp.concatenate(heads, axis=-1)                           # (S, h*d_v)

    # Output projection + residual (queries = x + pos) + LayerNorm.
    o = _mm(att_out, wo_ref[...]) + bo_ref[...]                 # (S, D)
    att_ln = _layernorm(xp + o, ln1g_ref[...], ln1b_ref[...], eps)

    # Position-wise FFN + residual + LayerNorm.
    f = _mm(att_ln, w1_ref[...]) + b1_ref[...]                  # (S, d_ff)
    f = jnp.maximum(f, 0.0)
    f = _mm(f, w2_ref[...]) + b2_ref[...]                       # (S, D)
    out = _layernorm(att_ln + f, ln2g_ref[...], ln2b_ref[...], eps)

    o_ref[0] = out.astype(o_ref.dtype)


# ----------------------------------------------------------------------------
# Pallas wrappers
# ----------------------------------------------------------------------------

def _const_spec(shape):
    """Whole-array block, same block for every grid step (fetched once)."""
    nd = len(shape)
    return pl.BlockSpec(shape, lambda b: (0,) * nd)


def stem_forward(x, params, padding_idx, d_model):
    B, S, d_in = x.shape
    out, mask = pl.pallas_call(
        functools.partial(_stem_kernel, padding_idx=padding_idx, eps=1e-5),
        grid=(B,),
        out_shape=(jax.ShapeDtypeStruct((B, S, d_model), jnp.float32),
                   jax.ShapeDtypeStruct((B, 1, S), jnp.float32)),
        in_specs=[pl.BlockSpec((1, S, d_in), lambda b: (b, 0, 0)),
                  _const_spec(params["fc_w"].shape),
                  _const_spec(params["fc_b"].shape),
                  _const_spec(params["ln0_g"].shape),
                  _const_spec(params["ln0_b"].shape)],
        out_specs=(pl.BlockSpec((1, S, d_model), lambda b: (b, 0, 0)),
                   pl.BlockSpec((1, 1, S), lambda b: (b, 0, 0))),
        compiler_params=pltpu.CompilerParams(
            dimension_semantics=("parallel",)),
    )(x, params["fc_w"], params["fc_b"], params["ln0_g"], params["ln0_b"])
    return out, mask


def encoder_layer(lp, x, mask, pos, *, h, d_k, d_v):
    B, S, D = x.shape
    args = (x, pos, mask,
            lp["wqk"], lp["bqk"], lp["wv"], lp["bv"], lp["wo"], lp["bo"],
            lp["ln1_g"], lp["ln1_b"],
            lp["w1"], lp["b1"], lp["w2"], lp["b2"], lp["ln2_g"], lp["ln2_b"])
    in_specs = ([pl.BlockSpec((1, S, D), lambda b: (b, 0, 0)),
                 _const_spec(pos.shape),
                 pl.BlockSpec((1, 1, S), lambda b: (b, 0, 0))]
                + [_const_spec(a.shape) for a in args[3:]])
    return pl.pallas_call(
        functools.partial(_layer_kernel, h=h, d_k=d_k, d_v=d_v,
                          eps=1e-5, scale=1.0 / math.sqrt(d_k)),
        grid=(B,),
        out_shape=jax.ShapeDtypeStruct((B, S, D), jnp.float32),
        in_specs=in_specs,
        out_specs=pl.BlockSpec((1, S, D), lambda b: (b, 0, 0)),
        compiler_params=pltpu.CompilerParams(
            dimension_semantics=("parallel",)),
    )(*args)


# ----------------------------------------------------------------------------
# Model glue (plain JAX): parameters, positional encoding, layer stacking
# ----------------------------------------------------------------------------

def sine_position_encoding(S, d_model):
    # TODO(synk): the repo's build_position_encoding(512, 'sine') box variant is
    # not reproducible here; standard 1-D sinusoidal encoding, shape (S, d_model).
    pos = np.arange(S, dtype=np.float32)[:, None]
    i = np.arange(d_model // 2, dtype=np.float32)[None, :]
    denom = np.power(10000.0, 2.0 * i / d_model)
    pe = np.zeros((S, d_model), np.float32)
    pe[:, 0::2] = np.sin(pos / denom)
    pe[:, 1::2] = np.cos(pos / denom)
    return jnp.asarray(pe)


def init_params(key, N, d_in, d_model, d_k, d_v, h, d_ff):
    keys = iter(jax.random.split(key, 1 + 6 * N))

    def w(shape, scale=0.05):
        return scale * jax.random.normal(next(keys), shape, dtype=jnp.float32)

    def zb(n):
        return jnp.zeros((1, n), jnp.float32)

    def ones(n):
        return jnp.ones((1, n), jnp.float32)

    params = {
        "fc_w": w((d_in, d_model)), "fc_b": zb(d_model),
        "ln0_g": ones(d_model), "ln0_b": zb(d_model),
        "layers": [],
    }
    for _ in range(N):
        wq, wk = w((d_model, h * d_k)), w((d_model, h * d_k))
        params["layers"].append({
            # Q and K projections fused into one lane-dense weight (Wq | Wk).
            "wqk": jnp.concatenate([wq, wk], axis=1), "bqk": zb(2 * h * d_k),
            "wv": w((d_model, h * d_v)), "bv": zb(h * d_v),
            "wo": w((h * d_v, d_model)), "bo": zb(d_model),
            "ln1_g": ones(d_model), "ln1_b": zb(d_model),
            "w1": w((d_model, d_ff)), "b1": zb(d_ff),
            "w2": w((d_ff, d_model)), "b2": zb(d_model),
            "ln2_g": ones(d_model), "ln2_b": zb(d_model),
        })
    return params


def multi_level_encoder_box_forward(params, x, *, d_model, d_k, d_v, h,
                                    padding_idx):
    B, S, d_in = x.shape

    pe = sine_position_encoding(S, d_model)                     # (S, d_model) const

    # Fused: padding mask + fc + relu + LayerNorm (dropout = identity).
    out, mask = stem_forward(x, params, padding_idx, d_model)   # (B,S,D), (B,1,S)

    for lp in params["layers"]:
        out = encoder_layer(lp, out, mask, pe, h=h, d_k=d_k, d_v=d_v)

    attention_mask = mask.astype(bool)[:, :, None, :]           # (B,1,1,S) like torch
    pos_ = jnp.broadcast_to(pe[None], (B, S, d_model))          # returned like torch pos_
    return out, attention_mask, pos_


# ----------------------------------------------------------------------------
# Main
# ----------------------------------------------------------------------------

if __name__ == "__main__":
    # Small config consistent with MultiLevelEncoder_Box(N, padding_idx, ...)
    B, S, d_in = 2, 8, 16
    d_model, d_k, d_v, h, d_ff, N = 32, 8, 8, 4, 64, 2
    padding_idx = 0

    key = jax.random.PRNGKey(0)
    k_x, k_p = jax.random.split(key)
    x = jax.random.normal(k_x, (B, S, d_in), dtype=jnp.float32)
    params = init_params(k_p, N, d_in, d_model, d_k, d_v, h, d_ff)

    fwd = jax.jit(functools.partial(
        multi_level_encoder_box_forward,
        d_model=d_model, d_k=d_k, d_v=d_v, h=h, padding_idx=padding_idx))

    out, attention_mask, pos = fwd(params, x)
    jax.block_until_ready((out, attention_mask, pos))

    assert out.shape == (B, S, d_model)
    assert attention_mask.shape == (B, 1, 1, S)
    assert pos.shape == (B, S, d_model)
    assert bool(jnp.all(jnp.isfinite(out)))
    print("KERNEL_OK")
</pallas_src>

<mosaic_0001>
module attributes {stable_mosaic.version = 11 : i64} {
  func.func @_layer_kernel(%arg0: i32, %arg1: memref<1x8x32xf32, #tpu.memory_space<vmem>>, %arg2: memref<8x32xf32, #tpu.memory_space<vmem>>, %arg3: memref<1x1x8xf32, #tpu.memory_space<vmem>>, %arg4: memref<32x64xf32, #tpu.memory_space<vmem>>, %arg5: memref<1x64xf32, #tpu.memory_space<vmem>>, %arg6: memref<32x32xf32, #tpu.memory_space<vmem>>, %arg7: memref<1x32xf32, #tpu.memory_space<vmem>>, %arg8: memref<32x32xf32, #tpu.memory_space<vmem>>, %arg9: memref<1x32xf32, #tpu.memory_space<vmem>>, %arg10: memref<1x32xf32, #tpu.memory_space<vmem>>, %arg11: memref<1x32xf32, #tpu.memory_space<vmem>>, %arg12: memref<32x64xf32, #tpu.memory_space<vmem>>, %arg13: memref<1x64xf32, #tpu.memory_space<vmem>>, %arg14: memref<64x32xf32, #tpu.memory_space<vmem>>, %arg15: memref<1x32xf32, #tpu.memory_space<vmem>>, %arg16: memref<1x32xf32, #tpu.memory_space<vmem>>, %arg17: memref<1x32xf32, #tpu.memory_space<vmem>>, %arg18: memref<1x8x32xf32, #tpu.memory_space<vmem>>) attributes {dimension_semantics = [#tpu.dimension_semantics<parallel>], iteration_bounds = array<i64: 2>, scalar_prefetch = 0 : i64, scratch_operands = 0 : i64, tpu.core_type = #tpu.core_type<tc>, window_params = [{transform_indices = @transform_0, window_bounds = array<i64: 1, 8, 32>}, {pipeline_mode = #tpu.pipeline_mode<synchronous>, transform_indices = @transform_1, window_bounds = array<i64: 8, 32>}, {transform_indices = @transform_2, window_bounds = array<i64: 1, 1, 8>}, {pipeline_mode = #tpu.pipeline_mode<synchronous>, transform_indices = @transform_3, window_bounds = array<i64: 32, 64>}, {pipeline_mode = #tpu.pipeline_mode<synchronous>, transform_indices = @transform_4, window_bounds = array<i64: 1, 64>}, {pipeline_mode = #tpu.pipeline_mode<synchronous>, transform_indices = @transform_5, window_bounds = array<i64: 32, 32>}, {pipeline_mode = #tpu.pipeline_mode<synchronous>, transform_indices = @transform_6, window_bounds = array<i64: 1, 32>}, {pipeline_mode = #tpu.pipeline_mode<synchronous>, transform_indices = @transform_7, window_bounds = array<i64: 32, 32>}, {pipeline_mode = #tpu.pipeline_mode<synchronous>, transform_indices = @transform_8, window_bounds = array<i64: 1, 32>}, {pipeline_mode = #tpu.pipeline_mode<synchronous>, transform_indices = @transform_9, window_bounds = array<i64: 1, 32>}, {pipeline_mode = #tpu.pipeline_mode<synchronous>, transform_indices = @transform_10, window_bounds = array<i64: 1, 32>}, {pipeline_mode = #tpu.pipeline_mode<synchronous>, transform_indices = @transform_11, window_bounds = array<i64: 32, 64>}, {pipeline_mode = #tpu.pipeline_mode<synchronous>, transform_indices = @transform_12, window_bounds = array<i64: 1, 64>}, {pipeline_mode = #tpu.pipeline_mode<synchronous>, transform_indices = @transform_13, window_bounds = array<i64: 64, 32>}, {pipeline_mode = #tpu.pipeline_mode<synchronous>, transform_indices = @transform_14, window_bounds = array<i64: 1, 32>}, {pipeline_mode = #tpu.pipeline_mode<synchronous>, transform_indices = @transform_15, window_bounds = array<i64: 1, 32>}, {pipeline_mode = #tpu.pipeline_mode<synchronous>, transform_indices = @transform_16, window_bounds = array<i64: 1, 32>}, {transform_indices = @transform_17, window_bounds = array<i64: 1, 8, 32>}]} {
    %c0 = arith.constant 0 : index
    %c0_0 = arith.constant 0 : index
    %c0_1 = arith.constant 0 : index
    %0 = vector.load %arg1[%c0, %c0_0, %c0_1] : memref<1x8x32xf32, #tpu.memory_space<vmem>>, vector<1x8x32xf32>
    %1 = vector.shape_cast %0 : vector<1x8x32xf32> to vector<8x32xf32>
    %c0_2 = arith.constant 0 : index
    %c0_3 = arith.constant 0 : index
    %2 = vector.load %arg2[%c0_2, %c0_3] : memref<8x32xf32, #tpu.memory_space<vmem>>, vector<8x32xf32>
    %c0_4 = arith.constant 0 : index
    %c0_5 = arith.constant 0 : index
    %c0_6 = arith.constant 0 : index
    %3 = vector.load %arg3[%c0_4, %c0_5, %c0_6] : memref<1x1x8xf32, #tpu.memory_space<vmem>>, vector<1x1x8xf32>
    %4 = vector.shape_cast %3 : vector<1x1x8xf32> to vector<1x8xf32>
    %5 = arith.addf %1, %2 : vector<8x32xf32>
    %c0_7 = arith.constant 0 : index
    %c0_8 = arith.constant 0 : index
    %6 = vector.load %arg4[%c0_7, %c0_8] : memref<32x64xf32, #tpu.memory_space<vmem>>, vector<32x64xf32>
    %7 = arith.truncf %5 : vector<8x32xf32> to vector<8x32xbf16>
    %8 = arith.truncf %6 : vector<32x64xf32> to vector<32x64xbf16>
    %cst = arith.constant dense<0.000000e+00> : vector<8x64xf32>
    %9 = tpu.matmul %7, %8, %cst {dimension_numbers = #tpu.dot_dimension_numbers<[1], [0], [0], [1], [0, 0, 1, 1], [], []>} : vector<8x32xbf16>, vector<32x64xbf16>, vector<8x64xf32> -> vector<8x64xf32>
    %c0_9 = arith.constant 0 : index
    %c0_10 = arith.constant 0 : index
    %10 = vector.load %arg5[%c0_9, %c0_10] : memref<1x64xf32, #tpu.memory_space<vmem>>, vector<1x64xf32>
    %11 = vector.broadcast %10 : vector<1x64xf32> to vector<8x64xf32>
    %12 = arith.addf %9, %11 : vector<8x64xf32>
    %c0_11 = arith.constant 0 : index
    %c0_12 = arith.constant 0 : index
    %13 = vector.load %arg6[%c0_11, %c0_12] : memref<32x32xf32, #tpu.memory_space<vmem>>, vector<32x32xf32>
    %14 = arith.truncf %1 : vector<8x32xf32> to vector<8x32xbf16>
    %15 = arith.truncf %13 : vector<32x32xf32> to vector<32x32xbf16>
    %cst_13 = arith.constant dense<0.000000e+00> : vector<8x32xf32>
    %16 = tpu.matmul %14, %15, %cst_13 {dimension_numbers = #tpu.dot_dimension_numbers<[1], [0], [0], [1], [0, 0, 1, 1], [], []>} : vector<8x32xbf16>, vector<32x32xbf16>, vector<8x32xf32> -> vector<8x32xf32>
    %c0_14 = arith.constant 0 : index
    %c0_15 = arith.constant 0 : index
    %17 = vector.load %arg7[%c0_14, %c0_15] : memref<1x32xf32, #tpu.memory_space<vmem>>, vector<1x32xf32>
    %18 = vector.broadcast %17 : vector<1x32xf32> to vector<8x32xf32>
    %19 = arith.addf %16, %18 : vector<8x32xf32>
    %20 = vector.extract_strided_slice %12 {offsets = [0, 0], sizes = [8, 8], strides = [1, 1]} : vector<8x64xf32> to vector<8x8xf32>
    %21 = arith.truncf %20 : vector<8x8xf32> to vector<8x8xbf16>
    %22 = vector.extract_strided_slice %12 {offsets = [0, 32], sizes = [8, 8], strides = [1, 1]} : vector<8x64xf32> to vector<8x8xf32>
    %23 = arith.truncf %22 : vector<8x8xf32> to vector<8x8xbf16>
    %24 = vector.extract_strided_slice %19 {offsets = [0, 0], sizes = [8, 8], strides = [1, 1]} : vector<8x32xf32> to vector<8x8xf32>
    %cst_16 = arith.constant dense<0.000000e+00> : vector<8x8xf32>
    %25 = tpu.matmul %21, %23, %cst_16 {dimension_numbers = #tpu.dot_dimension_numbers<[1], [1], [0], [0], [0, 0, 1, 0], [], []>} : vector<8x8xbf16>, vector<8x8xbf16>, vector<8x8xf32> -> vector<8x8xf32>
    %cst_17 = arith.constant 0.353553385 : f32
    %26 = vector.broadcast %cst_17 : f32 to vector<8x8xf32>
    %27 = arith.mulf %25, %26 : vector<8x8xf32>
    %cst_18 = arith.constant 5.000000e-01 : f32
    %28 = vector.broadcast %cst_18 : f32 to vector<1x8xf32>
    %29 = arith.cmpf ogt, %4, %28 : vector<1x8xf32>
    %cst_19 = arith.constant -1.000000e+30 : f32
    %30 = vector.shape_cast %29 : vector<1x8xi1> to vector<1x8xi1>
    %31 = vector.broadcast %30 : vector<1x8xi1> to vector<8x8xi1>
    %32 = vector.broadcast %cst_19 : f32 to vector<8x8xf32>
    %33 = arith.select %31, %32, %27 : vector<8x8xi1>, vector<8x8xf32>
    %cst_20 = arith.constant dense<0xFF800000> : vector<8xf32>
    %34 = vector.multi_reduction <maximumf>, %33, %cst_20 [1] : vector<8x8xf32> to vector<8xf32>
    %35 = vector.shape_cast %34 : vector<8xf32> to vector<8x1xf32>
    %36 = vector.broadcast %35 : vector<8x1xf32> to vector<8x8xf32>
    %37 = arith.subf %33, %36 : vector<8x8xf32>
    %38 = math.exp %37 : vector<8x8xf32>
    %cst_21 = arith.constant dense<0.000000e+00> : vector<8xf32>
    %39 = vector.multi_reduction <add>, %38, %cst_21 [1] : vector<8x8xf32> to vector<8xf32>
    %40 = vector.shape_cast %39 : vector<8xf32> to vector<8x1xf32>
    %41 = tpu.reciprocal %40 {approx = true} : vector<8x1xf32> -> vector<8x1xf32>
    %42 = vector.broadcast %41 : vector<8x1xf32> to vector<8x8xf32>
    %43 = arith.mulf %38, %42 : vector<8x8xf32>
    %44 = arith.truncf %43 : vector<8x8xf32> to vector<8x8xbf16>
    %45 = arith.truncf %24 : vector<8x8xf32> to vector<8x8xbf16>
    %cst_22 = arith.constant dense<0.000000e+00> : vector<8x8xf32>
    %46 = tpu.matmul %44, %45, %cst_22 {dimension_numbers = #tpu.dot_dimension_numbers<[1], [0], [0], [1], [0, 0, 1, 1], [], []>} : vector<8x8xbf16>, vector<8x8xbf16>, vector<8x8xf32> -> vector<8x8xf32>
    %47 = vector.extract_strided_slice %12 {offsets = [0, 8], sizes = [8, 8], strides = [1, 1]} : vector<8x64xf32> to vector<8x8xf32>
    %48 = arith.truncf %47 : vector<8x8xf32> to vector<8x8xbf16>
    %49 = vector.extract_strided_slice %12 {offsets = [0, 40], sizes = [8, 8], strides = [1, 1]} : vector<8x64xf32> to vector<8x8xf32>
    %50 = arith.truncf %49 : vector<8x8xf32> to vector<8x8xbf16>
    %51 = vector.extract_strided_slice %19 {offsets = [0, 8], sizes = [8, 8], strides = [1, 1]} : vector<8x32xf32> to vector<8x8xf32>
    %cst_23 = arith.constant dense<0.000000e+00> : vector<8x8xf32>
    %52 = tpu.matmul %48, %50, %cst_23 {dimension_numbers = #tpu.dot_dimension_numbers<[1], [1], [0], [0], [0, 0, 1, 0], [], []>} : vector<8x8xbf16>, vector<8x8xbf16>, vector<8x8xf32> -> vector<8x8xf32>
    %cst_24 = arith.constant 0.353553385 : f32
    %53 = vector.broadcast %cst_24 : f32 to vector<8x8xf32>
    %54 = arith.mulf %52, %53 : vector<8x8xf32>
    %cst_25 = arith.constant 5.000000e-01 : f32
    %55 = vector.broadcast %cst_25 : f32 to vector<1x8xf32>
    %56 = arith.cmpf ogt, %4, %55 : vector<1x8xf32>
    %cst_26 = arith.constant -1.000000e+30 : f32
    %57 = vector.shape_cast %56 : vector<1x8xi1> to vector<1x8xi1>
    %58 = vector.broadcast %57 : vector<1x8xi1> to vector<8x8xi1>
    %59 = vector.broadcast %cst_26 : f32 to vector<8x8xf32>
    %60 = arith.select %58, %59, %54 : vector<8x8xi1>, vector<8x8xf32>
    %cst_27 = arith.constant dense<0xFF800000> : vector<8xf32>
    %61 = vector.multi_reduction <maximumf>, %60, %cst_27 [1] : vector<8x8xf32> to vector<8xf32>
    %62 = vector.shape_cast %61 : vector<8xf32> to vector<8x1xf32>
    %63 = vector.broadcast %62 : vector<8x1xf32> to vector<8x8xf32>
    %64 = arith.subf %60, %63 : vector<8x8xf32>
    %65 = math.exp %64 : vector<8x8xf32>
    %cst_28 = arith.constant dense<0.000000e+00> : vector<8xf32>
    %66 = vector.multi_reduction <add>, %65, %cst_28 [1] : vector<8x8xf32> to vector<8xf32>
    %67 = vector.shape_cast %66 : vector<8xf32> to vector<8x1xf32>
    %68 = tpu.reciprocal %67 {approx = true} : vector<8x1xf32> -> vector<8x1xf32>
    %69 = vector.broadcast %68 : vector<8x1xf32> to vector<8x8xf32>
    %70 = arith.mulf %65, %69 : vector<8x8xf32>
    %71 = arith.truncf %70 : vector<8x8xf32> to vector<8x8xbf16>
    %72 = arith.truncf %51 : vector<8x8xf32> to vector<8x8xbf16>
    %cst_29 = arith.constant dense<0.000000e+00> : vector<8x8xf32>
    %73 = tpu.matmul %71, %72, %cst_29 {dimension_numbers = #tpu.dot_dimension_numbers<[1], [0], [0], [1], [0, 0, 1, 1], [], []>} : vector<8x8xbf16>, vector<8x8xbf16>, vector<8x8xf32> -> vector<8x8xf32>
    %74 = vector.extract_strided_slice %12 {offsets = [0, 16], sizes = [8, 8], strides = [1, 1]} : vector<8x64xf32> to vector<8x8xf32>
    %75 = arith.truncf %74 : vector<8x8xf32> to vector<8x8xbf16>
    %76 = vector.extract_strided_slice %12 {offsets = [0, 48], sizes = [8, 8], strides = [1, 1]} : vector<8x64xf32> to vector<8x8xf32>
    %77 = arith.truncf %76 : vector<8x8xf32> to vector<8x8xbf16>
    %78 = vector.extract_strided_slice %19 {offsets = [0, 16], sizes = [8, 8], strides = [1, 1]} : vector<8x32xf32> to vector<8x8xf32>
    %cst_30 = arith.constant dense<0.000000e+00> : vector<8x8xf32>
    %79 = tpu.matmul %75, %77, %cst_30 {dimension_numbers = #tpu.dot_dimension_numbers<[1], [1], [0], [0], [0, 0, 1, 0], [], []>} : vector<8x8xbf16>, vector<8x8xbf16>, vector<8x8xf32> -> vector<8x8xf32>
    %cst_31 = arith.constant 0.353553385 : f32
    %80 = vector.broadcast %cst_31 : f32 to vector<8x8xf32>
    %81 = arith.mulf %79, %80 : vector<8x8xf32>
    %cst_32 = arith.constant 5.000000e-01 : f32
    %82 = vector.broadcast %cst_32 : f32 to vector<1x8xf32>
    %83 = arith.cmpf ogt, %4, %82 : vector<1x8xf32>
    %cst_33 = arith.constant -1.000000e+30 : f32
    %84 = vector.shape_cast %83 : vector<1x8xi1> to vector<1x8xi1>
    %85 = vector.broadcast %84 : vector<1x8xi1> to vector<8x8xi1>
    %86 = vector.broadcast %cst_33 : f32 to vector<8x8xf32>
    %87 = arith.select %85, %86, %81 : vector<8x8xi1>, vector<8x8xf32>
    %cst_34 = arith.constant dense<0xFF800000> : vector<8xf32>
    %88 = vector.multi_reduction <maximumf>, %87, %cst_34 [1] : vector<8x8xf32> to vector<8xf32>
    %89 = vector.shape_cast %88 : vector<8xf32> to vector<8x1xf32>
    %90 = vector.broadcast %89 : vector<8x1xf32> to vector<8x8xf32>
    %91 = arith.subf %87, %90 : vector<8x8xf32>
    %92 = math.exp %91 : vector<8x8xf32>
    %cst_35 = arith.constant dense<0.000000e+00> : vector<8xf32>
    %93 = vector.multi_reduction <add>, %92, %cst_35 [1] : vector<8x8xf32> to vector<8xf32>
    %94 = vector.shape_cast %93 : vector<8xf32> to vector<8x1xf32>
    %95 = tpu.reciprocal %94 {approx = true} : vector<8x1xf32> -> vector<8x1xf32>
    %96 = vector.broadcast %95 : vector<8x1xf32> to vector<8x8xf32>
    %97 = arith.mulf %92, %96 : vector<8x8xf32>
    %98 = arith.truncf %97 : vector<8x8xf32> to vector<8x8xbf16>
    %99 = arith.truncf %78 : vector<8x8xf32> to vector<8x8xbf16>
    %cst_36 = arith.constant dense<0.000000e+00> : vector<8x8xf32>
    %100 = tpu.matmul %98, %99, %cst_36 {dimension_numbers = #tpu.dot_dimension_numbers<[1], [0], [0], [1], [0, 0, 1, 1], [], []>} : vector<8x8xbf16>, vector<8x8xbf16>, vector<8x8xf32> -> vector<8x8xf32>
    %101 = vector.extract_strided_slice %12 {offsets = [0, 24], sizes = [8, 8], strides = [1, 1]} : vector<8x64xf32> to vector<8x8xf32>
    %102 = arith.truncf %101 : vector<8x8xf32> to vector<8x8xbf16>
    %103 = vector.extract_strided_slice %12 {offsets = [0, 56], sizes = [8, 8], strides = [1, 1]} : vector<8x64xf32> to vector<8x8xf32>
    %104 = arith.truncf %103 : vector<8x8xf32> to vector<8x8xbf16>
    %105 = vector.extract_strided_slice %19 {offsets = [0, 24], sizes = [8, 8], strides = [1, 1]} : vector<8x32xf32> to vector<8x8xf32>
    %cst_37 = arith.constant dense<0.000000e+00> : vector<8x8xf32>
    %106 = tpu.matmul %102, %104, %cst_37 {dimension_numbers = #tpu.dot_dimension_numbers<[1], [1], [0], [0], [0, 0, 1, 0], [], []>} : vector<8x8xbf16>, vector<8x8xbf16>, vector<8x8xf32> -> vector<8x8xf32>
    %cst_38 = arith.constant 0.353553385 : f32
    %107 = vector.broadcast %cst_38 : f32 to vector<8x8xf32>
    %108 = arith.mulf %106, %107 : vector<8x8xf32>
    %cst_39 = arith.constant 5.000000e-01 : f32
    %109 = vector.broadcast %cst_39 : f32 to vector<1x8xf32>
    %110 = arith.cmpf ogt, %4, %109 : vector<1x8xf32>
    %cst_40 = arith.constant -1.000000e+30 : f32
    %111 = vector.shape_cast %110 : vector<1x8xi1> to vector<1x8xi1>
    %112 = vector.broadcast %111 : vector<1x8xi1> to vector<8x8xi1>
    %113 = vector.broadcast %cst_40 : f32 to vector<8x8xf32>
    %114 = arith.select %112, %113, %108 : vector<8x8xi1>, vector<8x8xf32>
    %cst_41 = arith.constant dense<0xFF800000> : vector<8xf32>
    %115 = vector.multi_reduction <maximumf>, %114, %cst_41 [1] : vector<8x8xf32> to vector<8xf32>
    %116 = vector.shape_cast %115 : vector<8xf32> to vector<8x1xf32>
    %117 = vector.broadcast %116 : vector<8x1xf32> to vector<8x8xf32>
    %118 = arith.subf %114, %117 : vector<8x8xf32>
    %119 = math.exp %118 : vector<8x8xf32>
    %cst_42 = arith.constant dense<0.000000e+00> : vector<8xf32>
    %120 = vector.multi_reduction <add>, %119, %cst_42 [1] : vector<8x8xf32> to vector<8xf32>
    %121 = vector.shape_cast %120 : vector<8xf32> to vector<8x1xf32>
    %122 = tpu.reciprocal %121 {approx = true} : vector<8x1xf32> -> vector<8x1xf32>
    %123 = vector.broadcast %122 : vector<8x1xf32> to vector<8x8xf32>
    %124 = arith.mulf %119, %123 : vector<8x8xf32>
    %125 = arith.truncf %124 : vector<8x8xf32> to vector<8x8xbf16>
    %126 = arith.truncf %105 : vector<8x8xf32> to vector<8x8xbf16>
    %cst_43 = arith.constant dense<0.000000e+00> : vector<8x8xf32>
    %127 = tpu.matmul %125, %126, %cst_43 {dimension_numbers = #tpu.dot_dimension_numbers<[1], [0], [0], [1], [0, 0, 1, 1], [], []>} : vector<8x8xbf16>, vector<8x8xbf16>, vector<8x8xf32> -> vector<8x8xf32>
    %128 = tpu.concatenate %46, %73, %100, %127 in 1 : vector<8x8xf32>, vector<8x8xf32>, vector<8x8xf32>, vector<8x8xf32> -> vector<8x32xf32>
    %c0_44 = arith.constant 0 : index
    %c0_45 = arith.constant 0 : index
    %129 = vector.load %arg8[%c0_44, %c0_45] : memref<32x32xf32, #tpu.memory_space<vmem>>, vector<32x32xf32>
    %130 = arith.truncf %128 : vector<8x32xf32> to vector<8x32xbf16>
    %131 = arith.truncf %129 : vector<32x32xf32> to vector<32x32xbf16>
    %cst_46 = arith.constant dense<0.000000e+00> : vector<8x32xf32>
    %132 = tpu.matmul %130, %131, %cst_46 {dimension_numbers = #tpu.dot_dimension_numbers<[1], [0], [0], [1], [0, 0, 1, 1], [], []>} : vector<8x32xbf16>, vector<32x32xbf16>, vector<8x32xf32> -> vector<8x32xf32>
    %c0_47 = arith.constant 0 : index
    %c0_48 = arith.constant 0 : index
    %133 = vector.load %arg9[%c0_47, %c0_48] : memref<1x32xf32, #tpu.memory_space<vmem>>, vector<1x32xf32>
    %134 = vector.broadcast %133 : vector<1x32xf32> to vector<8x32xf32>
    %135 = arith.addf %132, %134 : vector<8x32xf32>
    %136 = arith.addf %5, %135 : vector<8x32xf32>
    %c0_49 = arith.constant 0 : index
    %c0_50 = arith.constant 0 : index
    %137 = vector.load %arg10[%c0_49, %c0_50] : memref<1x32xf32, #tpu.memory_space<vmem>>, vector<1x32xf32>
    %c0_51 = arith.constant 0 : index
    %c0_52 = arith.constant 0 : index
    %138 = vector.load %arg11[%c0_51, %c0_52] : memref<1x32xf32, #tpu.memory_space<vmem>>, vector<1x32xf32>
    %cst_53 = arith.constant dense<0.000000e+00> : vector<8xf32>
    %139 = vector.multi_reduction <add>, %136, %cst_53 [1] : vector<8x32xf32> to vector<8xf32>
    %140 = vector.shape_cast %139 : vector<8xf32> to vector<8x1xf32>
    %cst_54 = arith.constant 3.200000e+01 : f32
    %141 = vector.broadcast %cst_54 : f32 to vector<8x1xf32>
    %142 = arith.divf %140, %141 : vector<8x1xf32>
    %143 = vector.broadcast %142 : vector<8x1xf32> to vector<8x32xf32>
    %144 = arith.subf %136, %143 : vector<8x32xf32>
    %145 = arith.mulf %144, %144 : vector<8x32xf32>
    %cst_55 = arith.constant dense<0.000000e+00> : vector<8xf32>
    %146 = vector.multi_reduction <add>, %145, %cst_55 [1] : vector<8x32xf32> to vector<8xf32>
    %147 = vector.shape_cast %146 : vector<8xf32> to vector<8x1xf32>
    %cst_56 = arith.constant 3.200000e+01 : f32
    %148 = vector.broadcast %cst_56 : f32 to vector<8x1xf32>
    %149 = arith.divf %147, %148 : vector<8x1xf32>
    %cst_57 = arith.constant 9.99999974E-6 : f32
    %150 = vector.broadcast %cst_57 : f32 to vector<8x1xf32>
    %151 = arith.addf %149, %150 : vector<8x1xf32>
    %152 = math.rsqrt %151 : vector<8x1xf32>
    %153 = vector.broadcast %152 : vector<8x1xf32> to vector<8x32xf32>
    %154 = arith.mulf %144, %153 : vector<8x32xf32>
    %155 = vector.broadcast %137 : vector<1x32xf32> to vector<8x32xf32>
    %156 = arith.mulf %154, %155 : vector<8x32xf32>
    %157 = vector.broadcast %138 : vector<1x32xf32> to vector<8x32xf32>
    %158 = arith.addf %156, %157 : vector<8x32xf32>
    %c0_58 = arith.constant 0 : index
    %c0_59 = arith.constant 0 : index
    %159 = vector.load %arg12[%c0_58, %c0_59] : memref<32x64xf32, #tpu.memory_space<vmem>>, vector<32x64xf32>
    %160 = arith.truncf %158 : vector<8x32xf32> to vector<8x32xbf16>
    %161 = arith.truncf %159 : vector<32x64xf32> to vector<32x64xbf16>
    %cst_60 = arith.constant dense<0.000000e+00> : vector<8x64xf32>
    %162 = tpu.matmul %160, %161, %cst_60 {dimension_numbers = #tpu.dot_dimension_numbers<[1], [0], [0], [1], [0, 0, 1, 1], [], []>} : vector<8x32xbf16>, vector<32x64xbf16>, vector<8x64xf32> -> vector<8x64xf32>
    %c0_61 = arith.constant 0 : index
    %c0_62 = arith.constant 0 : index
    %163 = vector.load %arg13[%c0_61, %c0_62] : memref<1x64xf32, #tpu.memory_space<vmem>>, vector<1x64xf32>
    %164 = vector.broadcast %163 : vector<1x64xf32> to vector<8x64xf32>
    %165 = arith.addf %162, %164 : vector<8x64xf32>
    %cst_63 = arith.constant 0.000000e+00 : f32
    %166 = vector.broadcast %cst_63 : f32 to vector<8x64xf32>
    %167 = arith.maximumf %165, %166 : vector<8x64xf32>
    %c0_64 = arith.constant 0 : index
    %c0_65 = arith.constant 0 : index
    %168 = vector.load %arg14[%c0_64, %c0_65] : memref<64x32xf32, #tpu.memory_space<vmem>>, vector<64x32xf32>
    %169 = arith.truncf %167 : vector<8x64xf32> to vector<8x64xbf16>
    %170 = arith.truncf %168 : vector<64x32xf32> to vector<64x32xbf16>
    %cst_66 = arith.constant dense<0.000000e+00> : vector<8x32xf32>
    %171 = tpu.matmul %169, %170, %cst_66 {dimension_numbers = #tpu.dot_dimension_numbers<[1], [0], [0], [1], [0, 0, 1, 1], [], []>} : vector<8x64xbf16>, vector<64x32xbf16>, vector<8x32xf32> -> vector<8x32xf32>
    %c0_67 = arith.constant 0 : index
    %c0_68 = arith.constant 0 : index
    %172 = vector.load %arg15[%c0_67, %c0_68] : memref<1x32xf32, #tpu.memory_space<vmem>>, vector<1x32xf32>
    %173 = vector.broadcast %172 : vector<1x32xf32> to vector<8x32xf32>
    %174 = arith.addf %171, %173 : vector<8x32xf32>
    %175 = arith.addf %158, %174 : vector<8x32xf32>
    %c0_69 = arith.constant 0 : index
    %c0_70 = arith.constant 0 : index
    %176 = vector.load %arg16[%c0_69, %c0_70] : memref<1x32xf32, #tpu.memory_space<vmem>>, vector<1x32xf32>
    %c0_71 = arith.constant 0 : index
    %c0_72 = arith.constant 0 : index
    %177 = vector.load %arg17[%c0_71, %c0_72] : memref<1x32xf32, #tpu.memory_space<vmem>>, vector<1x32xf32>
    %cst_73 = arith.constant dense<0.000000e+00> : vector<8xf32>
    %178 = vector.multi_reduction <add>, %175, %cst_73 [1] : vector<8x32xf32> to vector<8xf32>
    %179 = vector.shape_cast %178 : vector<8xf32> to vector<8x1xf32>
    %cst_74 = arith.constant 3.200000e+01 : f32
    %180 = vector.broadcast %cst_74 : f32 to vector<8x1xf32>
    %181 = arith.divf %179, %180 : vector<8x1xf32>
    %182 = vector.broadcast %181 : vector<8x1xf32> to vector<8x32xf32>
    %183 = arith.subf %175, %182 : vector<8x32xf32>
    %184 = arith.mulf %183, %183 : vector<8x32xf32>
    %cst_75 = arith.constant dense<0.000000e+00> : vector<8xf32>
    %185 = vector.multi_reduction <add>, %184, %cst_75 [1] : vector<8x32xf32> to vector<8xf32>
    %186 = vector.shape_cast %185 : vector<8xf32> to vector<8x1xf32>
    %cst_76 = arith.constant 3.200000e+01 : f32
    %187 = vector.broadcast %cst_76 : f32 to vector<8x1xf32>
    %188 = arith.divf %186, %187 : vector<8x1xf32>
    %cst_77 = arith.constant 9.99999974E-6 : f32
    %189 = vector.broadcast %cst_77 : f32 to vector<8x1xf32>
    %190 = arith.addf %188, %189 : vector<8x1xf32>
    %191 = math.rsqrt %190 : vector<8x1xf32>
    %192 = vector.broadcast %191 : vector<8x1xf32> to vector<8x32xf32>
    %193 = arith.mulf %183, %192 : vector<8x32xf32>
    %194 = vector.broadcast %176 : vector<1x32xf32> to vector<8x32xf32>
    %195 = arith.mulf %193, %194 : vector<8x32xf32>
    %196 = vector.broadcast %177 : vector<1x32xf32> to vector<8x32xf32>
    %197 = arith.addf %195, %196 : vector<8x32xf32>
    %c0_78 = arith.constant 0 : index
    %c0_79 = arith.constant 0 : index
    %c0_80 = arith.constant 0 : index
    %198 = vector.load %arg18[%c0_78, %c0_79, %c0_80] : memref<1x8x32xf32, #tpu.memory_space<vmem>>, vector<1x8x32xf32>
    %199 = vector.shape_cast %198 : vector<1x8x32xf32> to vector<8x32xf32>
    %200 = vector.shape_cast %197 : vector<8x32xf32> to vector<1x8x32xf32>
    tpu.vector_store %arg18[%c0_78, %c0_79, %c0_80], %200 {strides = array<i32>} : memref<1x8x32xf32, #tpu.memory_space<vmem>>, vector<1x8x32xf32>,
    return
  }
  func.func @transform_0(%arg0: i32) -> (i32, i32, i32) {
    %c0_i32 = arith.constant 0 : i32
    %c0_i32_0 = arith.constant 0 : i32
    %c0_i32_1 = arith.constant 0 : i32
    return %arg0, %c0_i32, %c0_i32_0 : i32, i32, i32
  }
  func.func @transform_1(%arg0: i32) -> (i32, i32) {
    %c0_i32 = arith.constant 0 : i32
    %c0_i32_0 = arith.constant 0 : i32
    %c0_i32_1 = arith.constant 0 : i32
    return %c0_i32, %c0_i32_0 : i32, i32
  }
  func.func @transform_2(%arg0: i32) -> (i32, i32, i32) {
    %c0_i32 = arith.constant 0 : i32
    %c0_i32_0 = arith.constant 0 : i32
    %c0_i32_1 = arith.constant 0 : i32
    return %arg0, %c0_i32, %c0_i32_0 : i32, i32, i32
  }
  func.func @transform_3(%arg0: i32) -> (i32, i32) {
    %c0_i32 = arith.constant 0 : i32
    %c0_i32_0 = arith.constant 0 : i32
    %c0_i32_1 = arith.constant 0 : i32
    return %c0_i32, %c0_i32_0 : i32, i32
  }
  func.func @transform_4(%arg0: i32) -> (i32, i32) {
    %c0_i32 = arith.constant 0 : i32
    %c0_i32_0 = arith.constant 0 : i32
    %c0_i32_1 = arith.constant 0 : i32
    return %c0_i32, %c0_i32_0 : i32, i32
  }
  func.func @transform_5(%arg0: i32) -> (i32, i32) {
    %c0_i32 = arith.constant 0 : i32
    %c0_i32_0 = arith.constant 0 : i32
    %c0_i32_1 = arith.constant 0 : i32
    return %c0_i32, %c0_i32_0 : i32, i32
  }
  func.func @transform_6(%arg0: i32) -> (i32, i32) {
    %c0_i32 = arith.constant 0 : i32
    %c0_i32_0 = arith.constant 0 : i32
    %c0_i32_1 = arith.constant 0 : i32
    return %c0_i32, %c0_i32_0 : i32, i32
  }
  func.func @transform_7(%arg0: i32) -> (i32, i32) {
    %c0_i32 = arith.constant 0 : i32
    %c0_i32_0 = arith.constant 0 : i32
    %c0_i32_1 = arith.constant 0 : i32
    return %c0_i32, %c0_i32_0 : i32, i32
  }
  func.func @transform_8(%arg0: i32) -> (i32, i32) {
    %c0_i32 = arith.constant 0 : i32
    %c0_i32_0 = arith.constant 0 : i32
    %c0_i32_1 = arith.constant 0 : i32
    return %c0_i32, %c0_i32_0 : i32, i32
  }
  func.func @transform_9(%arg0: i32) -> (i32, i32) {
    %c0_i32 = arith.constant 0 : i32
    %c0_i32_0 = arith.constant 0 : i32
    %c0_i32_1 = arith.constant 0 : i32
    return %c0_i32, %c0_i32_0 : i32, i32
  }
  func.func @transform_10(%arg0: i32) -> (i32, i32) {
    %c0_i32 = arith.constant 0 : i32
    %c0_i32_0 = arith.constant 0 : i32
    %c0_i32_1 = arith.constant 0 : i32
    return %c0_i32, %c0_i32_0 : i32, i32
  }
  func.func @transform_11(%arg0: i32) -> (i32, i32) {
    %c0_i32 = arith.constant 0 : i32
    %c0_i32_0 = arith.constant 0 : i32
    %c0_i32_1 = arith.constant 0 : i32
    return %c0_i32, %c0_i32_0 : i32, i32
  }
  func.func @transform_12(%arg0: i32) -> (i32, i32) {
    %c0_i32 = arith.constant 0 : i32
    %c0_i32_0 = arith.constant 0 : i32
    %c0_i32_1 = arith.constant 0 : i32
    return %c0_i32, %c0_i32_0 : i32, i32
  }
  func.func @transform_13(%arg0: i32) -> (i32, i32) {
    %c0_i32 = arith.constant 0 : i32
    %c0_i32_0 = arith.constant 0 : i32
    %c0_i32_1 = arith.constant 0 : i32
    return %c0_i32, %c0_i32_0 : i32, i32
  }
  func.func @transform_14(%arg0: i32) -> (i32, i32) {
    %c0_i32 = arith.constant 0 : i32
    %c0_i32_0 = arith.constant 0 : i32
    %c0_i32_1 = arith.constant 0 : i32
    return %c0_i32, %c0_i32_0 : i32, i32
  }
  func.func @transform_15(%arg0: i32) -> (i32, i32) {
    %c0_i32 = arith.constant 0 : i32
    %c0_i32_0 = arith.constant 0 : i32
    %c0_i32_1 = arith.constant 0 : i32
    return %c0_i32, %c0_i32_0 : i32, i32
  }
  func.func @transform_16(%arg0: i32) -> (i32, i32) {
    %c0_i32 = arith.constant 0 : i32
    %c0_i32_0 = arith.constant 0 : i32
    %c0_i32_1 = arith.constant 0 : i32
    return %c0_i32, %c0_i32_0 : i32, i32
  }
  func.func @transform_17(%arg0: i32) -> (i32, i32, i32) {
    %c0_i32 = arith.constant 0 : i32
    %c0_i32_0 = arith.constant 0 : i32
    %c0_i32_1 = arith.constant 0 : i32
    return %arg0, %c0_i32, %c0_i32_0 : i32, i32, i32
  }
}

module attributes {stable_mosaic.version = 11 : i64} {
  func.func @_layer_kernel(%arg0: i32, %arg1: memref<1x8x32xf32, #tpu.memory_space<vmem>>, %arg2: memref<8x32xf32, #tpu.memory_space<vmem>>, %arg3: memref<1x1x8xf32, #tpu.memory_space<vmem>>, %arg4: memref<32x64xf32, #tpu.memory_space<vmem>>, %arg5: memref<1x64xf32, #tpu.memory_space<vmem>>, %arg6: memref<32x32xf32, #tpu.memory_space<vmem>>, %arg7: memref<1x32xf32, #tpu.memory_space<vmem>>, %arg8: memref<32x32xf32, #tpu.memory_space<vmem>>, %arg9: memref<1x32xf32, #tpu.memory_space<vmem>>, %arg10: memref<1x32xf32, #tpu.memory_space<vmem>>, %arg11: memref<1x32xf32, #tpu.memory_space<vmem>>, %arg12: memref<32x64xf32, #tpu.memory_space<vmem>>, %arg13: memref<1x64xf32, #tpu.memory_space<vmem>>, %arg14: memref<64x32xf32, #tpu.memory_space<vmem>>, %arg15: memref<1x32xf32, #tpu.memory_space<vmem>>, %arg16: memref<1x32xf32, #tpu.memory_space<vmem>>, %arg17: memref<1x32xf32, #tpu.memory_space<vmem>>, %arg18: memref<1x8x32xf32, #tpu.memory_space<vmem>>) attributes {dimension_semantics = [#tpu.dimension_semantics<parallel>], iteration_bounds = array<i64: 2>, scalar_prefetch = 0 : i64, scratch_operands = 0 : i64, tpu.core_type = #tpu.core_type<tc>, window_params = [{transform_indices = @transform_0, window_bounds = array<i64: 1, 8, 32>}, {pipeline_mode = #tpu.pipeline_mode<synchronous>, transform_indices = @transform_1, window_bounds = array<i64: 8, 32>}, {transform_indices = @transform_2, window_bounds = array<i64: 1, 1, 8>}, {pipeline_mode = #tpu.pipeline_mode<synchronous>, transform_indices = @transform_3, window_bounds = array<i64: 32, 64>}, {pipeline_mode = #tpu.pipeline_mode<synchronous>, transform_indices = @transform_4, window_bounds = array<i64: 1, 64>}, {pipeline_mode = #tpu.pipeline_mode<synchronous>, transform_indices = @transform_5, window_bounds = array<i64: 32, 32>}, {pipeline_mode = #tpu.pipeline_mode<synchronous>, transform_indices = @transform_6, window_bounds = array<i64: 1, 32>}, {pipeline_mode = #tpu.pipeline_mode<synchronous>, transform_indices = @transform_7, window_bounds = array<i64: 32, 32>}, {pipeline_mode = #tpu.pipeline_mode<synchronous>, transform_indices = @transform_8, window_bounds = array<i64: 1, 32>}, {pipeline_mode = #tpu.pipeline_mode<synchronous>, transform_indices = @transform_9, window_bounds = array<i64: 1, 32>}, {pipeline_mode = #tpu.pipeline_mode<synchronous>, transform_indices = @transform_10, window_bounds = array<i64: 1, 32>}, {pipeline_mode = #tpu.pipeline_mode<synchronous>, transform_indices = @transform_11, window_bounds = array<i64: 32, 64>}, {pipeline_mode = #tpu.pipeline_mode<synchronous>, transform_indices = @transform_12, window_bounds = array<i64: 1, 64>}, {pipeline_mode = #tpu.pipeline_mode<synchronous>, transform_indices = @transform_13, window_bounds = array<i64: 64, 32>}, {pipeline_mode = #tpu.pipeline_mode<synchronous>, transform_indices = @transform_14, window_bounds = array<i64: 1, 32>}, {pipeline_mode = #tpu.pipeline_mode<synchronous>, transform_indices = @transform_15, window_bounds = array<i64: 1, 32>}, {pipeline_mode = #tpu.pipeline_mode<synchronous>, transform_indices = @transform_16, window_bounds = array<i64: 1, 32>}, {transform_indices = @transform_17, window_bounds = array<i64: 1, 8, 32>}]} {
    %c0 = arith.constant 0 : index
    %c0_0 = arith.constant 0 : index
    %c0_1 = arith.constant 0 : index
    %0 = vector.load %arg1[%c0, %c0_0, %c0_1] : memref<1x8x32xf32, #tpu.memory_space<vmem>>, vector<1x8x32xf32>
    %1 = vector.shape_cast %0 : vector<1x8x32xf32> to vector<8x32xf32>
    %c0_2 = arith.constant 0 : index
    %c0_3 = arith.constant 0 : index
    %2 = vector.load %arg2[%c0_2, %c0_3] : memref<8x32xf32, #tpu.memory_space<vmem>>, vector<8x32xf32>
    %c0_4 = arith.constant 0 : index
    %c0_5 = arith.constant 0 : index
    %c0_6 = arith.constant 0 : index
    %3 = vector.load %arg3[%c0_4, %c0_5, %c0_6] : memref<1x1x8xf32, #tpu.memory_space<vmem>>, vector<1x1x8xf32>
    %4 = vector.shape_cast %3 : vector<1x1x8xf32> to vector<1x8xf32>
    %5 = arith.addf %1, %2 : vector<8x32xf32>
    %c0_7 = arith.constant 0 : index
    %c0_8 = arith.constant 0 : index
    %6 = vector.load %arg4[%c0_7, %c0_8] : memref<32x64xf32, #tpu.memory_space<vmem>>, vector<32x64xf32>
    %7 = arith.truncf %5 : vector<8x32xf32> to vector<8x32xbf16>
    %8 = arith.truncf %6 : vector<32x64xf32> to vector<32x64xbf16>
    %cst = arith.constant dense<0.000000e+00> : vector<8x64xf32>
    %9 = tpu.matmul %7, %8, %cst {dimension_numbers = #tpu.dot_dimension_numbers<[1], [0], [0], [1], [0, 0, 1, 1], [], []>} : vector<8x32xbf16>, vector<32x64xbf16>, vector<8x64xf32> -> vector<8x64xf32>
    %c0_9 = arith.constant 0 : index
    %c0_10 = arith.constant 0 : index
    %10 = vector.load %arg5[%c0_9, %c0_10] : memref<1x64xf32, #tpu.memory_space<vmem>>, vector<1x64xf32>
    %11 = vector.broadcast %10 : vector<1x64xf32> to vector<8x64xf32>
    %12 = arith.addf %9, %11 : vector<8x64xf32>
    %c0_11 = arith.constant 0 : index
    %c0_12 = arith.constant 0 : index
    %13 = vector.load %arg6[%c0_11, %c0_12] : memref<32x32xf32, #tpu.memory_space<vmem>>, vector<32x32xf32>
    %14 = arith.truncf %1 : vector<8x32xf32> to vector<8x32xbf16>
    %15 = arith.truncf %13 : vector<32x32xf32> to vector<32x32xbf16>
    %cst_13 = arith.constant dense<0.000000e+00> : vector<8x32xf32>
    %16 = tpu.matmul %14, %15, %cst_13 {dimension_numbers = #tpu.dot_dimension_numbers<[1], [0], [0], [1], [0, 0, 1, 1], [], []>} : vector<8x32xbf16>, vector<32x32xbf16>, vector<8x32xf32> -> vector<8x32xf32>
    %c0_14 = arith.constant 0 : index
    %c0_15 = arith.constant 0 : index
    %17 = vector.load %arg7[%c0_14, %c0_15] : memref<1x32xf32, #tpu.memory_space<vmem>>, vector<1x32xf32>
    %18 = vector.broadcast %17 : vector<1x32xf32> to vector<8x32xf32>
    %19 = arith.addf %16, %18 : vector<8x32xf32>
    %20 = vector.extract_strided_slice %12 {offsets = [0, 0], sizes = [8, 8], strides = [1, 1]} : vector<8x64xf32> to vector<8x8xf32>
    %21 = arith.truncf %20 : vector<8x8xf32> to vector<8x8xbf16>
    %22 = vector.extract_strided_slice %12 {offsets = [0, 32], sizes = [8, 8], strides = [1, 1]} : vector<8x64xf32> to vector<8x8xf32>
    %23 = arith.truncf %22 : vector<8x8xf32> to vector<8x8xbf16>
    %24 = vector.extract_strided_slice %19 {offsets = [0, 0], sizes = [8, 8], strides = [1, 1]} : vector<8x32xf32> to vector<8x8xf32>
    %cst_16 = arith.constant dense<0.000000e+00> : vector<8x8xf32>
    %25 = tpu.matmul %21, %23, %cst_16 {dimension_numbers = #tpu.dot_dimension_numbers<[1], [1], [0], [0], [0, 0, 1, 0], [], []>} : vector<8x8xbf16>, vector<8x8xbf16>, vector<8x8xf32> -> vector<8x8xf32>
    %cst_17 = arith.constant 0.353553385 : f32
    %26 = vector.broadcast %cst_17 : f32 to vector<8x8xf32>
    %27 = arith.mulf %25, %26 : vector<8x8xf32>
    %cst_18 = arith.constant 5.000000e-01 : f32
    %28 = vector.broadcast %cst_18 : f32 to vector<1x8xf32>
    %29 = arith.cmpf ogt, %4, %28 : vector<1x8xf32>
    %cst_19 = arith.constant -1.000000e+30 : f32
    %30 = vector.shape_cast %29 : vector<1x8xi1> to vector<1x8xi1>
    %31 = vector.broadcast %30 : vector<1x8xi1> to vector<8x8xi1>
    %32 = vector.broadcast %cst_19 : f32 to vector<8x8xf32>
    %33 = arith.select %31, %32, %27 : vector<8x8xi1>, vector<8x8xf32>
    %cst_20 = arith.constant dense<0xFF800000> : vector<8xf32>
    %34 = vector.multi_reduction <maximumf>, %33, %cst_20 [1] : vector<8x8xf32> to vector<8xf32>
    %35 = vector.shape_cast %34 : vector<8xf32> to vector<8x1xf32>
    %36 = vector.broadcast %35 : vector<8x1xf32> to vector<8x8xf32>
    %37 = arith.subf %33, %36 : vector<8x8xf32>
    %38 = math.exp %37 : vector<8x8xf32>
    %cst_21 = arith.constant dense<0.000000e+00> : vector<8xf32>
    %39 = vector.multi_reduction <add>, %38, %cst_21 [1] : vector<8x8xf32> to vector<8xf32>
    %40 = vector.shape_cast %39 : vector<8xf32> to vector<8x1xf32>
    %41 = tpu.reciprocal %40 {approx = true} : vector<8x1xf32> -> vector<8x1xf32>
    %42 = vector.broadcast %41 : vector<8x1xf32> to vector<8x8xf32>
    %43 = arith.mulf %38, %42 : vector<8x8xf32>
    %44 = arith.truncf %43 : vector<8x8xf32> to vector<8x8xbf16>
    %45 = arith.truncf %24 : vector<8x8xf32> to vector<8x8xbf16>
    %cst_22 = arith.constant dense<0.000000e+00> : vector<8x8xf32>
    %46 = tpu.matmul %44, %45, %cst_22 {dimension_numbers = #tpu.dot_dimension_numbers<[1], [0], [0], [1], [0, 0, 1, 1], [], []>} : vector<8x8xbf16>, vector<8x8xbf16>, vector<8x8xf32> -> vector<8x8xf32>
    %47 = vector.extract_strided_slice %12 {offsets = [0, 8], sizes = [8, 8], strides = [1, 1]} : vector<8x64xf32> to vector<8x8xf32>
    %48 = arith.truncf %47 : vector<8x8xf32> to vector<8x8xbf16>
    %49 = vector.extract_strided_slice %12 {offsets = [0, 40], sizes = [8, 8], strides = [1, 1]} : vector<8x64xf32> to vector<8x8xf32>
    %50 = arith.truncf %49 : vector<8x8xf32> to vector<8x8xbf16>
    %51 = vector.extract_strided_slice %19 {offsets = [0, 8], sizes = [8, 8], strides = [1, 1]} : vector<8x32xf32> to vector<8x8xf32>
    %cst_23 = arith.constant dense<0.000000e+00> : vector<8x8xf32>
    %52 = tpu.matmul %48, %50, %cst_23 {dimension_numbers = #tpu.dot_dimension_numbers<[1], [1], [0], [0], [0, 0, 1, 0], [], []>} : vector<8x8xbf16>, vector<8x8xbf16>, vector<8x8xf32> -> vector<8x8xf32>
    %cst_24 = arith.constant 0.353553385 : f32
    %53 = vector.broadcast %cst_24 : f32 to vector<8x8xf32>
    %54 = arith.mulf %52, %53 : vector<8x8xf32>
    %cst_25 = arith.constant 5.000000e-01 : f32
    %55 = vector.broadcast %cst_25 : f32 to vector<1x8xf32>
    %56 = arith.cmpf ogt, %4, %55 : vector<1x8xf32>
    %cst_26 = arith.constant -1.000000e+30 : f32
    %57 = vector.shape_cast %56 : vector<1x8xi1> to vector<1x8xi1>
    %58 = vector.broadcast %57 : vector<1x8xi1> to vector<8x8xi1>
    %59 = vector.broadcast %cst_26 : f32 to vector<8x8xf32>
    %60 = arith.select %58, %59, %54 : vector<8x8xi1>, vector<8x8xf32>
    %cst_27 = arith.constant dense<0xFF800000> : vector<8xf32>
    %61 = vector.multi_reduction <maximumf>, %60, %cst_27 [1] : vector<8x8xf32> to vector<8xf32>
    %62 = vector.shape_cast %61 : vector<8xf32> to vector<8x1xf32>
    %63 = vector.broadcast %62 : vector<8x1xf32> to vector<8x8xf32>
    %64 = arith.subf %60, %63 : vector<8x8xf32>
    %65 = math.exp %64 : vector<8x8xf32>
    %cst_28 = arith.constant dense<0.000000e+00> : vector<8xf32>
    %66 = vector.multi_reduction <add>, %65, %cst_28 [1] : vector<8x8xf32> to vector<8xf32>
    %67 = vector.shape_cast %66 : vector<8xf32> to vector<8x1xf32>
    %68 = tpu.reciprocal %67 {approx = true} : vector<8x1xf32> -> vector<8x1xf32>
    %69 = vector.broadcast %68 : vector<8x1xf32> to vector<8x8xf32>
    %70 = arith.mulf %65, %69 : vector<8x8xf32>
    %71 = arith.truncf %70 : vector<8x8xf32> to vector<8x8xbf16>
    %72 = arith.truncf %51 : vector<8x8xf32> to vector<8x8xbf16>
    %cst_29 = arith.constant dense<0.000000e+00> : vector<8x8xf32>
    %73 = tpu.matmul %71, %72, %cst_29 {dimension_numbers = #tpu.dot_dimension_numbers<[1], [0], [0], [1], [0, 0, 1, 1], [], []>} : vector<8x8xbf16>, vector<8x8xbf16>, vector<8x8xf32> -> vector<8x8xf32>
    %74 = vector.extract_strided_slice %12 {offsets = [0, 16], sizes = [8, 8], strides = [1, 1]} : vector<8x64xf32> to vector<8x8xf32>
    %75 = arith.truncf %74 : vector<8x8xf32> to vector<8x8xbf16>
    %76 = vector.extract_strided_slice %12 {offsets = [0, 48], sizes = [8, 8], strides = [1, 1]} : vector<8x64xf32> to vector<8x8xf32>
    %77 = arith.truncf %76 : vector<8x8xf32> to vector<8x8xbf16>
    %78 = vector.extract_strided_slice %19 {offsets = [0, 16], sizes = [8, 8], strides = [1, 1]} : vector<8x32xf32> to vector<8x8xf32>
    %cst_30 = arith.constant dense<0.000000e+00> : vector<8x8xf32>
    %79 = tpu.matmul %75, %77, %cst_30 {dimension_numbers = #tpu.dot_dimension_numbers<[1], [1], [0], [0], [0, 0, 1, 0], [], []>} : vector<8x8xbf16>, vector<8x8xbf16>, vector<8x8xf32> -> vector<8x8xf32>
    %cst_31 = arith.constant 0.353553385 : f32
    %80 = vector.broadcast %cst_31 : f32 to vector<8x8xf32>
    %81 = arith.mulf %79, %80 : vector<8x8xf32>
    %cst_32 = arith.constant 5.000000e-01 : f32
    %82 = vector.broadcast %cst_32 : f32 to vector<1x8xf32>
    %83 = arith.cmpf ogt, %4, %82 : vector<1x8xf32>
    %cst_33 = arith.constant -1.000000e+30 : f32
    %84 = vector.shape_cast %83 : vector<1x8xi1> to vector<1x8xi1>
    %85 = vector.broadcast %84 : vector<1x8xi1> to vector<8x8xi1>
    %86 = vector.broadcast %cst_33 : f32 to vector<8x8xf32>
    %87 = arith.select %85, %86, %81 : vector<8x8xi1>, vector<8x8xf32>
    %cst_34 = arith.constant dense<0xFF800000> : vector<8xf32>
    %88 = vector.multi_reduction <maximumf>, %87, %cst_34 [1] : vector<8x8xf32> to vector<8xf32>
    %89 = vector.shape_cast %88 : vector<8xf32> to vector<8x1xf32>
    %90 = vector.broadcast %89 : vector<8x1xf32> to vector<8x8xf32>
    %91 = arith.subf %87, %90 : vector<8x8xf32>
    %92 = math.exp %91 : vector<8x8xf32>
    %cst_35 = arith.constant dense<0.000000e+00> : vector<8xf32>
    %93 = vector.multi_reduction <add>, %92, %cst_35 [1] : vector<8x8xf32> to vector<8xf32>
    %94 = vector.shape_cast %93 : vector<8xf32> to vector<8x1xf32>
    %95 = tpu.reciprocal %94 {approx = true} : vector<8x1xf32> -> vector<8x1xf32>
    %96 = vector.broadcast %95 : vector<8x1xf32> to vector<8x8xf32>
    %97 = arith.mulf %92, %96 : vector<8x8xf32>
    %98 = arith.truncf %97 : vector<8x8xf32> to vector<8x8xbf16>
    %99 = arith.truncf %78 : vector<8x8xf32> to vector<8x8xbf16>
    %cst_36 = arith.constant dense<0.000000e+00> : vector<8x8xf32>
    %100 = tpu.matmul %98, %99, %cst_36 {dimension_numbers = #tpu.dot_dimension_numbers<[1], [0], [0], [1], [0, 0, 1, 1], [], []>} : vector<8x8xbf16>, vector<8x8xbf16>, vector<8x8xf32> -> vector<8x8xf32>
    %101 = vector.extract_strided_slice %12 {offsets = [0, 24], sizes = [8, 8], strides = [1, 1]} : vector<8x64xf32> to vector<8x8xf32>
    %102 = arith.truncf %101 : vector<8x8xf32> to vector<8x8xbf16>
    %103 = vector.extract_strided_slice %12 {offsets = [0, 56], sizes = [8, 8], strides = [1, 1]} : vector<8x64xf32> to vector<8x8xf32>
    %104 = arith.truncf %103 : vector<8x8xf32> to vector<8x8xbf16>
    %105 = vector.extract_strided_slice %19 {offsets = [0, 24], sizes = [8, 8], strides = [1, 1]} : vector<8x32xf32> to vector<8x8xf32>
    %cst_37 = arith.constant dense<0.000000e+00> : vector<8x8xf32>
    %106 = tpu.matmul %102, %104, %cst_37 {dimension_numbers = #tpu.dot_dimension_numbers<[1], [1], [0], [0], [0, 0, 1, 0], [], []>} : vector<8x8xbf16>, vector<8x8xbf16>, vector<8x8xf32> -> vector<8x8xf32>
    %cst_38 = arith.constant 0.353553385 : f32
    %107 = vector.broadcast %cst_38 : f32 to vector<8x8xf32>
    %108 = arith.mulf %106, %107 : vector<8x8xf32>
    %cst_39 = arith.constant 5.000000e-01 : f32
    %109 = vector.broadcast %cst_39 : f32 to vector<1x8xf32>
    %110 = arith.cmpf ogt, %4, %109 : vector<1x8xf32>
    %cst_40 = arith.constant -1.000000e+30 : f32
    %111 = vector.shape_cast %110 : vector<1x8xi1> to vector<1x8xi1>
    %112 = vector.broadcast %111 : vector<1x8xi1> to vector<8x8xi1>
    %113 = vector.broadcast %cst_40 : f32 to vector<8x8xf32>
    %114 = arith.select %112, %113, %108 : vector<8x8xi1>, vector<8x8xf32>
    %cst_41 = arith.constant dense<0xFF800000> : vector<8xf32>
    %115 = vector.multi_reduction <maximumf>, %114, %cst_41 [1] : vector<8x8xf32> to vector<8xf32>
    %116 = vector.shape_cast %115 : vector<8xf32> to vector<8x1xf32>
    %117 = vector.broadcast %116 : vector<8x1xf32> to vector<8x8xf32>
    %118 = arith.subf %114, %117 : vector<8x8xf32>
    %119 = math.exp %118 : vector<8x8xf32>
    %cst_42 = arith.constant dense<0.000000e+00> : vector<8xf32>
    %120 = vector.multi_reduction <add>, %119, %cst_42 [1] : vector<8x8xf32> to vector<8xf32>
    %121 = vector.shape_cast %120 : vector<8xf32> to vector<8x1xf32>
    %122 = tpu.reciprocal %121 {approx = true} : vector<8x1xf32> -> vector<8x1xf32>
    %123 = vector.broadcast %122 : vector<8x1xf32> to vector<8x8xf32>
    %124 = arith.mulf %119, %123 : vector<8x8xf32>
    %125 = arith.truncf %124 : vector<8x8xf32> to vector<8x8xbf16>
    %126 = arith.truncf %105 : vector<8x8xf32> to vector<8x8xbf16>
    %cst_43 = arith.constant dense<0.000000e+00> : vector<8x8xf32>
    %127 = tpu.matmul %125, %126, %cst_43 {dimension_numbers = #tpu.dot_dimension_numbers<[1], [0], [0], [1], [0, 0, 1, 1], [], []>} : vector<8x8xbf16>, vector<8x8xbf16>, vector<8x8xf32> -> vector<8x8xf32>
    %128 = tpu.concatenate %46, %73, %100, %127 in 1 : vector<8x8xf32>, vector<8x8xf32>, vector<8x8xf32>, vector<8x8xf32> -> vector<8x32xf32>
    %c0_44 = arith.constant 0 : index
    %c0_45 = arith.constant 0 : index
    %129 = vector.load %arg8[%c0_44, %c0_45] : memref<32x32xf32, #tpu.memory_space<vmem>>, vector<32x32xf32>
    %130 = arith.truncf %128 : vector<8x32xf32> to vector<8x32xbf16>
    %131 = arith.truncf %129 : vector<32x32xf32> to vector<32x32xbf16>
    %cst_46 = arith.constant dense<0.000000e+00> : vector<8x32xf32>
    %132 = tpu.matmul %130, %131, %cst_46 {dimension_numbers = #tpu.dot_dimension_numbers<[1], [0], [0], [1], [0, 0, 1, 1], [], []>} : vector<8x32xbf16>, vector<32x32xbf16>, vector<8x32xf32> -> vector<8x32xf32>
    %c0_47 = arith.constant 0 : index
    %c0_48 = arith.constant 0 : index
    %133 = vector.load %arg9[%c0_47, %c0_48] : memref<1x32xf32, #tpu.memory_space<vmem>>, vector<1x32xf32>
    %134 = vector.broadcast %133 : vector<1x32xf32> to vector<8x32xf32>
    %135 = arith.addf %132, %134 : vector<8x32xf32>
    %136 = arith.addf %5, %135 : vector<8x32xf32>
    %c0_49 = arith.constant 0 : index
    %c0_50 = arith.constant 0 : index
    %137 = vector.load %arg10[%c0_49, %c0_50] : memref<1x32xf32, #tpu.memory_space<vmem>>, vector<1x32xf32>
    %c0_51 = arith.constant 0 : index
    %c0_52 = arith.constant 0 : index
    %138 = vector.load %arg11[%c0_51, %c0_52] : memref<1x32xf32, #tpu.memory_space<vmem>>, vector<1x32xf32>
    %cst_53 = arith.constant dense<0.000000e+00> : vector<8xf32>
    %139 = vector.multi_reduction <add>, %136, %cst_53 [1] : vector<8x32xf32> to vector<8xf32>
    %140 = vector.shape_cast %139 : vector<8xf32> to vector<8x1xf32>
    %cst_54 = arith.constant 3.200000e+01 : f32
    %141 = vector.broadcast %cst_54 : f32 to vector<8x1xf32>
    %142 = arith.divf %140, %141 : vector<8x1xf32>
    %143 = vector.broadcast %142 : vector<8x1xf32> to vector<8x32xf32>
    %144 = arith.subf %136, %143 : vector<8x32xf32>
    %145 = arith.mulf %144, %144 : vector<8x32xf32>
    %cst_55 = arith.constant dense<0.000000e+00> : vector<8xf32>
    %146 = vector.multi_reduction <add>, %145, %cst_55 [1] : vector<8x32xf32> to vector<8xf32>
    %147 = vector.shape_cast %146 : vector<8xf32> to vector<8x1xf32>
    %cst_56 = arith.constant 3.200000e+01 : f32
    %148 = vector.broadcast %cst_56 : f32 to vector<8x1xf32>
    %149 = arith.divf %147, %148 : vector<8x1xf32>
    %cst_57 = arith.constant 9.99999974E-6 : f32
    %150 = vector.broadcast %cst_57 : f32 to vector<8x1xf32>
    %151 = arith.addf %149, %150 : vector<8x1xf32>
    %152 = math.rsqrt %151 : vector<8x1xf32>
    %153 = vector.broadcast %152 : vector<8x1xf32> to vector<8x32xf32>
    %154 = arith.mulf %144, %153 : vector<8x32xf32>
    %155 = vector.broadcast %137 : vector<1x32xf32> to vector<8x32xf32>
    %156 = arith.mulf %154, %155 : vector<8x32xf32>
    %157 = vector.broadcast %138 : vector<1x32xf32> to vector<8x32xf32>
    %158 = arith.addf %156, %157 : vector<8x32xf32>
    %c0_58 = arith.constant 0 : index
    %c0_59 = arith.constant 0 : index
    %159 = vector.load %arg12[%c0_58, %c0_59] : memref<32x64xf32, #tpu.memory_space<vmem>>, vector<32x64xf32>
    %160 = arith.truncf %158 : vector<8x32xf32> to vector<8x32xbf16>
    %161 = arith.truncf %159 : vector<32x64xf32> to vector<32x64xbf16>
    %cst_60 = arith.constant dense<0.000000e+00> : vector<8x64xf32>
    %162 = tpu.matmul %160, %161, %cst_60 {dimension_numbers = #tpu.dot_dimension_numbers<[1], [0], [0], [1], [0, 0, 1, 1], [], []>} : vector<8x32xbf16>, vector<32x64xbf16>, vector<8x64xf32> -> vector<8x64xf32>
    %c0_61 = arith.constant 0 : index
    %c0_62 = arith.constant 0 : index
    %163 = vector.load %arg13[%c0_61, %c0_62] : memref<1x64xf32, #tpu.memory_space<vmem>>, vector<1x64xf32>
    %164 = vector.broadcast %163 : vector<1x64xf32> to vector<8x64xf32>
    %165 = arith.addf %162, %164 : vector<8x64xf32>
    %cst_63 = arith.constant 0.000000e+00 : f32
    %166 = vector.broadcast %cst_63 : f32 to vector<8x64xf32>
    %167 = arith.maximumf %165, %166 : vector<8x64xf32>
    %c0_64 = arith.constant 0 : index
    %c0_65 = arith.constant 0 : index
    %168 = vector.load %arg14[%c0_64, %c0_65] : memref<64x32xf32, #tpu.memory_space<vmem>>, vector<64x32xf32>
    %169 = arith.truncf %167 : vector<8x64xf32> to vector<8x64xbf16>
    %170 = arith.truncf %168 : vector<64x32xf32> to vector<64x32xbf16>
    %cst_66 = arith.constant dense<0.000000e+00> : vector<8x32xf32>
    %171 = tpu.matmul %169, %170, %cst_66 {dimension_numbers = #tpu.dot_dimension_numbers<[1], [0], [0], [1], [0, 0, 1, 1], [], []>} : vector<8x64xbf16>, vector<64x32xbf16>, vector<8x32xf32> -> vector<8x32xf32>
    %c0_67 = arith.constant 0 : index
    %c0_68 = arith.constant 0 : index
    %172 = vector.load %arg15[%c0_67, %c0_68] : memref<1x32xf32, #tpu.memory_space<vmem>>, vector<1x32xf32>
    %173 = vector.broadcast %172 : vector<1x32xf32> to vector<8x32xf32>
    %174 = arith.addf %171, %173 : vector<8x32xf32>
    %175 = arith.addf %158, %174 : vector<8x32xf32>
    %c0_69 = arith.constant 0 : index
    %c0_70 = arith.constant 0 : index
    %176 = vector.load %arg16[%c0_69, %c0_70] : memref<1x32xf32, #tpu.memory_space<vmem>>, vector<1x32xf32>
    %c0_71 = arith.constant 0 : index
    %c0_72 = arith.constant 0 : index
    %177 = vector.load %arg17[%c0_71, %c0_72] : memref<1x32xf32, #tpu.memory_space<vmem>>, vector<1x32xf32>
    %cst_73 = arith.constant dense<0.000000e+00> : vector<8xf32>
    %178 = vector.multi_reduction <add>, %175, %cst_73 [1] : vector<8x32xf32> to vector<8xf32>
    %179 = vector.shape_cast %178 : vector<8xf32> to vector<8x1xf32>
    %cst_74 = arith.constant 3.200000e+01 : f32
    %180 = vector.broadcast %cst_74 : f32 to vector<8x1xf32>
    %181 = arith.divf %179, %180 : vector<8x1xf32>
    %182 = vector.broadcast %181 : vector<8x1xf32> to vector<8x32xf32>
    %183 = arith.subf %175, %182 : vector<8x32xf32>
    %184 = arith.mulf %183, %183 : vector<8x32xf32>
    %cst_75 = arith.constant dense<0.000000e+00> : vector<8xf32>
    %185 = vector.multi_reduction <add>, %184, %cst_75 [1] : vector<8x32xf32> to vector<8xf32>
    %186 = vector.shape_cast %185 : vector<8xf32> to vector<8x1xf32>
    %cst_76 = arith.constant 3.200000e+01 : f32
    %187 = vector.broadcast %cst_76 : f32 to vector<8x1xf32>
    %188 = arith.divf %186, %187 : vector<8x1xf32>
    %cst_77 = arith.constant 9.99999974E-6 : f32
    %189 = vector.broadcast %cst_77 : f32 to vector<8x1xf32>
    %190 = arith.addf %188, %189 : vector<8x1xf32>
    %191 = math.rsqrt %190 : vector<8x1xf32>
    %192 = vector.broadcast %191 : vector<8x1xf32> to vector<8x32xf32>
    %193 = arith.mulf %183, %192 : vector<8x32xf32>
    %194 = vector.broadcast %176 : vector<1x32xf32> to vector<8x32xf32>
    %195 = arith.mulf %193, %194 : vector<8x32xf32>
    %196 = vector.broadcast %177 : vector<1x32xf32> to vector<8x32xf32>
    %197 = arith.addf %195, %196 : vector<8x32xf32>
    %c0_78 = arith.constant 0 : index
    %c0_79 = arith.constant 0 : index
    %c0_80 = arith.constant 0 : index
    %198 = vector.load %arg18[%c0_78, %c0_79, %c0_80] : memref<1x8x32xf32, #tpu.memory_space<vmem>>, vector<1x8x32xf32>
    %199 = vector.shape_cast %198 : vector<1x8x32xf32> to vector<8x32xf32>
    %200 = vector.shape_cast %197 : vector<8x32xf32> to vector<1x8x32xf32>
    tpu.vector_store %arg18[%c0_78, %c0_79, %c0_80], %200 {strides = array<i32>} : memref<1x8x32xf32, #tpu.memory_space<vmem>>, vector<1x8x32xf32>,
    return
  }
  func.func @transform_0(%arg0: i32) -> (i32, i32, i32) {
    %c0_i32 = arith.constant 0 : i32
    %c0_i32_0 = arith.constant 0 : i32
    %c0_i32_1 = arith.constant 0 : i32
    return %arg0, %c0_i32, %c0_i32_0 : i32, i32, i32
  }
  func.func @transform_1(%arg0: i32) -> (i32, i32) {
    %c0_i32 = arith.constant 0 : i32
    %c0_i32_0 = arith.constant 0 : i32
    %c0_i32_1 = arith.constant 0 : i32
    return %c0_i32, %c0_i32_0 : i32, i32
  }
  func.func @transform_2(%arg0: i32) -> (i32, i32, i32) {
    %c0_i32 = arith.constant 0 : i32
    %c0_i32_0 = arith.constant 0 : i32
    %c0_i32_1 = arith.constant 0 : i32
    return %arg0, %c0_i32, %c0_i32_0 : i32, i32, i32
  }
  func.func @transform_3(%arg0: i32) -> (i32, i32) {
    %c0_i32 = arith.constant 0 : i32
    %c0_i32_0 = arith.constant 0 : i32
    %c0_i32_1 = arith.constant 0 : i32
    return %c0_i32, %c0_i32_0 : i32, i32
  }
  func.func @transform_4(%arg0: i32) -> (i32, i32) {
    %c0_i32 = arith.constant 0 : i32
    %c0_i32_0 = arith.constant 0 : i32
    %c0_i32_1 = arith.constant 0 : i32
    return %c0_i32, %c0_i32_0 : i32, i32
  }
  func.func @transform_5(%arg0: i32) -> (i32, i32) {
    %c0_i32 = arith.constant 0 : i32
    %c0_i32_0 = arith.constant 0 : i32
    %c0_i32_1 = arith.constant 0 : i32
    return %c0_i32, %c0_i32_0 : i32, i32
  }
  func.func @transform_6(%arg0: i32) -> (i32, i32) {
    %c0_i32 = arith.constant 0 : i32
    %c0_i32_0 = arith.constant 0 : i32
    %c0_i32_1 = arith.constant 0 : i32
    return %c0_i32, %c0_i32_0 : i32, i32
  }
  func.func @transform_7(%arg0: i32) -> (i32, i32) {
    %c0_i32 = arith.constant 0 : i32
    %c0_i32_0 = arith.constant 0 : i32
    %c0_i32_1 = arith.constant 0 : i32
    return %c0_i32, %c0_i32_0 : i32, i32
  }
  func.func @transform_8(%arg0: i32) -> (i32, i32) {
    %c0_i32 = arith.constant 0 : i32
    %c0_i32_0 = arith.constant 0 : i32
    %c0_i32_1 = arith.constant 0 : i32
    return %c0_i32, %c0_i32_0 : i32, i32
  }
  func.func @transform_9(%arg0: i32) -> (i32, i32) {
    %c0_i32 = arith.constant 0 : i32
    %c0_i32_0 = arith.constant 0 : i32
    %c0_i32_1 = arith.constant 0 : i32
    return %c0_i32, %c0_i32_0 : i32, i32
  }
  func.func @transform_10(%arg0: i32) -> (i32, i32) {
    %c0_i32 = arith.constant 0 : i32
    %c0_i32_0 = arith.constant 0 : i32
    %c0_i32_1 = arith.constant 0 : i32
    return %c0_i32, %c0_i32_0 : i32, i32
  }
  func.func @transform_11(%arg0: i32) -> (i32, i32) {
    %c0_i32 = arith.constant 0 : i32
    %c0_i32_0 = arith.constant 0 : i32
    %c0_i32_1 = arith.constant 0 : i32
    return %c0_i32, %c0_i32_0 : i32, i32
  }
  func.func @transform_12(%arg0: i32) -> (i32, i32) {
    %c0_i32 = arith.constant 0 : i32
    %c0_i32_0 = arith.constant 0 : i32
    %c0_i32_1 = arith.constant 0 : i32
    return %c0_i32, %c0_i32_0 : i32, i32
  }
  func.func @transform_13(%arg0: i32) -> (i32, i32) {
    %c0_i32 = arith.constant 0 : i32
    %c0_i32_0 = arith.constant 0 : i32
    %c0_i32_1 = arith.constant 0 : i32
    return %c0_i32, %c0_i32_0 : i32, i32
  }
  func.func @transform_14(%arg0: i32) -> (i32, i32) {
    %c0_i32 = arith.constant 0 : i32
    %c0_i32_0 = arith.constant 0 : i32
    %c0_i32_1 = arith.constant 0 : i32
    return %c0_i32, %c0_i32_0 : i32, i32
  }
  func.func @transform_15(%arg0: i32) -> (i32, i32) {
    %c0_i32 = arith.constant 0 : i32
    %c0_i32_0 = arith.constant 0 : i32
    %c0_i32_1 = arith.constant 0 : i32
    return %c0_i32, %c0_i32_0 : i32, i32
  }
  func.func @transform_16(%arg0: i32) -> (i32, i32) {
    %c0_i32 = arith.constant 0 : i32
    %c0_i32_0 = arith.constant 0 : i32
    %c0_i32_1 = arith.constant 0 : i32
    return %c0_i32, %c0_i32_0 : i32, i32
  }
  func.func @transform_17(%arg0: i32) -> (i32, i32, i32) {
    %c0_i32 = arith.constant 0 : i32
    %c0_i32_0 = arith.constant 0 : i32
    %c0_i32_1 = arith.constant 0 : i32
    return %arg0, %c0_i32, %c0_i32_0 : i32, i32, i32
  }
}

module attributes {stable_mosaic.version = 11 : i64} {
  func.func @_stem_kernel(%arg0: i32, %arg1: memref<1x8x16xf32, #tpu.memory_space<vmem>>, %arg2: memref<16x32xf32, #tpu.memory_space<vmem>>, %arg3: memref<1x32xf32, #tpu.memory_space<vmem>>, %arg4: memref<1x32xf32, #tpu.memory_space<vmem>>, %arg5: memref<1x32xf32, #tpu.memory_space<vmem>>, %arg6: memref<1x8x32xf32, #tpu.memory_space<vmem>>, %arg7: memref<1x1x8xf32, #tpu.memory_space<vmem>>) attributes {dimension_semantics = [#tpu.dimension_semantics<parallel>], iteration_bounds = array<i64: 2>, scalar_prefetch = 0 : i64, scratch_operands = 0 : i64, tpu.core_type = #tpu.core_type<tc>, window_params = [{transform_indices = @transform_0, window_bounds = array<i64: 1, 8, 16>}, {pipeline_mode = #tpu.pipeline_mode<synchronous>, transform_indices = @transform_1, window_bounds = array<i64: 16, 32>}, {pipeline_mode = #tpu.pipeline_mode<synchronous>, transform_indices = @transform_2, window_bounds = array<i64: 1, 32>}, {pipeline_mode = #tpu.pipeline_mode<synchronous>, transform_indices = @transform_3, window_bounds = array<i64: 1, 32>}, {pipeline_mode = #tpu.pipeline_mode<synchronous>, transform_indices = @transform_4, window_bounds = array<i64: 1, 32>}, {transform_indices = @transform_5, window_bounds = array<i64: 1, 8, 32>}, {transform_indices = @transform_6, window_bounds = array<i64: 1, 1, 8>}]} {
    %c0 = arith.constant 0 : index
    %c0_0 = arith.constant 0 : index
    %c0_1 = arith.constant 0 : index
    %0 = vector.load %arg1[%c0, %c0_0, %c0_1] : memref<1x8x16xf32, #tpu.memory_space<vmem>>, vector<1x8x16xf32>
    %cst = arith.constant dense<0.000000e+00> : vector<1x8xf32>
    %1 = vector.multi_reduction <add>, %0, %cst [2] : vector<1x8x16xf32> to vector<1x8xf32>
    %cst_2 = arith.constant 0.000000e+00 : f32
    %2 = vector.broadcast %cst_2 : f32 to vector<1x8xf32>
    %3 = arith.cmpf oeq, %1, %2 : vector<1x8xf32>
    %4 = arith.extui %3 : vector<1x8xi1> to vector<1x8xi32>
    %5 = arith.sitofp %4 : vector<1x8xi32> to vector<1x8xf32>
    %c0_3 = arith.constant 0 : index
    %c0_4 = arith.constant 0 : index
    %c0_5 = arith.constant 0 : index
    %6 = vector.load %arg7[%c0_3, %c0_4, %c0_5] : memref<1x1x8xf32, #tpu.memory_space<vmem>>, vector<1x1x8xf32>
    %7 = vector.shape_cast %6 : vector<1x1x8xf32> to vector<1x8xf32>
    %8 = vector.shape_cast %5 : vector<1x8xf32> to vector<1x1x8xf32>
    tpu.vector_store %arg7[%c0_3, %c0_4, %c0_5], %8 {strides = array<i32>} : memref<1x1x8xf32, #tpu.memory_space<vmem>>, vector<1x1x8xf32>,
    %9 = vector.shape_cast %0 : vector<1x8x16xf32> to vector<8x16xf32>
    %c0_6 = arith.constant 0 : index
    %c0_7 = arith.constant 0 : index
    %10 = vector.load %arg2[%c0_6, %c0_7] : memref<16x32xf32, #tpu.memory_space<vmem>>, vector<16x32xf32>
    %11 = arith.truncf %9 : vector<8x16xf32> to vector<8x16xbf16>
    %12 = arith.truncf %10 : vector<16x32xf32> to vector<16x32xbf16>
    %cst_8 = arith.constant dense<0.000000e+00> : vector<8x32xf32>
    %13 = tpu.matmul %11, %12, %cst_8 {dimension_numbers = #tpu.dot_dimension_numbers<[1], [0], [0], [1], [0, 0, 1, 1], [], []>} : vector<8x16xbf16>, vector<16x32xbf16>, vector<8x32xf32> -> vector<8x32xf32>
    %c0_9 = arith.constant 0 : index
    %c0_10 = arith.constant 0 : index
    %14 = vector.load %arg3[%c0_9, %c0_10] : memref<1x32xf32, #tpu.memory_space<vmem>>, vector<1x32xf32>
    %15 = vector.broadcast %14 : vector<1x32xf32> to vector<8x32xf32>
    %16 = arith.addf %13, %15 : vector<8x32xf32>
    %cst_11 = arith.constant 0.000000e+00 : f32
    %17 = vector.broadcast %cst_11 : f32 to vector<8x32xf32>
    %18 = arith.maximumf %16, %17 : vector<8x32xf32>
    %c0_12 = arith.constant 0 : index
    %c0_13 = arith.constant 0 : index
    %19 = vector.load %arg4[%c0_12, %c0_13] : memref<1x32xf32, #tpu.memory_space<vmem>>, vector<1x32xf32>
    %c0_14 = arith.constant 0 : index
    %c0_15 = arith.constant 0 : index
    %20 = vector.load %arg5[%c0_14, %c0_15] : memref<1x32xf32, #tpu.memory_space<vmem>>, vector<1x32xf32>
    %cst_16 = arith.constant dense<0.000000e+00> : vector<8xf32>
    %21 = vector.multi_reduction <add>, %18, %cst_16 [1] : vector<8x32xf32> to vector<8xf32>
    %22 = vector.shape_cast %21 : vector<8xf32> to vector<8x1xf32>
    %cst_17 = arith.constant 3.200000e+01 : f32
    %23 = vector.broadcast %cst_17 : f32 to vector<8x1xf32>
    %24 = arith.divf %22, %23 : vector<8x1xf32>
    %25 = vector.broadcast %24 : vector<8x1xf32> to vector<8x32xf32>
    %26 = arith.subf %18, %25 : vector<8x32xf32>
    %27 = arith.mulf %26, %26 : vector<8x32xf32>
    %cst_18 = arith.constant dense<0.000000e+00> : vector<8xf32>
    %28 = vector.multi_reduction <add>, %27, %cst_18 [1] : vector<8x32xf32> to vector<8xf32>
    %29 = vector.shape_cast %28 : vector<8xf32> to vector<8x1xf32>
    %cst_19 = arith.constant 3.200000e+01 : f32
    %30 = vector.broadcast %cst_19 : f32 to vector<8x1xf32>
    %31 = arith.divf %29, %30 : vector<8x1xf32>
    %cst_20 = arith.constant 9.99999974E-6 : f32
    %32 = vector.broadcast %cst_20 : f32 to vector<8x1xf32>
    %33 = arith.addf %31, %32 : vector<8x1xf32>
    %34 = math.rsqrt %33 : vector<8x1xf32>
    %35 = vector.broadcast %34 : vector<8x1xf32> to vector<8x32xf32>
    %36 = arith.mulf %26, %35 : vector<8x32xf32>
    %37 = vector.broadcast %19 : vector<1x32xf32> to vector<8x32xf32>
    %38 = arith.mulf %36, %37 : vector<8x32xf32>
    %39 = vector.broadcast %20 : vector<1x32xf32> to vector<8x32xf32>
    %40 = arith.addf %38, %39 : vector<8x32xf32>
    %c0_21 = arith.constant 0 : index
    %c0_22 = arith.constant 0 : index
    %c0_23 = arith.constant 0 : index
    %41 = vector.load %arg6[%c0_21, %c0_22, %c0_23] : memref<1x8x32xf32, #tpu.memory_space<vmem>>, vector<1x8x32xf32>
    %42 = vector.shape_cast %41 : vector<1x8x32xf32> to vector<8x32xf32>
    %43 = vector.shape_cast %40 : vector<8x32xf32> to vector<1x8x32xf32>
    tpu.vector_store %arg6[%c0_21, %c0_22, %c0_23], %43 {strides = array<i32>} : memref<1x8x32xf32, #tpu.memory_space<vmem>>, vector<1x8x32xf32>,
    return
  }
  func.func @transform_0(%arg0: i32) -> (i32, i32, i32) {
    %c0_i32 = arith.constant 0 : i32
    %c0_i32_0 = arith.constant 0 : i32
    %c0_i32_1 = arith.constant 0 : i32
    return %arg0, %c0_i32, %c0_i32_0 : i32, i32, i32
  }
  func.func @transform_1(%arg0: i32) -> (i32, i32) {
    %c0_i32 = arith.constant 0 : i32
    %c0_i32_0 = arith.constant 0 : i32
    %c0_i32_1 = arith.constant 0 : i32
    return %c0_i32, %c0_i32_0 : i32, i32
  }
  func.func @transform_2(%arg0: i32) -> (i32, i32) {
    %c0_i32 = arith.constant 0 : i32
    %c0_i32_0 = arith.constant 0 : i32
    %c0_i32_1 = arith.constant 0 : i32
    return %c0_i32, %c0_i32_0 : i32, i32
  }
  func.func @transform_3(%arg0: i32) -> (i32, i32) {
    %c0_i32 = arith.constant 0 : i32
    %c0_i32_0 = arith.constant 0 : i32
    %c0_i32_1 = arith.constant 0 : i32
    return %c0_i32, %c0_i32_0 : i32, i32
  }
  func.func @transform_4(%arg0: i32) -> (i32, i32) {
    %c0_i32 = arith.constant 0 : i32
    %c0_i32_0 = arith.constant 0 : i32
    %c0_i32_1 = arith.constant 0 : i32
    return %c0_i32, %c0_i32_0 : i32, i32
  }
  func.func @transform_5(%arg0: i32) -> (i32, i32, i32) {
    %c0_i32 = arith.constant 0 : i32
    %c0_i32_0 = arith.constant 0 : i32
    %c0_i32_1 = arith.constant 0 : i32
    return %arg0, %c0_i32, %c0_i32_0 : i32, i32, i32
  }
  func.func @transform_6(%arg0: i32) -> (i32, i32, i32) {
    %c0_i32 = arith.constant 0 : i32
    %c0_i32_0 = arith.constant 0 : i32
    %c0_i32_1 = arith.constant 0 : i32
    return %arg0, %c0_i32, %c0_i32_0 : i32, i32, i32
  }
}

</mosaic_0001>

<llo_original>
// kernel: multi_level_encoder_box_forward.3
$region0: #{multi_level_encoder_box_forward.3}
  #allocation0 [shape = 'u32[]', space=smem, size = 0x4, offset = 0x4, fixed_abs, tag = 'smem constant byte address 0x4 - core index']
  #allocation1 [shape = 'u32[144,128]{1,0:T(1,128)}', space=vmem, size = 0x12000, scoped, tag = 'internal scratch']
  %s0 = inlined_call_operand.vmem [shape: f32[2,8,16], index: 0, kind: input, shape index: {}]
  %s1 = inlined_call_operand.hbm [shape: f32[16,32], index: 1, kind: input, shape index: {}]
  %s2 = inlined_call_operand.vmem [shape: f32[1,32], index: 2, kind: input, shape index: {}]
  %s3 = inlined_call_operand.vmem [shape: f32[1,32], index: 3, kind: input, shape index: {}]
  %s4 = inlined_call_operand.vmem [shape: f32[1,32], index: 4, kind: input, shape index: {}]
  %s5 = inlined_call_operand.vmem [shape: f32[2,8,32], index: 5, kind: output, shape index: {0}]
  %s6 = inlined_call_operand.vmem [shape: f32[2,1,8], index: 6, kind: output, shape index: {1}]
  %7 = xla_tuple %s5, %s6
  %s8 = sld [smem:[#allocation0]]
  $region65: #{multi_level_encoder_box_forward.3} parent=0
    _
  %s10 = ssub.s32 1, %s8
  %s11 = scalar_select 0, %s10, %s8
  $region1: #{multi_level_encoder_box_forward.3} parent=0
    #allocation2 [shape = 'u8[8192]{0}', space=vmem, size = 0x2000, scoped, tag = 'input window, operand 1, single buffered']
    #allocation3 [shape = 's32[2]{0}', space=sflag, size = 0x8, scoped, tag = 'scoped memory for multi_level_encoder_box_forward.3']
    %12 = vsyncpa [#allocation3], 0
    loop: start=0, step=1, limit=4
    $region2: #{multi_level_encoder_box_forward.3} parent=1 // loop_pre_header
      _
    $region3: #{multi_level_encoder_box_forward.3} parent=1 // loop_header
      %s14 = sphi 0, %s18
      %p15 = scmp.ge.s32.totalorder %s14, 4
      %s24 = sphi 0, %s26
      %s27 = sphi 0, %s24
      %s28 = sphi 0, %s27
      %s44 = sphi 0, %s28
      %s48 = sphi 0, %s48
      %s50 = sphi 0, %s48
      %s51 = sphi 0, %s50
      %s65 = sphi 0, %s51
      %s69 = sphi 0, %s69
      %s71 = sphi 0, %s69
      %s72 = sphi 0, %s71
      %s86 = sphi 0, %s72
      %s90 = sphi 0, %s90
      %s92 = sphi 0, %s90
      %s93 = sphi 0, %s92
      %s107 = sphi 0, %s93
      %s111 = sphi 0, %s111
      %s113 = sphi 0, %s111
      %s114 = sphi 0, %s113
      %s128 = sphi 0, %s114
      %s134 = sphi 0, %s136
      %s137 = sphi 0, %s134
      %s138 = sphi 0, %s137
      %s154 = sphi 0, %s138
      %s160 = sphi 0, %s162
      %s163 = sphi 0, %s160
      %s164 = sphi 0, %s163
      %s180 = sphi 0, %s164
    $region4: #{multi_level_encoder_box_forward.3} parent=1 // loop_header_branch
      %17 = sbr.rel (%p15) target = $region8
    $region5: #{multi_level_encoder_box_forward.3} parent=1 // loop_body
      %s19 = ssub.s32 %s14, 1
      %s20 = ssub.s32 %s14, 2
      %s21 = sadd.s32 %s14, 1
      %s22 = ssub.s32 %s14, %s21
      %p23 = scmp.eq.s32.totalorder %s22, 0
      %s25 = sadd.s32 %s24, 1
      %s26 = scalar_select %p23, %s24, %s25
      %p29 = pneg %p23
      %p30 = scmp.eq.s32.totalorder %s14, 1
      %p31 = por %p29, %p30
      %p32 = scmp.ne.s32.totalorder %s24, %s27
      %p33 = scmp.eq.s32.totalorder %s14, 0
      %p34 = por %p32, %p33
      %p35 = scmp.ne.s32.totalorder %s24, %s27
      %p36 = scmp.eq.s32.totalorder %s19, 1
      %p37 = por %p35, %p36
      %p38 = scmp.ne.s32.totalorder %s27, %s28
      %p39 = scmp.eq.s32.totalorder %s19, 0
      %p40 = por %p38, %p39
      %p41 = scmp.ne.s32.totalorder %s27, %s28
      %p42 = scmp.eq.s32.totalorder %s20, 1
      %p43 = por %p41, %p42
      %p45 = scmp.ne.s32.totalorder %s28, %s44
      %p46 = scmp.eq.s32.totalorder %s20, 0
      %p47 = por %p45, %p46
      %s49 = sadd.s32 %s48, 1
      %p52 = scmp.eq.s32.totalorder %s14, 1
      %p53 = scmp.ne.s32.totalorder %s48, %s50
      %p54 = scmp.eq.s32.totalorder %s14, 0
      %p55 = por %p53, %p54
      %p56 = scmp.ne.s32.totalorder %s48, %s50
      %p57 = scmp.eq.s32.totalorder %s19, 1
      %p58 = por %p56, %p57
      %p59 = scmp.ne.s32.totalorder %s50, %s51
      %p60 = scmp.eq.s32.totalorder %s19, 0
      %p61 = por %p59, %p60
      %p62 = scmp.ne.s32.totalorder %s50, %s51
      %p63 = scmp.eq.s32.totalorder %s20, 1
      %p64 = por %p62, %p63
      %p66 = scmp.ne.s32.totalorder %s51, %s65
      %p67 = scmp.eq.s32.totalorder %s20, 0
      %p68 = por %p66, %p67
      %s70 = sadd.s32 %s69, 1
      %p73 = scmp.eq.s32.totalorder %s14, 1
      %p74 = scmp.ne.s32.totalorder %s69, %s71
      %p75 = scmp.eq.s32.totalorder %s14, 0
      %p76 = por %p74, %p75
      %p77 = scmp.ne.s32.totalorder %s69, %s71
      %p78 = scmp.eq.s32.totalorder %s19, 1
      %p79 = por %p77, %p78
      %p80 = scmp.ne.s32.totalorder %s71, %s72
      %p81 = scmp.eq.s32.totalorder %s19, 0
      %p82 = por %p80, %p81
      %p83 = scmp.ne.s32.totalorder %s71, %s72
      %p84 = scmp.eq.s32.totalorder %s20, 1
      %p85 = por %p83, %p84
      %p87 = scmp.ne.s32.totalorder %s72, %s86
      %p88 = scmp.eq.s32.totalorder %s20, 0
      %p89 = por %p87, %p88
      %s91 = sadd.s32 %s90, 1
      %p94 = scmp.eq.s32.totalorder %s14, 1
      %p95 = scmp.ne.s32.totalorder %s90, %s92
      %p96 = scmp.eq.s32.totalorder %s14, 0
      %p97 = por %p95, %p96
      %p98 = scmp.ne.s32.totalorder %s90, %s92
      %p99 = scmp.eq.s32.totalorder %s19, 1
      %p100 = por %p98, %p99
      %p101 = scmp.ne.s32.totalorder %s92, %s93
      %p102 = scmp.eq.s32.totalorder %s19, 0
      %p103 = por %p101, %p102
      %p104 = scmp.ne.s32.totalorder %s92, %s93
      %p105 = scmp.eq.s32.totalorder %s20, 1
      %p106 = por %p104, %p105
      %p108 = scmp.ne.s32.totalorder %s93, %s107
      %p109 = scmp.eq.s32.totalorder %s20, 0
      %p110 = por %p108, %p109
      %s112 = sadd.s32 %s111, 1
      %p115 = scmp.eq.s32.totalorder %s14, 1
      %p116 = scmp.ne.s32.totalorder %s111, %s113
      %p117 = scmp.eq.s32.totalorder %s14, 0
      %p118 = por %p116, %p117
      %p119 = scmp.ne.s32.totalorder %s111, %s113
      %p120 = scmp.eq.s32.totalorder %s19, 1
      %p121 = por %p119, %p120
      %p122 = scmp.ne.s32.totalorder %s113, %s114
      %p123 = scmp.eq.s32.totalorder %s19, 0
      %p124 = por %p122, %p123
      %p125 = scmp.ne.s32.totalorder %s113, %s114
      %p126 = scmp.eq.s32.totalorder %s20, 1
      %p127 = por %p125, %p126
      %p129 = scmp.ne.s32.totalorder %s114, %s128
      %p130 = scmp.eq.s32.totalorder %s20, 0
      %p131 = por %p129, %p130
      %s132 = ssub.s32 %s14, %s21
      %p133 = scmp.eq.s32.totalorder %s132, 0
      %s135 = sadd.s32 %s134, 1
      %s136 = scalar_select %p133, %s134, %s135
      %p139 = pneg %p133
      %p140 = scmp.eq.s32.totalorder %s14, 1
      %p141 = por %p139, %p140
      %p142 = scmp.ne.s32.totalorder %s134, %s137
      %p143 = scmp.eq.s32.totalorder %s14, 0
      %p144 = por %p142, %p143
      %p145 = scmp.ne.s32.totalorder %s134, %s137
      %p146 = scmp.eq.s32.totalorder %s19, 1
      %p147 = por %p145, %p146
      %p148 = scmp.ne.s32.totalorder %s137, %s138
      %p149 = scmp.eq.s32.totalorder %s19, 0
      %p150 = por %p148, %p149
      %p151 = scmp.ne.s32.totalorder %s137, %s138
      %p152 = scmp.eq.s32.totalorder %s20, 1
      %p153 = por %p151, %p152
      %p155 = scmp.ne.s32.totalorder %s138, %s154
      %p156 = scmp.eq.s32.totalorder %s20, 0
      %p157 = por %p155, %p156
      %s158 = ssub.s32 %s14, %s21
      %p159 = scmp.eq.s32.totalorder %s158, 0
      %s161 = sadd.s32 %s160, 1
      %s162 = scalar_select %p159, %s160, %s161
      %p165 = pneg %p159
      %p166 = scmp.eq.s32.totalorder %s14, 1
      %p167 = por %p165, %p166
      %p168 = scmp.ne.s32.totalorder %s160, %s163
      %p169 = scmp.eq.s32.totalorder %s14, 0
      %p170 = por %p168, %p169
      %p171 = scmp.ne.s32.totalorder %s160, %s163
      %p172 = scmp.eq.s32.totalorder %s19, 1
      %p173 = por %p171, %p172
      %p174 = scmp.ne.s32.totalorder %s163, %s164
      %p175 = scmp.eq.s32.totalorder %s19, 0
      %p176 = por %p174, %p175
      %p177 = scmp.ne.s32.totalorder %s163, %s164
      %p178 = scmp.eq.s32.totalorder %s20, 1
      %p179 = por %p177, %p178
      %p181 = scmp.ne.s32.totalorder %s164, %s180
      %p182 = scmp.eq.s32.totalorder %s20, 0
      %p183 = por %p181, %p182
      %p184 = scmp.le.s32.totalorder 1, %s14
      %p185 = scmp.lt.s32.totalorder %s14, 3
      %p186 = pnand %p184, %p185
      %p187 = pneg %p186
      // Predicated region
      $region9: #{multi_level_encoder_box_forward.3} parent=5 // pred_check
        _
      $region10: #{multi_level_encoder_box_forward.3} parent=5 // pred_check_branch
        %189 = sbr.rel (%p186) target = $region12
      $region11: #{multi_level_encoder_box_forward.3} parent=5 // pred_region
        %s190 = ssub.s32 %s14, 1
        // Predicated region
        $region13: #{multi_level_encoder_box_forward.3} parent=11 // pred_check
          %p191 = pneg %p61
        $region14: #{multi_level_encoder_box_forward.3} parent=11 // pred_check_branch
          %193 = sbr.rel (%p191) target = $region16
        $region15: #{multi_level_encoder_box_forward.3} parent=11 // pred_region
          %s195 = ssub.s32 256, 256
          %196 = vsyncadd [#allocation3], %s195
          %s197 = sshll.u32 [#allocation2], 4
          %s198 = int_to_ptr.vmem [resolvable:$true] %s197
          %203 = dma.hbm_to_vmem [thread:$0]  %s1, 256, %s198, [#allocation3], 128, 128, 8
        $region16: #{multi_level_encoder_box_forward.3} parent=11 // pred_fallthru
          _
        // Predicated region
        $region17: #{multi_level_encoder_box_forward.3} parent=11 // pred_check
          %p204 = pneg %p82
        $region18: #{multi_level_encoder_box_forward.3} parent=11 // pred_check_branch
          %206 = sbr.rel (%p204) target = $region20
        $region19: #{multi_level_encoder_box_forward.3} parent=11 // pred_region
          _
        $region20: #{multi_level_encoder_box_forward.3} parent=11 // pred_fallthru
          _
        // Predicated region
        $region21: #{multi_level_encoder_box_forward.3} parent=11 // pred_check
          %p207 = pneg %p103
        $region22: #{multi_level_encoder_box_forward.3} parent=11 // pred_check_branch
          %209 = sbr.rel (%p207) target = $region24
        $region23: #{multi_level_encoder_box_forward.3} parent=11 // pred_region
          _
        $region24: #{multi_level_encoder_box_forward.3} parent=11 // pred_fallthru
          _
        // Predicated region
        $region25: #{multi_level_encoder_box_forward.3} parent=11 // pred_check
          %p210 = pneg %p124
        $region26: #{multi_level_encoder_box_forward.3} parent=11 // pred_check_branch
          %212 = sbr.rel (%p210) target = $region28
        $region27: #{multi_level_encoder_box_forward.3} parent=11 // pred_region
          _
        $region28: #{multi_level_encoder_box_forward.3} parent=11 // pred_fallthru
          _
      $region12: #{multi_level_encoder_box_forward.3} parent=5 // pred_fallthru
        _
      %p213 = scmp.lt.s32.totalorder %s14, 2
      // Predicated region
      $region29: #{multi_level_encoder_box_forward.3} parent=5 // pred_check
        %p214 = pneg %p213
      $region30: #{multi_level_encoder_box_forward.3} parent=5 // pred_check_branch
        %216 = sbr.rel (%p214) target = $region32
      $region31: #{multi_level_encoder_box_forward.3} parent=5 // pred_region
        // Predicated region
        $region33: #{multi_level_encoder_box_forward.3} parent=31 // pred_check
          %p217 = pneg %p34
        $region34: #{multi_level_encoder_box_forward.3} parent=31 // pred_check_branch
          %219 = sbr.rel (%p217) target = $region36
        $region35: #{multi_level_encoder_box_forward.3} parent=31 // pred_region
          %p220 = scmp.lt.s32.totalorder %s14, 1
          %s221 = scalar_select %p220, %s14, 1
          %s222 = smul.addr %s221, 8
          %s223 = scalar_lea.vmem %s0, %s222
        $region36: #{multi_level_encoder_box_forward.3} parent=31 // pred_fallthru
          _
      $region32: #{multi_level_encoder_box_forward.3} parent=5 // pred_fallthru
        _
      %p224 = scmp.le.s32.totalorder 1, %s14
      %p225 = scmp.lt.s32.totalorder %s14, 3
      %p226 = pnand %p224, %p225
      %p227 = pneg %p226
      // Predicated region
      $region37: #{multi_level_encoder_box_forward.3} parent=5 // pred_check
        _
      $region38: #{multi_level_encoder_box_forward.3} parent=5 // pred_check_branch
        %229 = sbr.rel (%p226) target = $region40
      $region39: #{multi_level_encoder_box_forward.3} parent=5 // pred_region
        %s230 = ssub.s32 %s14, 1
        // Predicated region
        $region41: #{multi_level_encoder_box_forward.3} parent=39 // pred_check
          %p231 = pneg %p61
        $region42: #{multi_level_encoder_box_forward.3} parent=39 // pred_check_branch
          %233 = sbr.rel (%p231) target = $region44
        $region43: #{multi_level_encoder_box_forward.3} parent=39 // pred_region
          %234 = dma.done [#allocation3], 256
        $region44: #{multi_level_encoder_box_forward.3} parent=39 // pred_fallthru
          _
        %p235 = scmp.lt.s32.totalorder %s19, 1
        %s236 = scalar_select %p235, %s19, 1
        %s237 = smul.addr %s236, 8
        %s238 = scalar_lea.vmem %s0, %s237
        %p239 = pneg %p40
        %p240 = pneg %p37
        %p241 = pneg %p61
        %p242 = pneg %p58
        %p243 = pneg %p82
        %p244 = pneg %p79
        %p245 = pneg %p103
        %p246 = pneg %p100
        %p247 = pneg %p124
        %p248 = pneg %p121
        %p249 = pneg %p150
        %p250 = pneg %p147
        %p251 = scmp.lt.s32.totalorder %s19, 1
        %s252 = scalar_select %p251, %s19, 1
        %s253 = smul.addr %s252, 8
        %s254 = scalar_lea.vmem %s5, %s253
        %p255 = pneg %p176
        %p256 = pneg %p173
        %p257 = scmp.lt.s32.totalorder %s19, 1
        %s258 = scalar_select %p257, %s19, 1
        %s259 = scalar_lea.vmem %s6, %s258
        %p260 = scmp.lt.s32.totalorder %s19, 1
        %s261 = scalar_select %p260, %s19, 1
        %s262 = smul.addr %s261, 8
        %s263 = scalar_lea.vmem %s0, %s262
        %p264 = scmp.lt.s32.totalorder %s19, 1
        %s265 = scalar_select %p264, %s19, 1
        %s266 = smul.addr %s265, 8
        %s267 = scalar_lea.vmem %s5, %s266
        %p268 = scmp.lt.s32.totalorder %s19, 1
        %s269 = scalar_select %p268, %s19, 1
        %s270 = scalar_lea.vmem %s6, %s269
        %v272 = vld [vmem:[%s263] sm:$0xff]
        %vm273 = vcmask 130048
        %v274 = vsel %vm273, %v272, 0.0
        %275 = vadd.xlane.f32.xlu0 %v274
        %v276 = vpop.xlane.xlu0 %275
        %vm277 = vcmp.eq.f32.partialorder %v276, 0.0
        %v278 = vsel %vm277, 1, 0
        %v279 = vcvt.s32.f32 %v278
        %v281 = vlaneseq
        %v282 = vand.u32 %v281, 127
        %v283 = vlaneseq
        %v284 = vshrl.u32 %v283, 7
        %v285 = vsub.s32 %v282, %v284
        %v286 = vrot.slane %v279, %v285
        %vm288 = vcmask 57344
        %289 = vst.msk [vmem:[%s270] sm:$0x1] %vm288, %v286
        %v290 = vld [vmem:[#allocation2] sm:$0xff]
        %v291 = vld [vmem:[#allocation2 + $0x8] sm:$0xff]
        %v292 = vpack.c.bf16 %v272, %v272
        %v293 = vpack.c.bf16 %v291, %v290
        %v294 = vld [vmem:[%s2] sm:$0x1]
        %v296 = vlaneseq
        %v297 = vshrl.u32 %v296, 7
        %v298 = vsub.s32 0, %v297
        %v299 = vrot.slane %v294, %v298
        %v302 = vsel %vm273, %v292, 0
        %304 = vmatprep.subr.bf16.mxu0 0
        %305 = vmatpush1.bf16.msra.mxu0 0
        %306 = vmatprep.subr.bf16.mxu0 0
        %307 = vmatpush1.bf16.msra.mxu0 0
        %308 = vmatprep.subr.bf16.mxu0 0
        %309 = vmatpush1.bf16.msra.mxu0 0
        %310 = vmatprep.subr.bf16.mxu0 0
        %311 = vmatpush1.bf16.msra.mxu0 0
        %312 = vmatprep.subr.bf16.mxu0 0
        %313 = vmatpush1.bf16.msra.mxu0 0
        %314 = vmatprep.subr.bf16.mxu0 0
        %315 = vmatpush1.bf16.msra.mxu0 0
        %316 = vmatprep.subr.bf16.mxu0 0
        %317 = vmatpush1.bf16.msra.mxu0 0
        %318 = vmatprep.subr.bf16.mxu0 0
        %319 = vmatpush1.bf16.msra.mxu0 %v293
        %320 = vmatprep.subr.bf16.mxu0 0
        %321 = vmatpush2.bf16.msra.mxu0 0
        %322 = vmatprep.subr.bf16.mxu0 0
        %323 = vmatpush2.bf16.msra.mxu0 0
        %324 = vmatprep.subr.bf16.mxu0 0
        %325 = vmatpush2.bf16.msra.mxu0 0
        %326 = vmatprep.subr.bf16.mxu0 0
        %327 = vmatpush2.bf16.msra.mxu0 0
        %328 = vmatprep.subr.bf16.mxu0 0
        %329 = vmatpush2.bf16.msra.mxu0 0
        %330 = vmatprep.subr.bf16.mxu0 0
        %331 = vmatpush2.bf16.msra.mxu0 0
        %332 = vmatprep.subr.bf16.mxu0 0
        %333 = vmatpush2.bf16.msra.mxu0 0
        %334 = vmatprep.subr.bf16.mxu0 0
        %335 = vmatpush2.bf16.msra.mxu0 0
        %336 = vmatprep.mubr.bf16.mxu0 0
        %337 = vmatmul.mubr.bf16.gmra.mxu0 %v302
        %v338 = vpop.f32.mrf.mxu0
        %v339 = vadd.f32 %v299, %v338
        %v340 = vpop.f32.mrf.mxu0
        %v341 = vpop.f32.mrf.mxu0
        %v342 = vpop.f32.mrf.mxu0
        %343 = vdwg.mxu0
        %v344 = vmax.f32 %v339, 0.0
        %v345 = vld [vmem:[%s3] sm:$0x1]
        %v346 = vld [vmem:[%s4] sm:$0x1]
        %vm347 = vcmask 261120
        %v348 = vsel %vm347, %v344, 0.0
        %349 = vadd.xlane.f32.xlu0 %v348
        %v350 = vpop.xlane.xlu0 %349
        %v351 = vrcp.pop 32.0
        %v352 = vmul.f32 %v350, %v351
        %v353 = vsub.f32 %v344, %v352
        %v354 = vmul.f32 %v353, %v353
        %v355 = vsel %vm347, %v354, 0.0
        %356 = vadd.xlane.f32.xlu0 %v355
        %v357 = vpop.xlane.xlu0 %356
        %v358 = vmul.f32 %v357, %v351
        %v359 = vadd.f32 %v358, 1e-05
        %v360 = vrsqrt.pop %v359
        %v361 = vmul.f32 %v353, %v360
        %v363 = vlaneseq
        %v364 = vshrl.u32 %v363, 7
        %v365 = vsub.s32 0, %v364
        %v366 = vrot.slane %v345, %v365
        %v368 = vmul.f32 %v361, %v366
        %v370 = vlaneseq
        %v371 = vshrl.u32 %v370, 7
        %v372 = vsub.s32 0, %v371
        %v373 = vrot.slane %v346, %v372
        %v375 = vadd.f32 %v368, %v373
        %376 = vst.msk [vmem:[%s267] sm:$0xff] %vm347, %v375
        %p377 = scmp.lt.s32.totalorder %s19, 1
        %s378 = scalar_select %p377, %s19, 1
        %s379 = smul.addr %s378, 8
        %s380 = scalar_lea.vmem %s5, %s379
        %p381 = scmp.lt.s32.totalorder %s19, 1
        %s382 = scalar_select %p381, %s19, 1
        %s383 = scalar_lea.vmem %s6, %s382
        // Predicated region
        $region45: #{multi_level_encoder_box_forward.3} parent=39 // pred_check
          %p384 = pneg %p147
        $region46: #{multi_level_encoder_box_forward.3} parent=39 // pred_check_branch
          %386 = sbr.rel (%p384) target = $region48
        $region47: #{multi_level_encoder_box_forward.3} parent=39 // pred_region
          _
        $region48: #{multi_level_encoder_box_forward.3} parent=39 // pred_fallthru
          _
        // Predicated region
        $region49: #{multi_level_encoder_box_forward.3} parent=39 // pred_check
          %p387 = pneg %p173
        $region50: #{multi_level_encoder_box_forward.3} parent=39 // pred_check_branch
          %389 = sbr.rel (%p387) target = $region52
        $region51: #{multi_level_encoder_box_forward.3} parent=39 // pred_region
          _
        $region52: #{multi_level_encoder_box_forward.3} parent=39 // pred_fallthru
          _
      $region40: #{multi_level_encoder_box_forward.3} parent=5 // pred_fallthru
        _
      %p390 = scmp.le.s32.totalorder 2, %s14
      // Predicated region
      $region53: #{multi_level_encoder_box_forward.3} parent=5 // pred_check
        %p391 = pneg %p390
      $region54: #{multi_level_encoder_box_forward.3} parent=5 // pred_check_branch
        %393 = sbr.rel (%p391) target = $region56
      $region55: #{multi_level_encoder_box_forward.3} parent=5 // pred_region
        %s394 = ssub.s32 %s14, 2
        // Predicated region
        $region57: #{multi_level_encoder_box_forward.3} parent=55 // pred_check
          %p395 = pneg %p153
        $region58: #{multi_level_encoder_box_forward.3} parent=55 // pred_check_branch
          %397 = sbr.rel (%p395) target = $region60
        $region59: #{multi_level_encoder_box_forward.3} parent=55 // pred_region
          %p398 = scmp.lt.s32.totalorder %s20, 1
          %s399 = scalar_select %p398, %s20, 1
          %s400 = smul.addr %s399, 8
          %s401 = scalar_lea.vmem %s5, %s400
        $region60: #{multi_level_encoder_box_forward.3} parent=55 // pred_fallthru
          _
        // Predicated region
        $region61: #{multi_level_encoder_box_forward.3} parent=55 // pred_check
          %p402 = pneg %p179
        $region62: #{multi_level_encoder_box_forward.3} parent=55 // pred_check_branch
          %404 = sbr.rel (%p402) target = $region64
        $region63: #{multi_level_encoder_box_forward.3} parent=55 // pred_region
          %p405 = scmp.lt.s32.totalorder %s20, 1
          %s406 = scalar_select %p405, %s20, 1
          %s407 = scalar_lea.vmem %s6, %s406
        $region64: #{multi_level_encoder_box_forward.3} parent=55 // pred_fallthru
          _
      $region56: #{multi_level_encoder_box_forward.3} parent=5 // pred_fallthru
        _
    $region6: #{multi_level_encoder_box_forward.3} parent=1 // loop_footer
      %s18 = sadd.s32 1, %s14
    $region7: #{multi_level_encoder_box_forward.3} parent=1 // loop_footer_branch
      %13 = sbr.rel target = $region3
    $region8: #{multi_level_encoder_box_forward.3} parent=1 // loop_exit
      _
    %408 = vsyncpa [#allocation3], 1
    %s409 = scalar_lea.sflag [#allocation3], 1
    %410 = vsyncpa %s409, 1

// kernel: multi_level_encoder_box_forward.5
$region0: #{multi_level_encoder_box_forward.5}
  #allocation0 [shape = 'u32[]', space=smem, size = 0x4, offset = 0x4, fixed_abs, tag = 'smem constant byte address 0x4 - core index']
  #allocation1 [shape = 'u32[144,128]{1,0:T(1,128)}', space=vmem, size = 0x12000, scoped, tag = 'internal scratch']
  %s0 = inlined_call_operand.vmem [shape: f32[2,8,32], index: 0, kind: input, shape index: {}]
  %s1 = inlined_call_operand.vmem [shape: f32[8,32], index: 1, kind: input, shape index: {}]
  %s2 = inlined_call_operand.vmem [shape: f32[2,1,8], index: 2, kind: input, shape index: {}]
  %s3 = inlined_call_operand.vmem [shape: f32[32,64], index: 3, kind: input, shape index: {}]
  %s4 = inlined_call_operand.vmem [shape: f32[1,64], index: 4, kind: input, shape index: {}]
  %s5 = inlined_call_operand.vmem [shape: f32[32,32], index: 5, kind: input, shape index: {}]
  %s6 = inlined_call_operand.vmem [shape: f32[1,32], index: 6, kind: input, shape index: {}]
  %s7 = inlined_call_operand.vmem [shape: f32[32,32], index: 7, kind: input, shape index: {}]
  %s8 = inlined_call_operand.vmem [shape: f32[1,32], index: 8, kind: input, shape index: {}]
  %s9 = inlined_call_operand.vmem [shape: f32[1,32], index: 9, kind: input, shape index: {}]
  %s10 = inlined_call_operand.vmem [shape: f32[1,32], index: 10, kind: input, shape index: {}]
  %s11 = inlined_call_operand.vmem [shape: f32[32,64], index: 11, kind: input, shape index: {}]
  %s12 = inlined_call_operand.vmem [shape: f32[1,64], index: 12, kind: input, shape index: {}]
  %s13 = inlined_call_operand.vmem [shape: f32[64,32], index: 13, kind: input, shape index: {}]
  %s14 = inlined_call_operand.vmem [shape: f32[1,32], index: 14, kind: input, shape index: {}]
  %s15 = inlined_call_operand.vmem [shape: f32[1,32], index: 15, kind: input, shape index: {}]
  %s16 = inlined_call_operand.vmem [shape: f32[1,32], index: 16, kind: input, shape index: {}]
  %s17 = inlined_call_operand.hbm [shape: f32[2,8,32], index: 17, kind: output, shape index: {}]
  %s18 = sld [smem:[#allocation0]]
  $region101: #{multi_level_encoder_box_forward.5} parent=0
    _
  %s20 = ssub.s32 1, %s18
  %s21 = scalar_select 0, %s20, %s18
  $region1: #{multi_level_encoder_box_forward.5} parent=0
    #allocation2 [shape = 'u8[8192]{0}', space=vmem, size = 0x2000, scoped, tag = 'output window, operand 0']
    #allocation3 [shape = 's32[2]{0}', space=sflag, size = 0x8, scoped, tag = 'scoped memory for multi_level_encoder_box_forward.5']
    %22 = vsyncpa [#allocation3], 0
    %s23 = scalar_lea.sflag [#allocation3], 1
    %24 = vsyncpa %s23, 0
    loop: start=0, step=1, limit=4
    $region2: #{multi_level_encoder_box_forward.5} parent=1 // loop_pre_header
      _
    $region3: #{multi_level_encoder_box_forward.5} parent=1 // loop_header
      %s26 = sphi 0, %s30
      %p27 = scmp.ge.s32.totalorder %s26, 4
      %s36 = sphi 0, %s38
      %s39 = sphi 0, %s36
      %s40 = sphi 0, %s39
      %s56 = sphi 0, %s40
      %s60 = sphi 0, %s60
      %s62 = sphi 0, %s60
      %s63 = sphi 0, %s62
      %s77 = sphi 0, %s63
      %s83 = sphi 0, %s85
      %s86 = sphi 0, %s83
      %s87 = sphi 0, %s86
      %s103 = sphi 0, %s87
      %s107 = sphi 0, %s107
      %s109 = sphi 0, %s107
      %s110 = sphi 0, %s109
      %s124 = sphi 0, %s110
      %s128 = sphi 0, %s128
      %s130 = sphi 0, %s128
      %s131 = sphi 0, %s130
      %s145 = sphi 0, %s131
      %s149 = sphi 0, %s149
      %s151 = sphi 0, %s149
      %s152 = sphi 0, %s151
      %s166 = sphi 0, %s152
      %s170 = sphi 0, %s170
      %s172 = sphi 0, %s170
      %s173 = sphi 0, %s172
      %s187 = sphi 0, %s173
      %s191 = sphi 0, %s191
      %s193 = sphi 0, %s191
      %s194 = sphi 0, %s193
      %s208 = sphi 0, %s194
      %s212 = sphi 0, %s212
      %s214 = sphi 0, %s212
      %s215 = sphi 0, %s214
      %s229 = sphi 0, %s215
      %s233 = sphi 0, %s233
      %s235 = sphi 0, %s233
      %s236 = sphi 0, %s235
      %s250 = sphi 0, %s236
      %s254 = sphi 0, %s254
      %s256 = sphi 0, %s254
      %s257 = sphi 0, %s256
      %s271 = sphi 0, %s257
      %s275 = sphi 0, %s275
      %s277 = sphi 0, %s275
      %s278 = sphi 0, %s277
      %s292 = sphi 0, %s278
      %s296 = sphi 0, %s296
      %s298 = sphi 0, %s296
      %s299 = sphi 0, %s298
      %s313 = sphi 0, %s299
      %s317 = sphi 0, %s317
      %s319 = sphi 0, %s317
      %s320 = sphi 0, %s319
      %s334 = sphi 0, %s320
      %s338 = sphi 0, %s338
      %s340 = sphi 0, %s338
      %s341 = sphi 0, %s340
      %s355 = sphi 0, %s341
      %s359 = sphi 0, %s359
      %s361 = sphi 0, %s359
      %s362 = sphi 0, %s361
      %s376 = sphi 0, %s362
      %s380 = sphi 0, %s380
      %s382 = sphi 0, %s380
      %s383 = sphi 0, %s382
      %s397 = sphi 0, %s383
      %s403 = sphi 0, %s405
      %s406 = sphi 0, %s403
      %s407 = sphi 0, %s406
      %s423 = sphi 0, %s407
    $region4: #{multi_level_encoder_box_forward.5} parent=1 // loop_header_branch
      %29 = sbr.rel (%p27) target = $region8
    $region5: #{multi_level_encoder_box_forward.5} parent=1 // loop_body
      %s31 = ssub.s32 %s26, 1
      %s32 = ssub.s32 %s26, 2
      %s33 = sadd.s32 %s26, 1
      %s34 = ssub.s32 %s26, %s33
      %p35 = scmp.eq.s32.totalorder %s34, 0
      %s37 = sadd.s32 %s36, 1
      %s38 = scalar_select %p35, %s36, %s37
      %p41 = pneg %p35
      %p42 = scmp.eq.s32.totalorder %s26, 1
      %p43 = por %p41, %p42
      %p44 = scmp.ne.s32.totalorder %s36, %s39
      %p45 = scmp.eq.s32.totalorder %s26, 0
      %p46 = por %p44, %p45
      %p47 = scmp.ne.s32.totalorder %s36, %s39
      %p48 = scmp.eq.s32.totalorder %s31, 1
      %p49 = por %p47, %p48
      %p50 = scmp.ne.s32.totalorder %s39, %s40
      %p51 = scmp.eq.s32.totalorder %s31, 0
      %p52 = por %p50, %p51
      %p53 = scmp.ne.s32.totalorder %s39, %s40
      %p54 = scmp.eq.s32.totalorder %s32, 1
      %p55 = por %p53, %p54
      %p57 = scmp.ne.s32.totalorder %s40, %s56
      %p58 = scmp.eq.s32.totalorder %s32, 0
      %p59 = por %p57, %p58
      %s61 = sadd.s32 %s60, 1
      %p64 = scmp.eq.s32.totalorder %s26, 1
      %p65 = scmp.ne.s32.totalorder %s60, %s62
      %p66 = scmp.eq.s32.totalorder %s26, 0
      %p67 = por %p65, %p66
      %p68 = scmp.ne.s32.totalorder %s60, %s62
      %p69 = scmp.eq.s32.totalorder %s31, 1
      %p70 = por %p68, %p69
      %p71 = scmp.ne.s32.totalorder %s62, %s63
      %p72 = scmp.eq.s32.totalorder %s31, 0
      %p73 = por %p71, %p72
      %p74 = scmp.ne.s32.totalorder %s62, %s63
      %p75 = scmp.eq.s32.totalorder %s32, 1
      %p76 = por %p74, %p75
      %p78 = scmp.ne.s32.totalorder %s63, %s77
      %p79 = scmp.eq.s32.totalorder %s32, 0
      %p80 = por %p78, %p79
      %s81 = ssub.s32 %s26, %s33
      %p82 = scmp.eq.s32.totalorder %s81, 0
      %s84 = sadd.s32 %s83, 1
      %s85 = scalar_select %p82, %s83, %s84
      %p88 = pneg %p82
      %p89 = scmp.eq.s32.totalorder %s26, 1
      %p90 = por %p88, %p89
      %p91 = scmp.ne.s32.totalorder %s83, %s86
      %p92 = scmp.eq.s32.totalorder %s26, 0
      %p93 = por %p91, %p92
      %p94 = scmp.ne.s32.totalorder %s83, %s86
      %p95 = scmp.eq.s32.totalorder %s31, 1
      %p96 = por %p94, %p95
      %p97 = scmp.ne.s32.totalorder %s86, %s87
      %p98 = scmp.eq.s32.totalorder %s31, 0
      %p99 = por %p97, %p98
      %p100 = scmp.ne.s32.totalorder %s86, %s87
      %p101 = scmp.eq.s32.totalorder %s32, 1
      %p102 = por %p100, %p101
      %p104 = scmp.ne.s32.totalorder %s87, %s103
      %p105 = scmp.eq.s32.totalorder %s32, 0
      %p106 = por %p104, %p105
      %s108 = sadd.s32 %s107, 1
      %p111 = scmp.eq.s32.totalorder %s26, 1
      %p112 = scmp.ne.s32.totalorder %s107, %s109
      %p113 = scmp.eq.s32.totalorder %s26, 0
      %p114 = por %p112, %p113
      %p115 = scmp.ne.s32.totalorder %s107, %s109
      %p116 = scmp.eq.s32.totalorder %s31, 1
      %p117 = por %p115, %p116
      %p118 = scmp.ne.s32.totalorder %s109, %s110
      %p119 = scmp.eq.s32.totalorder %s31, 0
      %p120 = por %p118, %p119
      %p121 = scmp.ne.s32.totalorder %s109, %s110
      %p122 = scmp.eq.s32.totalorder %s32, 1
      %p123 = por %p121, %p122
      %p125 = scmp.ne.s32.totalorder %s110, %s124
      %p126 = scmp.eq.s32.totalorder %s32, 0
      %p127 = por %p125, %p126
      %s129 = sadd.s32 %s128, 1
      %p132 = scmp.eq.s32.totalorder %s26, 1
      %p133 = scmp.ne.s32.totalorder %s128, %s130
      %p134 = scmp.eq.s32.totalorder %s26, 0
      %p135 = por %p133, %p134
      %p136 = scmp.ne.s32.totalorder %s128, %s130
      %p137 = scmp.eq.s32.totalorder %s31, 1
      %p138 = por %p136, %p137
      %p139 = scmp.ne.s32.totalorder %s130, %s131
      %p140 = scmp.eq.s32.totalorder %s31, 0
      %p141 = por %p139, %p140
      %p142 = scmp.ne.s32.totalorder %s130, %s131
      %p143 = scmp.eq.s32.totalorder %s32, 1
      %p144 = por %p142, %p143
      %p146 = scmp.ne.s32.totalorder %s131, %s145
      %p147 = scmp.eq.s32.totalorder %s32, 0
      %p148 = por %p146, %p147
      %s150 = sadd.s32 %s149, 1
      %p153 = scmp.eq.s32.totalorder %s26, 1
      %p154 = scmp.ne.s32.totalorder %s149, %s151
      %p155 = scmp.eq.s32.totalorder %s26, 0
      %p156 = por %p154, %p155
      %p157 = scmp.ne.s32.totalorder %s149, %s151
      %p158 = scmp.eq.s32.totalorder %s31, 1
      %p159 = por %p157, %p158
      %p160 = scmp.ne.s32.totalorder %s151, %s152
      %p161 = scmp.eq.s32.totalorder %s31, 0
      %p162 = por %p160, %p161
      %p163 = scmp.ne.s32.totalorder %s151, %s152
      %p164 = scmp.eq.s32.totalorder %s32, 1
      %p165 = por %p163, %p164
      %p167 = scmp.ne.s32.totalorder %s152, %s166
      %p168 = scmp.eq.s32.totalorder %s32, 0
      %p169 = por %p167, %p168
      %s171 = sadd.s32 %s170, 1
      %p174 = scmp.eq.s32.totalorder %s26, 1
      %p175 = scmp.ne.s32.totalorder %s170, %s172
      %p176 = scmp.eq.s32.totalorder %s26, 0
      %p177 = por %p175, %p176
      %p178 = scmp.ne.s32.totalorder %s170, %s172
      %p179 = scmp.eq.s32.totalorder %s31, 1
      %p180 = por %p178, %p179
      %p181 = scmp.ne.s32.totalorder %s172, %s173
      %p182 = scmp.eq.s32.totalorder %s31, 0
      %p183 = por %p181, %p182
      %p184 = scmp.ne.s32.totalorder %s172, %s173
      %p185 = scmp.eq.s32.totalorder %s32, 1
      %p186 = por %p184, %p185
      %p188 = scmp.ne.s32.totalorder %s173, %s187
      %p189 = scmp.eq.s32.totalorder %s32, 0
      %p190 = por %p188, %p189
      %s192 = sadd.s32 %s191, 1
      %p195 = scmp.eq.s32.totalorder %s26, 1
      %p196 = scmp.ne.s32.totalorder %s191, %s193
      %p197 = scmp.eq.s32.totalorder %s26, 0
      %p198 = por %p196, %p197
      %p199 = scmp.ne.s32.totalorder %s191, %s193
      %p200 = scmp.eq.s32.totalorder %s31, 1
      %p201 = por %p199, %p200
      %p202 = scmp.ne.s32.totalorder %s193, %s194
      %p203 = scmp.eq.s32.totalorder %s31, 0
      %p204 = por %p202, %p203
      %p205 = scmp.ne.s32.totalorder %s193, %s194
      %p206 = scmp.eq.s32.totalorder %s32, 1
      %p207 = por %p205, %p206
      %p209 = scmp.ne.s32.totalorder %s194, %s208
      %p210 = scmp.eq.s32.totalorder %s32, 0
      %p211 = por %p209, %p210
      %s213 = sadd.s32 %s212, 1
      %p216 = scmp.eq.s32.totalorder %s26, 1
      %p217 = scmp.ne.s32.totalorder %s212, %s214
      %p218 = scmp.eq.s32.totalorder %s26, 0
      %p219 = por %p217, %p218
      %p220 = scmp.ne.s32.totalorder %s212, %s214
      %p221 = scmp.eq.s32.totalorder %s31, 1
      %p222 = por %p220, %p221
      %p223 = scmp.ne.s32.totalorder %s214, %s215
      %p224 = scmp.eq.s32.totalorder %s31, 0
      %p225 = por %p223, %p224
      %p226 = scmp.ne.s32.totalorder %s214, %s215
      %p227 = scmp.eq.s32.totalorder %s32, 1
      %p228 = por %p226, %p227
      %p230 = scmp.ne.s32.totalorder %s215, %s229
      %p231 = scmp.eq.s32.totalorder %s32, 0
      %p232 = por %p230, %p231
      %s234 = sadd.s32 %s233, 1
      %p237 = scmp.eq.s32.totalorder %s26, 1
      %p238 = scmp.ne.s32.totalorder %s233, %s235
      %p239 = scmp.eq.s32.totalorder %s26, 0
      %p240 = por %p238, %p239
      %p241 = scmp.ne.s32.totalorder %s233, %s235
      %p242 = scmp.eq.s32.totalorder %s31, 1
      %p243 = por %p241, %p242
      %p244 = scmp.ne.s32.totalorder %s235, %s236
      %p245 = scmp.eq.s32.totalorder %s31, 0
      %p246 = por %p244, %p245
      %p247 = scmp.ne.s32.totalorder %s235, %s236
      %p248 = scmp.eq.s32.totalorder %s32, 1
      %p249 = por %p247, %p248
      %p251 = scmp.ne.s32.totalorder %s236, %s250
      %p252 = scmp.eq.s32.totalorder %s32, 0
      %p253 = por %p251, %p252
      %s255 = sadd.s32 %s254, 1
      %p258 = scmp.eq.s32.totalorder %s26, 1
      %p259 = scmp.ne.s32.totalorder %s254, %s256
      %p260 = scmp.eq.s32.totalorder %s26, 0
      %p261 = por %p259, %p260
      %p262 = scmp.ne.s32.totalorder %s254, %s256
      %p263 = scmp.eq.s32.totalorder %s31, 1
      %p264 = por %p262, %p263
      %p265 = scmp.ne.s32.totalorder %s256, %s257
      %p266 = scmp.eq.s32.totalorder %s31, 0
      %p267 = por %p265, %p266
      %p268 = scmp.ne.s32.totalorder %s256, %s257
      %p269 = scmp.eq.s32.totalorder %s32, 1
      %p270 = por %p268, %p269
      %p272 = scmp.ne.s32.totalorder %s257, %s271
      %p273 = scmp.eq.s32.totalorder %s32, 0
      %p274 = por %p272, %p273
      %s276 = sadd.s32 %s275, 1
      %p279 = scmp.eq.s32.totalorder %s26, 1
      %p280 = scmp.ne.s32.totalorder %s275, %s277
      %p281 = scmp.eq.s32.totalorder %s26, 0
      %p282 = por %p280, %p281
      %p283 = scmp.ne.s32.totalorder %s275, %s277
      %p284 = scmp.eq.s32.totalorder %s31, 1
      %p285 = por %p283, %p284
      %p286 = scmp.ne.s32.totalorder %s277, %s278
      %p287 = scmp.eq.s32.totalorder %s31, 0
      %p288 = por %p286, %p287
      %p289 = scmp.ne.s32.totalorder %s277, %s278
      %p290 = scmp.eq.s32.totalorder %s32, 1
      %p291 = por %p289, %p290
      %p293 = scmp.ne.s32.totalorder %s278, %s292
      %p294 = scmp.eq.s32.totalorder %s32, 0
      %p295 = por %p293, %p294
      %s297 = sadd.s32 %s296, 1
      %p300 = scmp.eq.s32.totalorder %s26, 1
      %p301 = scmp.ne.s32.totalorder %s296, %s298
      %p302 = scmp.eq.s32.totalorder %s26, 0
      %p303 = por %p301, %p302
      %p304 = scmp.ne.s32.totalorder %s296, %s298
      %p305 = scmp.eq.s32.totalorder %s31, 1
      %p306 = por %p304, %p305
      %p307 = scmp.ne.s32.totalorder %s298, %s299
      %p308 = scmp.eq.s32.totalorder %s31, 0
      %p309 = por %p307, %p308
      %p310 = scmp.ne.s32.totalorder %s298, %s299
      %p311 = scmp.eq.s32.totalorder %s32, 1
      %p312 = por %p310, %p311
      %p314 = scmp.ne.s32.totalorder %s299, %s313
      %p315 = scmp.eq.s32.totalorder %s32, 0
      %p316 = por %p314, %p315
      %s318 = sadd.s32 %s317, 1
      %p321 = scmp.eq.s32.totalorder %s26, 1
      %p322 = scmp.ne.s32.totalorder %s317, %s319
      %p323 = scmp.eq.s32.totalorder %s26, 0
      %p324 = por %p322, %p323
      %p325 = scmp.ne.s32.totalorder %s317, %s319
      %p326 = scmp.eq.s32.totalorder %s31, 1
      %p327 = por %p325, %p326
      %p328 = scmp.ne.s32.totalorder %s319, %s320
      %p329 = scmp.eq.s32.totalorder %s31, 0
      %p330 = por %p328, %p329
      %p331 = scmp.ne.s32.totalorder %s319, %s320
      %p332 = scmp.eq.s32.totalorder %s32, 1
      %p333 = por %p331, %p332
      %p335 = scmp.ne.s32.totalorder %s320, %s334
      %p336 = scmp.eq.s32.totalorder %s32, 0
      %p337 = por %p335, %p336
      %s339 = sadd.s32 %s338, 1
      %p342 = scmp.eq.s32.totalorder %s26, 1
      %p343 = scmp.ne.s32.totalorder %s338, %s340
      %p344 = scmp.eq.s32.totalorder %s26, 0
      %p345 = por %p343, %p344
      %p346 = scmp.ne.s32.totalorder %s338, %s340
      %p347 = scmp.eq.s32.totalorder %s31, 1
      %p348 = por %p346, %p347
      %p349 = scmp.ne.s32.totalorder %s340, %s341
      %p350 = scmp.eq.s32.totalorder %s31, 0
      %p351 = por %p349, %p350
      %p352 = scmp.ne.s32.totalorder %s340, %s341
      %p353 = scmp.eq.s32.totalorder %s32, 1
      %p354 = por %p352, %p353
      %p356 = scmp.ne.s32.totalorder %s341, %s355
      %p357 = scmp.eq.s32.totalorder %s32, 0
      %p358 = por %p356, %p357
      %s360 = sadd.s32 %s359, 1
      %p363 = scmp.eq.s32.totalorder %s26, 1
      %p364 = scmp.ne.s32.totalorder %s359, %s361
      %p365 = scmp.eq.s32.totalorder %s26, 0
      %p366 = por %p364, %p365
      %p367 = scmp.ne.s32.totalorder %s359, %s361
      %p368 = scmp.eq.s32.totalorder %s31, 1
      %p369 = por %p367, %p368
      %p370 = scmp.ne.s32.totalorder %s361, %s362
      %p371 = scmp.eq.s32.totalorder %s31, 0
      %p372 = por %p370, %p371
      %p373 = scmp.ne.s32.totalorder %s361, %s362
      %p374 = scmp.eq.s32.totalorder %s32, 1
      %p375 = por %p373, %p374
      %p377 = scmp.ne.s32.totalorder %s362, %s376
      %p378 = scmp.eq.s32.totalorder %s32, 0
      %p379 = por %p377, %p378
      %s381 = sadd.s32 %s380, 1
      %p384 = scmp.eq.s32.totalorder %s26, 1
      %p385 = scmp.ne.s32.totalorder %s380, %s382
      %p386 = scmp.eq.s32.totalorder %s26, 0
      %p387 = por %p385, %p386
      %p388 = scmp.ne.s32.totalorder %s380, %s382
      %p389 = scmp.eq.s32.totalorder %s31, 1
      %p390 = por %p388, %p389
      %p391 = scmp.ne.s32.totalorder %s382, %s383
      %p392 = scmp.eq.s32.totalorder %s31, 0
      %p393 = por %p391, %p392
      %p394 = scmp.ne.s32.totalorder %s382, %s383
      %p395 = scmp.eq.s32.totalorder %s32, 1
      %p396 = por %p394, %p395
      %p398 = scmp.ne.s32.totalorder %s383, %s397
      %p399 = scmp.eq.s32.totalorder %s32, 0
      %p400 = por %p398, %p399
      %s401 = ssub.s32 %s26, %s33
      %p402 = scmp.eq.s32.totalorder %s401, 0
      %s404 = sadd.s32 %s403, 1
      %s405 = scalar_select %p402, %s403, %s404
      %p408 = pneg %p402
      %p409 = scmp.eq.s32.totalorder %s26, 1
      %p410 = por %p408, %p409
      %p411 = scmp.ne.s32.totalorder %s403, %s406
      %p412 = scmp.eq.s32.totalorder %s26, 0
      %p413 = por %p411, %p412
      %p414 = scmp.ne.s32.totalorder %s403, %s406
      %p415 = scmp.eq.s32.totalorder %s31, 1
      %p416 = por %p414, %p415
      %p417 = scmp.ne.s32.totalorder %s406, %s407
      %p418 = scmp.eq.s32.totalorder %s31, 0
      %p419 = por %p417, %p418
      %p420 = scmp.ne.s32.totalorder %s406, %s407
      %p421 = scmp.eq.s32.totalorder %s32, 1
      %p422 = por %p420, %p421
      %p424 = scmp.ne.s32.totalorder %s407, %s423
      %p425 = scmp.eq.s32.totalorder %s32, 0
      %p426 = por %p424, %p425
      %p427 = scmp.le.s32.totalorder 1, %s26
      %p428 = scmp.lt.s32.totalorder %s26, 3
      %p429 = pnand %p427, %p428
      %p430 = pneg %p429
      // Predicated region
      $region9: #{multi_level_encoder_box_forward.5} parent=5 // pred_check
        _
      $region10: #{multi_level_encoder_box_forward.5} parent=5 // pred_check_branch
        %432 = sbr.rel (%p429) target = $region12
      $region11: #{multi_level_encoder_box_forward.5} parent=5 // pred_region
        %s433 = ssub.s32 %s26, 1
        // Predicated region
        $region13: #{multi_level_encoder_box_forward.5} parent=11 // pred_check
          %p434 = pneg %p73
        $region14: #{multi_level_encoder_box_forward.5} parent=11 // pred_check_branch
          %436 = sbr.rel (%p434) target = $region16
        $region15: #{multi_level_encoder_box_forward.5} parent=11 // pred_region
          _
        $region16: #{multi_level_encoder_box_forward.5} parent=11 // pred_fallthru
          _
        // Predicated region
        $region17: #{multi_level_encoder_box_forward.5} parent=11 // pred_check
          %p437 = pneg %p120
        $region18: #{multi_level_encoder_box_forward.5} parent=11 // pred_check_branch
          %439 = sbr.rel (%p437) target = $region20
        $region19: #{multi_level_encoder_box_forward.5} parent=11 // pred_region
          _
        $region20: #{multi_level_encoder_box_forward.5} parent=11 // pred_fallthru
          _
        // Predicated region
        $region21: #{multi_level_encoder_box_forward.5} parent=11 // pred_check
          %p440 = pneg %p141
        $region22: #{multi_level_encoder_box_forward.5} parent=11 // pred_check_branch
          %442 = sbr.rel (%p440) target = $region24
        $region23: #{multi_level_encoder_box_forward.5} parent=11 // pred_region
          _
        $region24: #{multi_level_encoder_box_forward.5} parent=11 // pred_fallthru
          _
        // Predicated region
        $region25: #{multi_level_encoder_box_forward.5} parent=11 // pred_check
          %p443 = pneg %p162
        $region26: #{multi_level_encoder_box_forward.5} parent=11 // pred_check_branch
          %445 = sbr.rel (%p443) target = $region28
        $region27: #{multi_level_encoder_box_forward.5} parent=11 // pred_region
          _
        $region28: #{multi_level_encoder_box_forward.5} parent=11 // pred_fallthru
          _
        // Predicated region
        $region29: #{multi_level_encoder_box_forward.5} parent=11 // pred_check
          %p446 = pneg %p183
        $region30: #{multi_level_encoder_box_forward.5} parent=11 // pred_check_branch
          %448 = sbr.rel (%p446) target = $region32
        $region31: #{multi_level_encoder_box_forward.5} parent=11 // pred_region
          _
        $region32: #{multi_level_encoder_box_forward.5} parent=11 // pred_fallthru
          _
        // Predicated region
        $region33: #{multi_level_encoder_box_forward.5} parent=11 // pred_check
          %p449 = pneg %p204
        $region34: #{multi_level_encoder_box_forward.5} parent=11 // pred_check_branch
          %451 = sbr.rel (%p449) target = $region36
        $region35: #{multi_level_encoder_box_forward.5} parent=11 // pred_region
          _
        $region36: #{multi_level_encoder_box_forward.5} parent=11 // pred_fallthru
          _
        // Predicated region
        $region37: #{multi_level_encoder_box_forward.5} parent=11 // pred_check
          %p452 = pneg %p225
        $region38: #{multi_level_encoder_box_forward.5} parent=11 // pred_check_branch
          %454 = sbr.rel (%p452) target = $region40
        $region39: #{multi_level_encoder_box_forward.5} parent=11 // pred_region
          _
        $region40: #{multi_level_encoder_box_forward.5} parent=11 // pred_fallthru
          _
        // Predicated region
        $region41: #{multi_level_encoder_box_forward.5} parent=11 // pred_check
          %p455 = pneg %p246
        $region42: #{multi_level_encoder_box_forward.5} parent=11 // pred_check_branch
          %457 = sbr.rel (%p455) target = $region44
        $region43: #{multi_level_encoder_box_forward.5} parent=11 // pred_region
          _
        $region44: #{multi_level_encoder_box_forward.5} parent=11 // pred_fallthru
          _
        // Predicated region
        $region45: #{multi_level_encoder_box_forward.5} parent=11 // pred_check
          %p458 = pneg %p267
        $region46: #{multi_level_encoder_box_forward.5} parent=11 // pred_check_branch
          %460 = sbr.rel (%p458) target = $region48
        $region47: #{multi_level_encoder_box_forward.5} parent=11 // pred_region
          _
        $region48: #{multi_level_encoder_box_forward.5} parent=11 // pred_fallthru
          _
        // Predicated region
        $region49: #{multi_level_encoder_box_forward.5} parent=11 // pred_check
          %p461 = pneg %p288
        $region50: #{multi_level_encoder_box_forward.5} parent=11 // pred_check_branch
          %463 = sbr.rel (%p461) target = $region52
        $region51: #{multi_level_encoder_box_forward.5} parent=11 // pred_region
          _
        $region52: #{multi_level_encoder_box_forward.5} parent=11 // pred_fallthru
          _
        // Predicated region
        $region53: #{multi_level_encoder_box_forward.5} parent=11 // pred_check
          %p464 = pneg %p309
        $region54: #{multi_level_encoder_box_forward.5} parent=11 // pred_check_branch
          %466 = sbr.rel (%p464) target = $region56
        $region55: #{multi_level_encoder_box_forward.5} parent=11 // pred_region
          _
        $region56: #{multi_level_encoder_box_forward.5} parent=11 // pred_fallthru
          _
        // Predicated region
        $region57: #{multi_level_encoder_box_forward.5} parent=11 // pred_check
          %p467 = pneg %p330
        $region58: #{multi_level_encoder_box_forward.5} parent=11 // pred_check_branch
          %469 = sbr.rel (%p467) target = $region60
        $region59: #{multi_level_encoder_box_forward.5} parent=11 // pred_region
          _
        $region60: #{multi_level_encoder_box_forward.5} parent=11 // pred_fallthru
          _
        // Predicated region
        $region61: #{multi_level_encoder_box_forward.5} parent=11 // pred_check
          %p470 = pneg %p351
        $region62: #{multi_level_encoder_box_forward.5} parent=11 // pred_check_branch
          %472 = sbr.rel (%p470) target = $region64
        $region63: #{multi_level_encoder_box_forward.5} parent=11 // pred_region
          _
        $region64: #{multi_level_encoder_box_forward.5} parent=11 // pred_fallthru
          _
        // Predicated region
        $region65: #{multi_level_encoder_box_forward.5} parent=11 // pred_check
          %p473 = pneg %p372
        $region66: #{multi_level_encoder_box_forward.5} parent=11 // pred_check_branch
          %475 = sbr.rel (%p473) target = $region68
        $region67: #{multi_level_encoder_box_forward.5} parent=11 // pred_region
          _
        $region68: #{multi_level_encoder_box_forward.5} parent=11 // pred_fallthru
          _
        // Predicated region
        $region69: #{multi_level_encoder_box_forward.5} parent=11 // pred_check
          %p476 = pneg %p393
        $region70: #{multi_level_encoder_box_forward.5} parent=11 // pred_check_branch
          %478 = sbr.rel (%p476) target = $region72
        $region71: #{multi_level_encoder_box_forward.5} parent=11 // pred_region
          _
        $region72: #{multi_level_encoder_box_forward.5} parent=11 // pred_fallthru
          _
      $region12: #{multi_level_encoder_box_forward.5} parent=5 // pred_fallthru
        _
      %p479 = scmp.lt.s32.totalorder %s26, 2
      // Predicated region
      $region73: #{multi_level_encoder_box_forward.5} parent=5 // pred_check
        %p480 = pneg %p479
      $region74: #{multi_level_encoder_box_forward.5} parent=5 // pred_check_branch
        %482 = sbr.rel (%p480) target = $region76
      $region75: #{multi_level_encoder_box_forward.5} parent=5 // pred_region
        // Predicated region
        $region77: #{multi_level_encoder_box_forward.5} parent=75 // pred_check
          %p483 = pneg %p46
        $region78: #{multi_level_encoder_box_forward.5} parent=75 // pred_check_branch
          %485 = sbr.rel (%p483) target = $region80
        $region79: #{multi_level_encoder_box_forward.5} parent=75 // pred_region
          %p486 = scmp.lt.s32.totalorder %s26, 1
          %s487 = scalar_select %p486, %s26, 1
          %s488 = smul.addr %s487, 8
          %s489 = scalar_lea.vmem %s0, %s488
        $region80: #{multi_level_encoder_box_forward.5} parent=75 // pred_fallthru
          _
        // Predicated region
        $region81: #{multi_level_encoder_box_forward.5} parent=75 // pred_check
          %p490 = pneg %p93
        $region82: #{multi_level_encoder_box_forward.5} parent=75 // pred_check_branch
          %492 = sbr.rel (%p490) target = $region84
        $region83: #{multi_level_encoder_box_forward.5} parent=75 // pred_region
          %p493 = scmp.lt.s32.totalorder %s26, 1
          %s494 = scalar_select %p493, %s26, 1
          %s495 = scalar_lea.vmem %s2, %s494
        $region84: #{multi_level_encoder_box_forward.5} parent=75 // pred_fallthru
          _
      $region76: #{multi_level_encoder_box_forward.5} parent=5 // pred_fallthru
        _
      %p496 = scmp.le.s32.totalorder 1, %s26
      %p497 = scmp.lt.s32.totalorder %s26, 3
      %p498 = pnand %p496, %p497
      %p499 = pneg %p498
      // Predicated region
      $region85: #{multi_level_encoder_box_forward.5} parent=5 // pred_check
        _
      $region86: #{multi_level_encoder_box_forward.5} parent=5 // pred_check_branch
        %501 = sbr.rel (%p498) target = $region88
      $region87: #{multi_level_encoder_box_forward.5} parent=5 // pred_region
        %s502 = ssub.s32 %s26, 1
        %p503 = scmp.lt.s32.totalorder %s31, 1
        %s504 = scalar_select %p503, %s31, 1
        %s505 = smul.addr %s504, 8
        %s506 = scalar_lea.vmem %s0, %s505
        %p507 = pneg %p52
        %p508 = pneg %p49
        %p509 = pneg %p73
        %p510 = pneg %p70
        %p511 = scmp.lt.s32.totalorder %s31, 1
        %s512 = scalar_select %p511, %s31, 1
        %s513 = scalar_lea.vmem %s2, %s512
        %p514 = pneg %p99
        %p515 = pneg %p96
        %p516 = pneg %p120
        %p517 = pneg %p117
        %p518 = pneg %p141
        %p519 = pneg %p138
        %p520 = pneg %p162
        %p521 = pneg %p159
        %p522 = pneg %p183
        %p523 = pneg %p180
        %p524 = pneg %p204
        %p525 = pneg %p201
        %p526 = pneg %p225
        %p527 = pneg %p222
        %p528 = pneg %p246
        %p529 = pneg %p243
        %p530 = pneg %p267
        %p531 = pneg %p264
        %p532 = pneg %p288
        %p533 = pneg %p285
        %p534 = pneg %p309
        %p535 = pneg %p306
        %p536 = pneg %p330
        %p537 = pneg %p327
        %p538 = pneg %p351
        %p539 = pneg %p348
        %p540 = pneg %p372
        %p541 = pneg %p369
        %p542 = pneg %p393
        %p543 = pneg %p390
        %p544 = pneg %p419
        %p545 = pneg %p416
        %s546 = sand.u32 %s406, 1
        %s547 = scalar_lea.sflag [#allocation3], %s546
        %s548 = sand.u32 %s406, 1
        %s549 = smul.addr %s548, 8
        %s550 = scalar_lea.vmem [#allocation2], %s549
        %p551 = scmp.lt.s32.totalorder %s31, 1
        %s552 = scalar_select %p551, %s31, 1
        %s553 = smul.addr %s552, 8
        %s554 = scalar_lea.vmem %s0, %s553
        %p555 = scmp.lt.s32.totalorder %s31, 1
        %s556 = scalar_select %p555, %s31, 1
        %s557 = scalar_lea.vmem %s2, %s556
        %v559 = vld [vmem:[%s554] sm:$0xff]
        %v560 = vld [vmem:[%s1] sm:$0xff]
        %v561 = vld [vmem:[%s557] sm:$0x1]
        %v562 = vadd.f32 %v559, %v560
        %v563 = vld [vmem:[%s3] sm:$0xff]
        %v564 = vld [vmem:[%s3 + $0x8] sm:$0xff]
        %v565 = vld [vmem:[%s3 + $0x10] sm:$0xff]
        %v566 = vld [vmem:[%s3 + $0x18] sm:$0xff]
        %v567 = vpack.c.bf16 %v562, %v562
        %v568 = vpack.c.bf16 %v564, %v563
        %v569 = vpack.c.bf16 %v566, %v565
        %v570 = vld [vmem:[%s4] sm:$0x1]
        %v572 = vlaneseq
        %v573 = vshrl.u32 %v572, 7
        %v574 = vsub.s32 0, %v573
        %v575 = vrot.slane %v570, %v574
        %vm577 = vcmask 261120
        %v579 = vsel %vm577, %v567, 0
        %581 = vmatprep.subr.bf16.mxu0 0
        %582 = vmatpush1.bf16.msra.mxu0 0
        %583 = vmatprep.subr.bf16.mxu0 0
        %584 = vmatpush1.bf16.msra.mxu0 0
        %585 = vmatprep.subr.bf16.mxu0 0
        %586 = vmatpush1.bf16.msra.mxu0 0
        %587 = vmatprep.subr.bf16.mxu0 0
        %588 = vmatpush1.bf16.msra.mxu0 0
        %589 = vmatprep.subr.bf16.mxu0 0
        %590 = vmatpush1.bf16.msra.mxu0 0
        %591 = vmatprep.subr.bf16.mxu0 0
        %592 = vmatpush1.bf16.msra.mxu0 0
        %593 = vmatprep.subr.bf16.mxu0 0
        %594 = vmatpush1.bf16.msra.mxu0 %v569
        %595 = vmatprep.subr.bf16.mxu0 0
        %596 = vmatpush1.bf16.msra.mxu0 %v568
        %597 = vmatprep.subr.bf16.mxu0 0
        %598 = vmatpush2.bf16.msra.mxu0 0
        %599 = vmatprep.subr.bf16.mxu0 0
        %600 = vmatpush2.bf16.msra.mxu0 0
        %601 = vmatprep.subr.bf16.mxu0 0
        %602 = vmatpush2.bf16.msra.mxu0 0
        %603 = vmatprep.subr.bf16.mxu0 0
        %604 = vmatpush2.bf16.msra.mxu0 0
        %605 = vmatprep.subr.bf16.mxu0 0
        %606 = vmatpush2.bf16.msra.mxu0 0
        %607 = vmatprep.subr.bf16.mxu0 0
        %608 = vmatpush2.bf16.msra.mxu0 0
        %609 = vmatprep.subr.bf16.mxu0 0
        %610 = vmatpush2.bf16.msra.mxu0 0
        %611 = vmatprep.subr.bf16.mxu0 0
        %612 = vmatpush2.bf16.msra.mxu0 0
        %613 = vmatprep.mubr.bf16.mxu0 0
        %614 = vmatmul.mubr.bf16.gmra.mxu0 %v579
        %v615 = vpop.f32.mrf.mxu0
        %v616 = vadd.f32 %v575, %v615
        %v617 = vpop.f32.mrf.mxu0
        %v618 = vpop.f32.mrf.mxu0
        %v619 = vpop.f32.mrf.mxu0
        %620 = vdwg.mxu0
        %v621 = vld [vmem:[%s5] sm:$0xff]
        %v622 = vld [vmem:[%s5 + $0x8] sm:$0xff]
        %v623 = vld [vmem:[%s5 + $0x10] sm:$0xff]
        %v624 = vld [vmem:[%s5 + $0x18] sm:$0xff]
        %v625 = vpack.c.bf16 %v559, %v559
        %v626 = vpack.c.bf16 %v622, %v621
        %v627 = vpack.c.bf16 %v624, %v623
        %v628 = vld [vmem:[%s6] sm:$0x1]
        %v630 = vlaneseq
        %v631 = vshrl.u32 %v630, 7
        %v632 = vsub.s32 0, %v631
        %v633 = vrot.slane %v628, %v632
        %v636 = vsel %vm577, %v625, 0
        %638 = vmatprep.subr.bf16.mxu0 0
        %639 = vmatpush1.bf16.msra.mxu0 0
        %640 = vmatprep.subr.bf16.mxu0 0
        %641 = vmatpush1.bf16.msra.mxu0 0
        %642 = vmatprep.subr.bf16.mxu0 0
        %643 = vmatpush1.bf16.msra.mxu0 0
        %644 = vmatprep.subr.bf16.mxu0 0
        %645 = vmatpush1.bf16.msra.mxu0 0
        %646 = vmatprep.subr.bf16.mxu0 0
        %647 = vmatpush1.bf16.msra.mxu0 0
        %648 = vmatprep.subr.bf16.mxu0 0
        %649 = vmatpush1.bf16.msra.mxu0 0
        %650 = vmatprep.subr.bf16.mxu0 0
        %651 = vmatpush1.bf16.msra.mxu0 %v627
        %652 = vmatprep.subr.bf16.mxu0 0
        %653 = vmatpush1.bf16.msra.mxu0 %v626
        %654 = vmatprep.subr.bf16.mxu0 0
        %655 = vmatpush2.bf16.msra.mxu0 0
        %656 = vmatprep.subr.bf16.mxu0 0
        %657 = vmatpush2.bf16.msra.mxu0 0
        %658 = vmatprep.subr.bf16.mxu0 0
        %659 = vmatpush2.bf16.msra.mxu0 0
        %660 = vmatprep.subr.bf16.mxu0 0
        %661 = vmatpush2.bf16.msra.mxu0 0
        %662 = vmatprep.subr.bf16.mxu0 0
        %663 = vmatpush2.bf16.msra.mxu0 0
        %664 = vmatprep.subr.bf16.mxu0 0
        %665 = vmatpush2.bf16.msra.mxu0 0
        %666 = vmatprep.subr.bf16.mxu0 0
        %667 = vmatpush2.bf16.msra.mxu0 0
        %668 = vmatprep.subr.bf16.mxu0 0
        %669 = vmatpush2.bf16.msra.mxu0 0
        %670 = vmatprep.mubr.bf16.mxu0 0
        %671 = vmatmul.mubr.bf16.gmra.mxu0 %v636
        %v672 = vpop.f32.mrf.mxu0
        %v673 = vadd.f32 %v633, %v672
        %v674 = vpop.f32.mrf.mxu0
        %v675 = vpop.f32.mrf.mxu0
        %v676 = vpop.f32.mrf.mxu0
        %677 = vdwg.mxu0
        %v678 = vpack.c.bf16 %v616, %v616
        %680 = vrot.lane.b32.xlu0 %v678, 96
        %v681 = vpop.permute.xlu0 %680
        %vm682 = vcmask 64512
        %v684 = vsel %vm682, %v678, 0
        %v687 = vsel %vm682, %v681, 0
        %689 = vmatprep.subr.bf16.mxu0 0
        %690 = vmatpush1.bf16.xpose.msra.mxu0 0
        %691 = vmatprep.subr.bf16.mxu0 0
        %692 = vmatpush1.bf16.xpose.msra.mxu0 0
        %693 = vmatprep.subr.bf16.mxu0 0
        %694 = vmatpush1.bf16.xpose.msra.mxu0 0
        %695 = vmatprep.subr.bf16.mxu0 0
        %696 = vmatpush1.bf16.xpose.msra.mxu0 0
        %697 = vmatprep.subr.bf16.mxu0 0
        %698 = vmatpush1.bf16.xpose.msra.mxu0 0
        %699 = vmatprep.subr.bf16.mxu0 0
        %700 = vmatpush1.bf16.xpose.msra.mxu0 0
        %701 = vmatprep.subr.bf16.mxu0 0
        %702 = vmatpush1.bf16.xpose.msra.mxu0 0
        %703 = vmatprep.subr.bf16.mxu0 0
        %704 = vmatpush1.bf16.xpose.msra.mxu0 %v687
        %705 = vmatprep.subr.bf16.mxu0 0
        %706 = vmatpush2.bf16.xpose.msra.mxu0 0
        %707 = vmatprep.subr.bf16.mxu0 0
        %708 = vmatpush2.bf16.xpose.msra.mxu0 0
        %709 = vmatprep.subr.bf16.mxu0 0
        %710 = vmatpush2.bf16.xpose.msra.mxu0 0
        %711 = vmatprep.subr.bf16.mxu0 0
        %712 = vmatpush2.bf16.xpose.msra.mxu0 0
        %713 = vmatprep.subr.bf16.mxu0 0
        %714 = vmatpush2.bf16.xpose.msra.mxu0 0
        %715 = vmatprep.subr.bf16.mxu0 0
        %716 = vmatpush2.bf16.xpose.msra.mxu0 0
        %717 = vmatprep.subr.bf16.mxu0 0
        %718 = vmatpush2.bf16.xpose.msra.mxu0 0
        %719 = vmatprep.subr.bf16.mxu0 0
        %720 = vmatpush2.bf16.xpose.msra.mxu0 0
        %721 = vmatprep.mubr.bf16.mxu0 0
        %722 = vmatmul.mubr.bf16.gmra.mxu0 %v684
        %v723 = vpop.f32.mrf.mxu0
        %v724 = vadd.f32 0.0, %v723
        %v725 = vpop.f32.mrf.mxu0
        %v726 = vpop.f32.mrf.mxu0
        %v727 = vpop.f32.mrf.mxu0
        %728 = vdwg.mxu0
        %v729 = vmul.f32 %v724, 0.35355338
        %vm730 = vcmp.gt.f32.partialorder %v561, 0.5
        %v731 = vsel %vm730, 1, 0
        %v732 = vlaneseq
        %v733 = vshrl.u32 %v732, 7
        %v734 = vsub.s32 0, %v733
        %v735 = vrot.slane %v731, %v734
        %vm736 = vcmp.eq.s32.totalorder %v735, 1
        %v737 = vsel %vm736, -1e+30, %v729
        %v738 = vsel %vm682, %v737, -inf
        %739 = vmax.xlane.f32.xlu0 %v738
        %v740 = vpop.xlane.xlu0 %739
        %v741 = vsub.f32 %v737, %v740
        %v742 = vmul.f32 %v741, 1.442695
        %v743 = vpow.pop %v742
        %v744 = vsel %vm682, %v743, 0.0
        %745 = vadd.xlane.f32.xlu0 %v744
        %v746 = vpop.xlane.xlu0 %745
        %v747 = vrcp.pop %v746
        %v748 = vmul.f32 %v743, %v747
        %v749 = vpack.c.bf16 %v748, %v748
        %v750 = vpack.c.bf16 %v673, %v673
        %v752 = vsel %vm682, %v749, 0
        %vm754 = vcmask 1043456
        %v756 = vsel %vm754, %v750, 0
        %758 = vmatprep.subr.bf16.mxu0 0
        %759 = vmatpush1.bf16.msra.mxu0 0
        %760 = vmatprep.subr.bf16.mxu0 0
        %761 = vmatpush1.bf16.msra.mxu0 0
        %762 = vmatprep.subr.bf16.mxu0 0
        %763 = vmatpush1.bf16.msra.mxu0 0
        %764 = vmatprep.subr.bf16.mxu0 0
        %765 = vmatpush1.bf16.msra.mxu0 0
        %766 = vmatprep.subr.bf16.mxu0 0
        %767 = vmatpush1.bf16.msra.mxu0 0
        %768 = vmatprep.subr.bf16.mxu0 0
        %769 = vmatpush1.bf16.msra.mxu0 0
        %770 = vmatprep.subr.bf16.mxu0 0
        %771 = vmatpush1.bf16.msra.mxu0 0
        %772 = vmatprep.subr.bf16.mxu0 0
        %773 = vmatpush1.bf16.msra.mxu0 %v756
        %774 = vmatprep.subr.bf16.mxu0 0
        %775 = vmatpush2.bf16.msra.mxu0 0
        %776 = vmatprep.subr.bf16.mxu0 0
        %777 = vmatpush2.bf16.msra.mxu0 0
        %778 = vmatprep.subr.bf16.mxu0 0
        %779 = vmatpush2.bf16.msra.mxu0 0
        %780 = vmatprep.subr.bf16.mxu0 0
        %781 = vmatpush2.bf16.msra.mxu0 0
        %782 = vmatprep.subr.bf16.mxu0 0
        %783 = vmatpush2.bf16.msra.mxu0 0
        %784 = vmatprep.subr.bf16.mxu0 0
        %785 = vmatpush2.bf16.msra.mxu0 0
        %786 = vmatprep.subr.bf16.mxu0 0
        %787 = vmatpush2.bf16.msra.mxu0 0
        %788 = vmatprep.subr.bf16.mxu0 0
        %789 = vmatpush2.bf16.msra.mxu0 0
        %790 = vmatprep.mubr.bf16.mxu0 0
        %791 = vmatmul.mubr.bf16.gmra.mxu0 %v752
        %v792 = vpop.f32.mrf.mxu0
        %v793 = vadd.f32 0.0, %v792
        %v794 = vpop.f32.mrf.mxu0
        %v795 = vpop.f32.mrf.mxu0
        %v796 = vpop.f32.mrf.mxu0
        %797 = vdwg.mxu0
        %798 = vrot.lane.b32.xlu0 %v678, 120
        %v799 = vpop.permute.xlu0 %798
        %800 = vrot.lane.b32.xlu0 %v678, 88
        %v801 = vpop.permute.xlu0 %800
        %v803 = vsel %vm682, %v799, 0
        %v806 = vsel %vm682, %v801, 0
        %808 = vmatprep.subr.bf16.mxu0 0
        %809 = vmatpush1.bf16.xpose.msra.mxu0 0
        %810 = vmatprep.subr.bf16.mxu0 0
        %811 = vmatpush1.bf16.xpose.msra.mxu0 0
        %812 = vmatprep.subr.bf16.mxu0 0
        %813 = vmatpush1.bf16.xpose.msra.mxu0 0
        %814 = vmatprep.subr.bf16.mxu0 0
        %815 = vmatpush1.bf16.xpose.msra.mxu0 0
        %816 = vmatprep.subr.bf16.mxu0 0
        %817 = vmatpush1.bf16.xpose.msra.mxu0 0
        %818 = vmatprep.subr.bf16.mxu0 0
        %819 = vmatpush1.bf16.xpose.msra.mxu0 0
        %820 = vmatprep.subr.bf16.mxu0 0
        %821 = vmatpush1.bf16.xpose.msra.mxu0 0
        %822 = vmatprep.subr.bf16.mxu0 0
        %823 = vmatpush1.bf16.xpose.msra.mxu0 %v806
        %824 = vmatprep.subr.bf16.mxu0 0
        %825 = vmatpush2.bf16.xpose.msra.mxu0 0
        %826 = vmatprep.subr.bf16.mxu0 0
        %827 = vmatpush2.bf16.xpose.msra.mxu0 0
        %828 = vmatprep.subr.bf16.mxu0 0
        %829 = vmatpush2.bf16.xpose.msra.mxu0 0
        %830 = vmatprep.subr.bf16.mxu0 0
        %831 = vmatpush2.bf16.xpose.msra.mxu0 0
        %832 = vmatprep.subr.bf16.mxu0 0
        %833 = vmatpush2.bf16.xpose.msra.mxu0 0
        %834 = vmatprep.subr.bf16.mxu0 0
        %835 = vmatpush2.bf16.xpose.msra.mxu0 0
        %836 = vmatprep.subr.bf16.mxu0 0
        %837 = vmatpush2.bf16.xpose.msra.mxu0 0
        %838 = vmatprep.subr.bf16.mxu0 0
        %839 = vmatpush2.bf16.xpose.msra.mxu0 0
        %840 = vmatprep.mubr.bf16.mxu0 0
        %841 = vmatmul.mubr.bf16.gmra.mxu0 %v803
        %v842 = vpop.f32.mrf.mxu0
        %v843 = vadd.f32 0.0, %v842
        %v844 = vpop.f32.mrf.mxu0
        %v845 = vpop.f32.mrf.mxu0
        %v846 = vpop.f32.mrf.mxu0
        %847 = vdwg.mxu0
        %v848 = vmul.f32 %v843, 0.35355338
        %v849 = vsel %vm736, -1e+30, %v848
        %v850 = vsel %vm682, %v849, -inf
        %851 = vmax.xlane.f32.xlu0 %v850
        %v852 = vpop.xlane.xlu0 %851
        %v853 = vsub.f32 %v849, %v852
        %v854 = vmul.f32 %v853, 1.442695
        %v855 = vpow.pop %v854
        %v856 = vsel %vm682, %v855, 0.0
        %857 = vadd.xlane.f32.xlu0 %v856
        %v858 = vpop.xlane.xlu0 %857
        %v859 = vrcp.pop %v858
        %v860 = vmul.f32 %v855, %v859
        %v861 = vpack.c.bf16 %v860, %v860
        %863 = vrot.lane.b32.xlu0 %v750, 120
        %v864 = vpop.permute.xlu0 %863
        %v866 = vsel %vm682, %v861, 0
        %v869 = vsel %vm754, %v864, 0
        %871 = vmatprep.subr.bf16.mxu0 0
        %872 = vmatpush1.bf16.msra.mxu0 0
        %873 = vmatprep.subr.bf16.mxu0 0
        %874 = vmatpush1.bf16.msra.mxu0 0
        %875 = vmatprep.subr.bf16.mxu0 0
        %876 = vmatpush1.bf16.msra.mxu0 0
        %877 = vmatprep.subr.bf16.mxu0 0
        %878 = vmatpush1.bf16.msra.mxu0 0
        %879 = vmatprep.subr.bf16.mxu0 0
        %880 = vmatpush1.bf16.msra.mxu0 0
        %881 = vmatprep.subr.bf16.mxu0 0
        %882 = vmatpush1.bf16.msra.mxu0 0
        %883 = vmatprep.subr.bf16.mxu0 0
        %884 = vmatpush1.bf16.msra.mxu0 0
        %885 = vmatprep.subr.bf16.mxu0 0
        %886 = vmatpush1.bf16.msra.mxu0 %v869
        %887 = vmatprep.subr.bf16.mxu0 0
        %888 = vmatpush2.bf16.msra.mxu0 0
        %889 = vmatprep.subr.bf16.mxu0 0
        %890 = vmatpush2.bf16.msra.mxu0 0
        %891 = vmatprep.subr.bf16.mxu0 0
        %892 = vmatpush2.bf16.msra.mxu0 0
        %893 = vmatprep.subr.bf16.mxu0 0
        %894 = vmatpush2.bf16.msra.mxu0 0
        %895 = vmatprep.subr.bf16.mxu0 0
        %896 = vmatpush2.bf16.msra.mxu0 0
        %897 = vmatprep.subr.bf16.mxu0 0
        %898 = vmatpush2.bf16.msra.mxu0 0
        %899 = vmatprep.subr.bf16.mxu0 0
        %900 = vmatpush2.bf16.msra.mxu0 0
        %901 = vmatprep.subr.bf16.mxu0 0
        %902 = vmatpush2.bf16.msra.mxu0 0
        %903 = vmatprep.mubr.bf16.mxu0 0
        %904 = vmatmul.mubr.bf16.gmra.mxu0 %v866
        %v905 = vpop.f32.mrf.mxu0
        %v906 = vadd.f32 0.0, %v905
        %v907 = vpop.f32.mrf.mxu0
        %v908 = vpop.f32.mrf.mxu0
        %v909 = vpop.f32.mrf.mxu0
        %910 = vdwg.mxu0
        %911 = vrot.lane.b32.xlu0 %v678, 112
        %v912 = vpop.permute.xlu0 %911
        %913 = vrot.lane.b32.xlu0 %v678, 80
        %v914 = vpop.permute.xlu0 %913
        %v916 = vsel %vm682, %v912, 0
        %v919 = vsel %vm682, %v914, 0
        %921 = vmatprep.subr.bf16.mxu0 0
        %922 = vmatpush1.bf16.xpose.msra.mxu0 0
        %923 = vmatprep.subr.bf16.mxu0 0
        %924 = vmatpush1.bf16.xpose.msra.mxu0 0
        %925 = vmatprep.subr.bf16.mxu0 0
        %926 = vmatpush1.bf16.xpose.msra.mxu0 0
        %927 = vmatprep.subr.bf16.mxu0 0
        %928 = vmatpush1.bf16.xpose.msra.mxu0 0
        %929 = vmatprep.subr.bf16.mxu0 0
        %930 = vmatpush1.bf16.xpose.msra.mxu0 0
        %931 = vmatprep.subr.bf16.mxu0 0
        %932 = vmatpush1.bf16.xpose.msra.mxu0 0
        %933 = vmatprep.subr.bf16.mxu0 0
        %934 = vmatpush1.bf16.xpose.msra.mxu0 0
        %935 = vmatprep.subr.bf16.mxu0 0
        %936 = vmatpush1.bf16.xpose.msra.mxu0 %v919
        %937 = vmatprep.subr.bf16.mxu0 0
        %938 = vmatpush2.bf16.xpose.msra.mxu0 0
        %939 = vmatprep.subr.bf16.mxu0 0
        %940 = vmatpush2.bf16.xpose.msra.mxu0 0
        %941 = vmatprep.subr.bf16.mxu0 0
        %942 = vmatpush2.bf16.xpose.msra.mxu0 0
        %943 = vmatprep.subr.bf16.mxu0 0
        %944 = vmatpush2.bf16.xpose.msra.mxu0 0
        %945 = vmatprep.subr.bf16.mxu0 0
        %946 = vmatpush2.bf16.xpose.msra.mxu0 0
        %947 = vmatprep.subr.bf16.mxu0 0
        %948 = vmatpush2.bf16.xpose.msra.mxu0 0
        %949 = vmatprep.subr.bf16.mxu0 0
        %950 = vmatpush2.bf16.xpose.msra.mxu0 0
        %951 = vmatprep.subr.bf16.mxu0 0
        %952 = vmatpush2.bf16.xpose.msra.mxu0 0
        %953 = vmatprep.mubr.bf16.mxu0 0
        %954 = vmatmul.mubr.bf16.gmra.mxu0 %v916
        %v955 = vpop.f32.mrf.mxu0
        %v956 = vadd.f32 0.0, %v955
        %v957 = vpop.f32.mrf.mxu0
        %v958 = vpop.f32.mrf.mxu0
        %v959 = vpop.f32.mrf.mxu0
        %960 = vdwg.mxu0
        %v961 = vmul.f32 %v956, 0.35355338
        %v962 = vsel %vm736, -1e+30, %v961
        %v963 = vsel %vm682, %v962, -inf
        %964 = vmax.xlane.f32.xlu0 %v963
        %v965 = vpop.xlane.xlu0 %964
        %v966 = vsub.f32 %v962, %v965
        %v967 = vmul.f32 %v966, 1.442695
        %v968 = vpow.pop %v967
        %v969 = vsel %vm682, %v968, 0.0
        %970 = vadd.xlane.f32.xlu0 %v969
        %v971 = vpop.xlane.xlu0 %970
        %v972 = vrcp.pop %v971
        %v973 = vmul.f32 %v968, %v972
        %v974 = vpack.c.bf16 %v973, %v973
        %975 = vrot.lane.b32.xlu0 %v750, 112
        %v976 = vpop.permute.xlu0 %975
        %v978 = vsel %vm682, %v974, 0
        %v981 = vsel %vm754, %v976, 0
        %983 = vmatprep.subr.bf16.mxu0 0
        %984 = vmatpush1.bf16.msra.mxu0 0
        %985 = vmatprep.subr.bf16.mxu0 0
        %986 = vmatpush1.bf16.msra.mxu0 0
        %987 = vmatprep.subr.bf16.mxu0 0
        %988 = vmatpush1.bf16.msra.mxu0 0
        %989 = vmatprep.subr.bf16.mxu0 0
        %990 = vmatpush1.bf16.msra.mxu0 0
        %991 = vmatprep.subr.bf16.mxu0 0
        %992 = vmatpush1.bf16.msra.mxu0 0
        %993 = vmatprep.subr.bf16.mxu0 0
        %994 = vmatpush1.bf16.msra.mxu0 0
        %995 = vmatprep.subr.bf16.mxu0 0
        %996 = vmatpush1.bf16.msra.mxu0 0
        %997 = vmatprep.subr.bf16.mxu0 0
        %998 = vmatpush1.bf16.msra.mxu0 %v981
        %999 = vmatprep.subr.bf16.mxu0 0
        %1000 = vmatpush2.bf16.msra.mxu0 0
        %1001 = vmatprep.subr.bf16.mxu0 0
        %1002 = vmatpush2.bf16.msra.mxu0 0
        %1003 = vmatprep.subr.bf16.mxu0 0
        %1004 = vmatpush2.bf16.msra.mxu0 0
        %1005 = vmatprep.subr.bf16.mxu0 0
        %1006 = vmatpush2.bf16.msra.mxu0 0
        %1007 = vmatprep.subr.bf16.mxu0 0
        %1008 = vmatpush2.bf16.msra.mxu0 0
        %1009 = vmatprep.subr.bf16.mxu0 0
        %1010 = vmatpush2.bf16.msra.mxu0 0
        %1011 = vmatprep.subr.bf16.mxu0 0
        %1012 = vmatpush2.bf16.msra.mxu0 0
        %1013 = vmatprep.subr.bf16.mxu0 0
        %1014 = vmatpush2.bf16.msra.mxu0 0
        %1015 = vmatprep.mubr.bf16.mxu0 0
        %1016 = vmatmul.mubr.bf16.gmra.mxu0 %v978
        %v1017 = vpop.f32.mrf.mxu0
        %v1018 = vadd.f32 0.0, %v1017
        %v1019 = vpop.f32.mrf.mxu0
        %v1020 = vpop.f32.mrf.mxu0
        %v1021 = vpop.f32.mrf.mxu0
        %1022 = vdwg.mxu0
        %1023 = vrot.lane.b32.xlu0 %v678, 104
        %v1024 = vpop.permute.xlu0 %1023
        %1025 = vrot.lane.b32.xlu0 %v678, 72
        %v1026 = vpop.permute.xlu0 %1025
        %v1028 = vsel %vm682, %v1024, 0
        %v1031 = vsel %vm682, %v1026, 0
        %1033 = vmatprep.subr.bf16.mxu0 0
        %1034 = vmatpush1.bf16.xpose.msra.mxu0 0
        %1035 = vmatprep.subr.bf16.mxu0 0
        %1036 = vmatpush1.bf16.xpose.msra.mxu0 0
        %1037 = vmatprep.subr.bf16.mxu0 0
        %1038 = vmatpush1.bf16.xpose.msra.mxu0 0
        %1039 = vmatprep.subr.bf16.mxu0 0
        %1040 = vmatpush1.bf16.xpose.msra.mxu0 0
        %1041 = vmatprep.subr.bf16.mxu0 0
        %1042 = vmatpush1.bf16.xpose.msra.mxu0 0
        %1043 = vmatprep.subr.bf16.mxu0 0
        %1044 = vmatpush1.bf16.xpose.msra.mxu0 0
        %1045 = vmatprep.subr.bf16.mxu0 0
        %1046 = vmatpush1.bf16.xpose.msra.mxu0 0
        %1047 = vmatprep.subr.bf16.mxu0 0
        %1048 = vmatpush1.bf16.xpose.msra.mxu0 %v1031
        %1049 = vmatprep.subr.bf16.mxu0 0
        %1050 = vmatpush2.bf16.xpose.msra.mxu0 0
        %1051 = vmatprep.subr.bf16.mxu0 0
        %1052 = vmatpush2.bf16.xpose.msra.mxu0 0
        %1053 = vmatprep.subr.bf16.mxu0 0
        %1054 = vmatpush2.bf16.xpose.msra.mxu0 0
        %1055 = vmatprep.subr.bf16.mxu0 0
        %1056 = vmatpush2.bf16.xpose.msra.mxu0 0
        %1057 = vmatprep.subr.bf16.mxu0 0
        %1058 = vmatpush2.bf16.xpose.msra.mxu0 0
        %1059 = vmatprep.subr.bf16.mxu0 0
        %1060 = vmatpush2.bf16.xpose.msra.mxu0 0
        %1061 = vmatprep.subr.bf16.mxu0 0
        %1062 = vmatpush2.bf16.xpose.msra.mxu0 0
        %1063 = vmatprep.subr.bf16.mxu0 0
        %1064 = vmatpush2.bf16.xpose.msra.mxu0 0
        %1065 = vmatprep.mubr.bf16.mxu0 0
        %1066 = vmatmul.mubr.bf16.gmra.mxu0 %v1028
        %v1067 = vpop.f32.mrf.mxu0
        %v1068 = vadd.f32 0.0, %v1067
        %v1069 = vpop.f32.mrf.mxu0
        %v1070 = vpop.f32.mrf.mxu0
        %v1071 = vpop.f32.mrf.mxu0
        %1072 = vdwg.mxu0
        %v1073 = vmul.f32 %v1068, 0.35355338
        %v1074 = vsel %vm736, -1e+30, %v1073
        %v1075 = vsel %vm682, %v1074, -inf
        %1076 = vmax.xlane.f32.xlu0 %v1075
        %v1077 = vpop.xlane.xlu0 %1076
        %v1078 = vsub.f32 %v1074, %v1077
        %v1079 = vmul.f32 %v1078, 1.442695
        %v1080 = vpow.pop %v1079
        %v1081 = vsel %vm682, %v1080, 0.0
        %1082 = vadd.xlane.f32.xlu0 %v1081
        %v1083 = vpop.xlane.xlu0 %1082
        %v1084 = vrcp.pop %v1083
        %v1085 = vmul.f32 %v1080, %v1084
        %v1086 = vpack.c.bf16 %v1085, %v1085
        %1087 = vrot.lane.b32.xlu0 %v750, 104
        %v1088 = vpop.permute.xlu0 %1087
        %v1090 = vsel %vm682, %v1086, 0
        %v1093 = vsel %vm754, %v1088, 0
        %1095 = vmatprep.subr.bf16.mxu0 0
        %1096 = vmatpush1.bf16.msra.mxu0 0
        %1097 = vmatprep.subr.bf16.mxu0 0
        %1098 = vmatpush1.bf16.msra.mxu0 0
        %1099 = vmatprep.subr.bf16.mxu0 0
        %1100 = vmatpush1.bf16.msra.mxu0 0
        %1101 = vmatprep.subr.bf16.mxu0 0
        %1102 = vmatpush1.bf16.msra.mxu0 0
        %1103 = vmatprep.subr.bf16.mxu0 0
        %1104 = vmatpush1.bf16.msra.mxu0 0
        %1105 = vmatprep.subr.bf16.mxu0 0
        %1106 = vmatpush1.bf16.msra.mxu0 0
        %1107 = vmatprep.subr.bf16.mxu0 0
        %1108 = vmatpush1.bf16.msra.mxu0 0
        %1109 = vmatprep.subr.bf16.mxu0 0
        %1110 = vmatpush1.bf16.msra.mxu0 %v1093
        %1111 = vmatprep.subr.bf16.mxu0 0
        %1112 = vmatpush2.bf16.msra.mxu0 0
        %1113 = vmatprep.subr.bf16.mxu0 0
        %1114 = vmatpush2.bf16.msra.mxu0 0
        %1115 = vmatprep.subr.bf16.mxu0 0
        %1116 = vmatpush2.bf16.msra.mxu0 0
        %1117 = vmatprep.subr.bf16.mxu0 0
        %1118 = vmatpush2.bf16.msra.mxu0 0
        %1119 = vmatprep.subr.bf16.mxu0 0
        %1120 = vmatpush2.bf16.msra.mxu0 0
        %1121 = vmatprep.subr.bf16.mxu0 0
        %1122 = vmatpush2.bf16.msra.mxu0 0
        %1123 = vmatprep.subr.bf16.mxu0 0
        %1124 = vmatpush2.bf16.msra.mxu0 0
        %1125 = vmatprep.subr.bf16.mxu0 0
        %1126 = vmatpush2.bf16.msra.mxu0 0
        %1127 = vmatprep.mubr.bf16.mxu0 0
        %1128 = vmatmul.mubr.bf16.gmra.mxu0 %v1090
        %v1129 = vpop.f32.mrf.mxu0
        %v1130 = vadd.f32 0.0, %v1129
        %v1131 = vpop.f32.mrf.mxu0
        %v1132 = vpop.f32.mrf.mxu0
        %v1133 = vpop.f32.mrf.mxu0
        %1134 = vdwg.mxu0
        %1136 = vrot.lane.b32.xlu0 %v906, 8
        %v1137 = vpop.permute.xlu0 %1136
        %1140 = vrot.lane.b32.xlu0 %v1018, 16
        %v1141 = vpop.permute.xlu0 %1140
        %1144 = vrot.lane.b32.xlu0 %v1130, 24
        %v1145 = vpop.permute.xlu0 %1144
        %v1147 = vsel %vm682, %v793, %v1137
        %vm1148 = vcmask 130048
        %v1149 = vsel %vm1148, %v1147, %v1141
        %vm1150 = vcmask 195584
        %v1151 = vsel %vm1150, %v1149, %v1145
        %v1152 = vld [vmem:[%s7] sm:$0xff]
        %v1153 = vld [vmem:[%s7 + $0x8] sm:$0xff]
        %v1154 = vld [vmem:[%s7 + $0x10] sm:$0xff]
        %v1155 = vld [vmem:[%s7 + $0x18] sm:$0xff]
        %v1156 = vpack.c.bf16 %v1151, %v1151
        %v1157 = vpack.c.bf16 %v1153, %v1152
        %v1158 = vpack.c.bf16 %v1155, %v1154
        %v1159 = vld [vmem:[%s8] sm:$0x1]
        %v1161 = vlaneseq
        %v1162 = vshrl.u32 %v1161, 7
        %v1163 = vsub.s32 0, %v1162
        %v1164 = vrot.slane %v1159, %v1163
        %v1167 = vsel %vm577, %v1156, 0
        %1169 = vmatprep.subr.bf16.mxu0 0
        %1170 = vmatpush1.bf16.msra.mxu0 0
        %1171 = vmatprep.subr.bf16.mxu0 0
        %1172 = vmatpush1.bf16.msra.mxu0 0
        %1173 = vmatprep.subr.bf16.mxu0 0
        %1174 = vmatpush1.bf16.msra.mxu0 0
        %1175 = vmatprep.subr.bf16.mxu0 0
        %1176 = vmatpush1.bf16.msra.mxu0 0
        %1177 = vmatprep.subr.bf16.mxu0 0
        %1178 = vmatpush1.bf16.msra.mxu0 0
        %1179 = vmatprep.subr.bf16.mxu0 0
        %1180 = vmatpush1.bf16.msra.mxu0 0
        %1181 = vmatprep.subr.bf16.mxu0 0
        %1182 = vmatpush1.bf16.msra.mxu0 %v1158
        %1183 = vmatprep.subr.bf16.mxu0 0
        %1184 = vmatpush1.bf16.msra.mxu0 %v1157
        %1185 = vmatprep.subr.bf16.mxu0 0
        %1186 = vmatpush2.bf16.msra.mxu0 0
        %1187 = vmatprep.subr.bf16.mxu0 0
        %1188 = vmatpush2.bf16.msra.mxu0 0
        %1189 = vmatprep.subr.bf16.mxu0 0
        %1190 = vmatpush2.bf16.msra.mxu0 0
        %1191 = vmatprep.subr.bf16.mxu0 0
        %1192 = vmatpush2.bf16.msra.mxu0 0
        %1193 = vmatprep.subr.bf16.mxu0 0
        %1194 = vmatpush2.bf16.msra.mxu0 0
        %1195 = vmatprep.subr.bf16.mxu0 0
        %1196 = vmatpush2.bf16.msra.mxu0 0
        %1197 = vmatprep.subr.bf16.mxu0 0
        %1198 = vmatpush2.bf16.msra.mxu0 0
        %1199 = vmatprep.subr.bf16.mxu0 0
        %1200 = vmatpush2.bf16.msra.mxu0 0
        %1201 = vmatprep.mubr.bf16.mxu0 0
        %1202 = vmatmul.mubr.bf16.gmra.mxu0 %v1167
        %v1203 = vpop.f32.mrf.mxu0
        %v1204 = vadd.f32 %v1164, %v1203
        %v1205 = vpop.f32.mrf.mxu0
        %v1206 = vpop.f32.mrf.mxu0
        %v1207 = vpop.f32.mrf.mxu0
        %1208 = vdwg.mxu0
        %v1209 = vadd.f32 %v562, %v1204
        %v1210 = vld [vmem:[%s9] sm:$0x1]
        %v1211 = vld [vmem:[%s10] sm:$0x1]
        %v1212 = vsel %vm577, %v1209, 0.0
        %1213 = vadd.xlane.f32.xlu0 %v1212
        %v1214 = vpop.xlane.xlu0 %1213
        %v1215 = vrcp.pop 32.0
        %v1216 = vmul.f32 %v1214, %v1215
        %v1217 = vsub.f32 %v1209, %v1216
        %v1218 = vmul.f32 %v1217, %v1217
        %v1219 = vsel %vm577, %v1218, 0.0
        %1220 = vadd.xlane.f32.xlu0 %v1219
        %v1221 = vpop.xlane.xlu0 %1220
        %v1222 = vmul.f32 %v1221, %v1215
        %v1223 = vadd.f32 %v1222, 1e-05
        %v1224 = vrsqrt.pop %v1223
        %v1225 = vmul.f32 %v1217, %v1224
        %v1227 = vlaneseq
        %v1228 = vshrl.u32 %v1227, 7
        %v1229 = vsub.s32 0, %v1228
        %v1230 = vrot.slane %v1210, %v1229
        %v1232 = vmul.f32 %v1225, %v1230
        %v1234 = vlaneseq
        %v1235 = vshrl.u32 %v1234, 7
        %v1236 = vsub.s32 0, %v1235
        %v1237 = vrot.slane %v1211, %v1236
        %v1239 = vadd.f32 %v1232, %v1237
        %v1240 = vld [vmem:[%s11] sm:$0xff]
        %v1241 = vld [vmem:[%s11 + $0x8] sm:$0xff]
        %v1242 = vld [vmem:[%s11 + $0x10] sm:$0xff]
        %v1243 = vld [vmem:[%s11 + $0x18] sm:$0xff]
        %v1244 = vpack.c.bf16 %v1239, %v1239
        %v1245 = vpack.c.bf16 %v1241, %v1240
        %v1246 = vpack.c.bf16 %v1243, %v1242
        %v1247 = vld [vmem:[%s12] sm:$0x1]
        %v1249 = vlaneseq
        %v1250 = vshrl.u32 %v1249, 7
        %v1251 = vsub.s32 0, %v1250
        %v1252 = vrot.slane %v1247, %v1251
        %v1255 = vsel %vm577, %v1244, 0
        %1257 = vmatprep.subr.bf16.mxu0 0
        %1258 = vmatpush1.bf16.msra.mxu0 0
        %1259 = vmatprep.subr.bf16.mxu0 0
        %1260 = vmatpush1.bf16.msra.mxu0 0
        %1261 = vmatprep.subr.bf16.mxu0 0
        %1262 = vmatpush1.bf16.msra.mxu0 0
        %1263 = vmatprep.subr.bf16.mxu0 0
        %1264 = vmatpush1.bf16.msra.mxu0 0
        %1265 = vmatprep.subr.bf16.mxu0 0
        %1266 = vmatpush1.bf16.msra.mxu0 0
        %1267 = vmatprep.subr.bf16.mxu0 0
        %1268 = vmatpush1.bf16.msra.mxu0 0
        %1269 = vmatprep.subr.bf16.mxu0 0
        %1270 = vmatpush1.bf16.msra.mxu0 %v1246
        %1271 = vmatprep.subr.bf16.mxu0 0
        %1272 = vmatpush1.bf16.msra.mxu0 %v1245
        %1273 = vmatprep.subr.bf16.mxu0 0
        %1274 = vmatpush2.bf16.msra.mxu0 0
        %1275 = vmatprep.subr.bf16.mxu0 0
        %1276 = vmatpush2.bf16.msra.mxu0 0
        %1277 = vmatprep.subr.bf16.mxu0 0
        %1278 = vmatpush2.bf16.msra.mxu0 0
        %1279 = vmatprep.subr.bf16.mxu0 0
        %1280 = vmatpush2.bf16.msra.mxu0 0
        %1281 = vmatprep.subr.bf16.mxu0 0
        %1282 = vmatpush2.bf16.msra.mxu0 0
        %1283 = vmatprep.subr.bf16.mxu0 0
        %1284 = vmatpush2.bf16.msra.mxu0 0
        %1285 = vmatprep.subr.bf16.mxu0 0
        %1286 = vmatpush2.bf16.msra.mxu0 0
        %1287 = vmatprep.subr.bf16.mxu0 0
        %1288 = vmatpush2.bf16.msra.mxu0 0
        %1289 = vmatprep.mubr.bf16.mxu0 0
        %1290 = vmatmul.mubr.bf16.gmra.mxu0 %v1255
        %v1291 = vpop.f32.mrf.mxu0
        %v1292 = vadd.f32 %v1252, %v1291
        %v1293 = vpop.f32.mrf.mxu0
        %v1294 = vpop.f32.mrf.mxu0
        %v1295 = vpop.f32.mrf.mxu0
        %1296 = vdwg.mxu0
        %v1297 = vmax.f32 %v1292, 0.0
        %v1298 = vld [vmem:[%s13] sm:$0xff]
        %v1299 = vld [vmem:[%s13 + $0x8] sm:$0xff]
        %v1300 = vld [vmem:[%s13 + $0x10] sm:$0xff]
        %v1301 = vld [vmem:[%s13 + $0x18] sm:$0xff]
        %v1302 = vld [vmem:[%s13 + $0x20] sm:$0xff]
        %v1303 = vld [vmem:[%s13 + $0x28] sm:$0xff]
        %v1304 = vld [vmem:[%s13 + $0x30] sm:$0xff]
        %v1305 = vld [vmem:[%s13 + $0x38] sm:$0xff]
        %v1306 = vpack.c.bf16 %v1297, %v1297
        %v1307 = vpack.c.bf16 %v1299, %v1298
        %v1308 = vpack.c.bf16 %v1301, %v1300
        %v1309 = vpack.c.bf16 %v1303, %v1302
        %v1310 = vpack.c.bf16 %v1305, %v1304
        %v1311 = vld [vmem:[%s14] sm:$0x1]
        %v1313 = vlaneseq
        %v1314 = vshrl.u32 %v1313, 7
        %v1315 = vsub.s32 0, %v1314
        %v1316 = vrot.slane %v1311, %v1315
        %vm1318 = vcmask 523264
        %v1320 = vsel %vm1318, %v1306, 0
        %1322 = vmatprep.subr.bf16.mxu0 0
        %1323 = vmatpush1.bf16.msra.mxu0 0
        %1324 = vmatprep.subr.bf16.mxu0 0
        %1325 = vmatpush1.bf16.msra.mxu0 0
        %1326 = vmatprep.subr.bf16.mxu0 0
        %1327 = vmatpush1.bf16.msra.mxu0 0
        %1328 = vmatprep.subr.bf16.mxu0 0
        %1329 = vmatpush1.bf16.msra.mxu0 0
        %1330 = vmatprep.subr.bf16.mxu0 0
        %1331 = vmatpush1.bf16.msra.mxu0 %v1310
        %1332 = vmatprep.subr.bf16.mxu0 0
        %1333 = vmatpush1.bf16.msra.mxu0 %v1309
        %1334 = vmatprep.subr.bf16.mxu0 0
        %1335 = vmatpush1.bf16.msra.mxu0 %v1308
        %1336 = vmatprep.subr.bf16.mxu0 0
        %1337 = vmatpush1.bf16.msra.mxu0 %v1307
        %1338 = vmatprep.subr.bf16.mxu0 0
        %1339 = vmatpush2.bf16.msra.mxu0 0
        %1340 = vmatprep.subr.bf16.mxu0 0
        %1341 = vmatpush2.bf16.msra.mxu0 0
        %1342 = vmatprep.subr.bf16.mxu0 0
        %1343 = vmatpush2.bf16.msra.mxu0 0
        %1344 = vmatprep.subr.bf16.mxu0 0
        %1345 = vmatpush2.bf16.msra.mxu0 0
        %1346 = vmatprep.subr.bf16.mxu0 0
        %1347 = vmatpush2.bf16.msra.mxu0 0
        %1348 = vmatprep.subr.bf16.mxu0 0
        %1349 = vmatpush2.bf16.msra.mxu0 0
        %1350 = vmatprep.subr.bf16.mxu0 0
        %1351 = vmatpush2.bf16.msra.mxu0 0
        %1352 = vmatprep.subr.bf16.mxu0 0
        %1353 = vmatpush2.bf16.msra.mxu0 0
        %1354 = vmatprep.mubr.bf16.mxu0 0
        %1355 = vmatmul.mubr.bf16.gmra.mxu0 %v1320
        %v1356 = vpop.f32.mrf.mxu0
        %v1357 = vadd.f32 %v1316, %v1356
        %v1358 = vpop.f32.mrf.mxu0
        %v1359 = vpop.f32.mrf.mxu0
        %v1360 = vpop.f32.mrf.mxu0
        %1361 = vdwg.mxu0
        %v1362 = vadd.f32 %v1239, %v1357
        %v1363 = vld [vmem:[%s15] sm:$0x1]
        %v1364 = vld [vmem:[%s16] sm:$0x1]
        %v1365 = vsel %vm577, %v1362, 0.0
        %1366 = vadd.xlane.f32.xlu0 %v1365
        %v1367 = vpop.xlane.xlu0 %1366
        %v1368 = vmul.f32 %v1367, %v1215
        %v1369 = vsub.f32 %v1362, %v1368
        %v1370 = vmul.f32 %v1369, %v1369
        %v1371 = vsel %vm577, %v1370, 0.0
        %1372 = vadd.xlane.f32.xlu0 %v1371
        %v1373 = vpop.xlane.xlu0 %1372
        %v1374 = vmul.f32 %v1373, %v1215
        %v1375 = vadd.f32 %v1374, 1e-05
        %v1376 = vrsqrt.pop %v1375
        %v1377 = vmul.f32 %v1369, %v1376
        %v1379 = vlaneseq
        %v1380 = vshrl.u32 %v1379, 7
        %v1381 = vsub.s32 0, %v1380
        %v1382 = vrot.slane %v1363, %v1381
        %v1384 = vmul.f32 %v1377, %v1382
        %v1386 = vlaneseq
        %v1387 = vshrl.u32 %v1386, 7
        %v1388 = vsub.s32 0, %v1387
        %v1389 = vrot.slane %v1364, %v1388
        %v1391 = vadd.f32 %v1384, %v1389
        %1392 = vst.msk [vmem:[%s550] sm:$0xff] %vm577, %v1391
        %s1393 = sand.u32 %s406, 1
        %s1394 = scalar_lea.sflag [#allocation3], %s1393
        %s1395 = sand.u32 %s406, 1
        %s1396 = smul.addr %s1395, 8
        %s1397 = scalar_lea.vmem [#allocation2], %s1396
        // Predicated region
        $region89: #{multi_level_encoder_box_forward.5} parent=87 // pred_check
          %p1398 = pneg %p416
        $region90: #{multi_level_encoder_box_forward.5} parent=87 // pred_check_branch
          %1400 = sbr.rel (%p1398) target = $region92
        $region91: #{multi_level_encoder_box_forward.5} parent=87 // pred_region
          %s1402 = ssub.s32 128, 128
          %1403 = vsyncadd %s1394, %s1402
          %s1404 = smul.addr %s31, 128
          %s1405 = scalar_lea.hbm %s17, %s1404
          %s1407 = sshll.u32 %s1397, 4
          %s1408 = int_to_ptr.vmem [resolvable:$true] %s1407
          %1410 = dma.vmem_to_hbm [thread:$0]  %s1408, 128, %s1405, %s1394
        $region92: #{multi_level_encoder_box_forward.5} parent=87 // pred_fallthru
          _
      $region88: #{multi_level_encoder_box_forward.5} parent=5 // pred_fallthru
        _
      %p1411 = scmp.le.s32.totalorder 2, %s26
      // Predicated region
      $region93: #{multi_level_encoder_box_forward.5} parent=5 // pred_check
        %p1412 = pneg %p1411
      $region94: #{multi_level_encoder_box_forward.5} parent=5 // pred_check_branch
        %1414 = sbr.rel (%p1412) target = $region96
      $region95: #{multi_level_encoder_box_forward.5} parent=5 // pred_region
        %s1415 = ssub.s32 %s26, 2
        // Predicated region
        $region97: #{multi_level_encoder_box_forward.5} parent=95 // pred_check
          %p1416 = pneg %p422
        $region98: #{multi_level_encoder_box_forward.5} parent=95 // pred_check_branch
          %1418 = sbr.rel (%p1416) target = $region100
        $region99: #{multi_level_encoder_box_forward.5} parent=95 // pred_region
          %s1419 = sand.u32 %s407, 1
          %s1420 = scalar_lea.sflag [#allocation3], %s1419
          %s1421 = sand.u32 %s407, 1
          %s1422 = smul.addr %s1421, 8
          %s1423 = scalar_lea.vmem [#allocation2], %s1422
          %1424 = dma.done %s1420, 128
        $region100: #{multi_level_encoder_box_forward.5} parent=95 // pred_fallthru
          _
      $region96: #{multi_level_encoder_box_forward.5} parent=5 // pred_fallthru
        _
    $region6: #{multi_level_encoder_box_forward.5} parent=1 // loop_footer
      %s30 = sadd.s32 1, %s26
    $region7: #{multi_level_encoder_box_forward.5} parent=1 // loop_footer_branch
      %25 = sbr.rel target = $region3
    $region8: #{multi_level_encoder_box_forward.5} parent=1 // loop_exit
      _
    %1425 = vsyncpa [#allocation3], 1
    %s1426 = scalar_lea.sflag [#allocation3], 1
    %1427 = vsyncpa %s1426, 1

// kernel: multi_level_encoder_box_forward.4
$region0: #{multi_level_encoder_box_forward.4}
  #allocation0 [shape = 'u32[]', space=smem, size = 0x4, offset = 0x4, fixed_abs, tag = 'smem constant byte address 0x4 - core index']
  #allocation1 [shape = 'u32[144,128]{1,0:T(1,128)}', space=vmem, size = 0x12000, scoped, tag = 'internal scratch']
  %s0 = inlined_call_operand.vmem [shape: f32[2,8,32], index: 0, kind: input, shape index: {}]
  %s1 = inlined_call_operand.vmem [shape: f32[8,32], index: 1, kind: input, shape index: {}]
  %s2 = inlined_call_operand.vmem [shape: f32[2,1,8], index: 2, kind: input, shape index: {}]
  %s3 = inlined_call_operand.vmem [shape: f32[32,64], index: 3, kind: input, shape index: {}]
  %s4 = inlined_call_operand.hbm [shape: f32[1,64], index: 4, kind: input, shape index: {}]
  %s5 = inlined_call_operand.vmem [shape: f32[32,32], index: 5, kind: input, shape index: {}]
  %s6 = inlined_call_operand.hbm [shape: f32[1,32], index: 6, kind: input, shape index: {}]
  %s7 = inlined_call_operand.vmem [shape: f32[32,32], index: 7, kind: input, shape index: {}]
  %s8 = inlined_call_operand.hbm [shape: f32[1,32], index: 8, kind: input, shape index: {}]
  %s9 = inlined_call_operand.hbm [shape: f32[1,32], index: 9, kind: input, shape index: {}]
  %s10 = inlined_call_operand.hbm [shape: f32[1,32], index: 10, kind: input, shape index: {}]
  %s11 = inlined_call_operand.vmem [shape: f32[32,64], index: 11, kind: input, shape index: {}]
  %s12 = inlined_call_operand.hbm [shape: f32[1,64], index: 12, kind: input, shape index: {}]
  %s13 = inlined_call_operand.vmem [shape: f32[64,32], index: 13, kind: input, shape index: {}]
  %s14 = inlined_call_operand.hbm [shape: f32[1,32], index: 14, kind: input, shape index: {}]
  %s15 = inlined_call_operand.hbm [shape: f32[1,32], index: 15, kind: input, shape index: {}]
  %s16 = inlined_call_operand.hbm [shape: f32[1,32], index: 16, kind: input, shape index: {}]
  %s17 = inlined_call_operand.vmem [shape: f32[2,8,32], index: 17, kind: output, shape index: {}]
  %s18 = sld [smem:[#allocation0]]
  $region137: #{multi_level_encoder_box_forward.4} parent=0
    _
  %s20 = ssub.s32 1, %s18
  %s21 = scalar_select 0, %s20, %s18
  $region1: #{multi_level_encoder_box_forward.4} parent=0
    #allocation2 [shape = 'u8[512]{0}', space=vmem, size = 0x400, scoped, tag = 'input window, operand 4, single buffered']
    #allocation3 [shape = 's32[2]{0}', space=sflag, size = 0x8, scoped, tag = 'scoped memory for multi_level_encoder_box_forward.4']
    #allocation4 [shape = 'u8[512]{0}', space=vmem, size = 0x400, scoped, tag = 'input window, operand 6, single buffered']
    #allocation5 [shape = 's32[1]{0}', space=sflag, size = 0x4, scoped, tag = 'scoped memory for multi_level_encoder_box_forward.4']
    #allocation6 [shape = 'u8[512]{0}', space=vmem, size = 0x400, scoped, tag = 'input window, operand 8, single buffered']
    #allocation7 [shape = 'u8[512]{0}', space=vmem, size = 0x400, scoped, tag = 'input window, operand 9, single buffered']
    #allocation8 [shape = 's32[1]{0}', space=sflag, size = 0x4, scoped, tag = 'scoped memory for multi_level_encoder_box_forward.4']
    #allocation9 [shape = 'u8[512]{0}', space=vmem, size = 0x400, scoped, tag = 'input window, operand 10, single buffered']
    #allocation10 [shape = 'u8[512]{0}', space=vmem, size = 0x400, scoped, tag = 'input window, operand 12, single buffered']
    #allocation11 [shape = 's32[1]{0}', space=sflag, size = 0x4, scoped, tag = 'scoped memory for multi_level_encoder_box_forward.4']
    #allocation12 [shape = 'u8[512]{0}', space=vmem, size = 0x400, scoped, tag = 'input window, operand 14, single buffered']
    #allocation13 [shape = 'u8[512]{0}', space=vmem, size = 0x400, scoped, tag = 'input window, operand 15, single buffered']
    #allocation14 [shape = 's32[1]{0}', space=sflag, size = 0x4, scoped, tag = 'scoped memory for multi_level_encoder_box_forward.4']
    #allocation15 [shape = 'u8[512]{0}', space=vmem, size = 0x400, scoped, tag = 'input window, operand 16, single buffered']
    %22 = vsyncpa [#allocation3], 0
    %23 = vsyncpa [#allocation5], 0
    %24 = vsyncpa [#allocation8], 0
    %25 = vsyncpa [#allocation11], 0
    %26 = vsyncpa [#allocation14], 0
    loop: start=0, step=1, limit=4
    $region2: #{multi_level_encoder_box_forward.4} parent=1 // loop_pre_header
      _
    $region3: #{multi_level_encoder_box_forward.4} parent=1 // loop_header
      %s28 = sphi 0, %s32
      %p29 = scmp.ge.s32.totalorder %s28, 4
      %s38 = sphi 0, %s40
      %s41 = sphi 0, %s38
      %s42 = sphi 0, %s41
      %s58 = sphi 0, %s42
      %s62 = sphi 0, %s62
      %s64 = sphi 0, %s62
      %s65 = sphi 0, %s64
      %s79 = sphi 0, %s65
      %s85 = sphi 0, %s87
      %s88 = sphi 0, %s85
      %s89 = sphi 0, %s88
      %s105 = sphi 0, %s89
      %s109 = sphi 0, %s109
      %s111 = sphi 0, %s109
      %s112 = sphi 0, %s111
      %s126 = sphi 0, %s112
      %s130 = sphi 0, %s130
      %s132 = sphi 0, %s130
      %s133 = sphi 0, %s132
      %s147 = sphi 0, %s133
      %s151 = sphi 0, %s151
      %s153 = sphi 0, %s151
      %s154 = sphi 0, %s153
      %s168 = sphi 0, %s154
      %s172 = sphi 0, %s172
      %s174 = sphi 0, %s172
      %s175 = sphi 0, %s174
      %s189 = sphi 0, %s175
      %s193 = sphi 0, %s193
      %s195 = sphi 0, %s193
      %s196 = sphi 0, %s195
      %s210 = sphi 0, %s196
      %s214 = sphi 0, %s214
      %s216 = sphi 0, %s214
      %s217 = sphi 0, %s216
      %s231 = sphi 0, %s217
      %s235 = sphi 0, %s235
      %s237 = sphi 0, %s235
      %s238 = sphi 0, %s237
      %s252 = sphi 0, %s238
      %s256 = sphi 0, %s256
      %s258 = sphi 0, %s256
      %s259 = sphi 0, %s258
      %s273 = sphi 0, %s259
      %s277 = sphi 0, %s277
      %s279 = sphi 0, %s277
      %s280 = sphi 0, %s279
      %s294 = sphi 0, %s280
      %s298 = sphi 0, %s298
      %s300 = sphi 0, %s298
      %s301 = sphi 0, %s300
      %s315 = sphi 0, %s301
      %s319 = sphi 0, %s319
      %s321 = sphi 0, %s319
      %s322 = sphi 0, %s321
      %s336 = sphi 0, %s322
      %s340 = sphi 0, %s340
      %s342 = sphi 0, %s340
      %s343 = sphi 0, %s342
      %s357 = sphi 0, %s343
      %s361 = sphi 0, %s361
      %s363 = sphi 0, %s361
      %s364 = sphi 0, %s363
      %s378 = sphi 0, %s364
      %s382 = sphi 0, %s382
      %s384 = sphi 0, %s382
      %s385 = sphi 0, %s384
      %s399 = sphi 0, %s385
      %s405 = sphi 0, %s407
      %s408 = sphi 0, %s405
      %s409 = sphi 0, %s408
      %s425 = sphi 0, %s409
    $region4: #{multi_level_encoder_box_forward.4} parent=1 // loop_header_branch
      %31 = sbr.rel (%p29) target = $region8
    $region5: #{multi_level_encoder_box_forward.4} parent=1 // loop_body
      %s33 = ssub.s32 %s28, 1
      %s34 = ssub.s32 %s28, 2
      %s35 = sadd.s32 %s28, 1
      %s36 = ssub.s32 %s28, %s35
      %p37 = scmp.eq.s32.totalorder %s36, 0
      %s39 = sadd.s32 %s38, 1
      %s40 = scalar_select %p37, %s38, %s39
      %p43 = pneg %p37
      %p44 = scmp.eq.s32.totalorder %s28, 1
      %p45 = por %p43, %p44
      %p46 = scmp.ne.s32.totalorder %s38, %s41
      %p47 = scmp.eq.s32.totalorder %s28, 0
      %p48 = por %p46, %p47
      %p49 = scmp.ne.s32.totalorder %s38, %s41
      %p50 = scmp.eq.s32.totalorder %s33, 1
      %p51 = por %p49, %p50
      %p52 = scmp.ne.s32.totalorder %s41, %s42
      %p53 = scmp.eq.s32.totalorder %s33, 0
      %p54 = por %p52, %p53
      %p55 = scmp.ne.s32.totalorder %s41, %s42
      %p56 = scmp.eq.s32.totalorder %s34, 1
      %p57 = por %p55, %p56
      %p59 = scmp.ne.s32.totalorder %s42, %s58
      %p60 = scmp.eq.s32.totalorder %s34, 0
      %p61 = por %p59, %p60
      %s63 = sadd.s32 %s62, 1
      %p66 = scmp.eq.s32.totalorder %s28, 1
      %p67 = scmp.ne.s32.totalorder %s62, %s64
      %p68 = scmp.eq.s32.totalorder %s28, 0
      %p69 = por %p67, %p68
      %p70 = scmp.ne.s32.totalorder %s62, %s64
      %p71 = scmp.eq.s32.totalorder %s33, 1
      %p72 = por %p70, %p71
      %p73 = scmp.ne.s32.totalorder %s64, %s65
      %p74 = scmp.eq.s32.totalorder %s33, 0
      %p75 = por %p73, %p74
      %p76 = scmp.ne.s32.totalorder %s64, %s65
      %p77 = scmp.eq.s32.totalorder %s34, 1
      %p78 = por %p76, %p77
      %p80 = scmp.ne.s32.totalorder %s65, %s79
      %p81 = scmp.eq.s32.totalorder %s34, 0
      %p82 = por %p80, %p81
      %s83 = ssub.s32 %s28, %s35
      %p84 = scmp.eq.s32.totalorder %s83, 0
      %s86 = sadd.s32 %s85, 1
      %s87 = scalar_select %p84, %s85, %s86
      %p90 = pneg %p84
      %p91 = scmp.eq.s32.totalorder %s28, 1
      %p92 = por %p90, %p91
      %p93 = scmp.ne.s32.totalorder %s85, %s88
      %p94 = scmp.eq.s32.totalorder %s28, 0
      %p95 = por %p93, %p94
      %p96 = scmp.ne.s32.totalorder %s85, %s88
      %p97 = scmp.eq.s32.totalorder %s33, 1
      %p98 = por %p96, %p97
      %p99 = scmp.ne.s32.totalorder %s88, %s89
      %p100 = scmp.eq.s32.totalorder %s33, 0
      %p101 = por %p99, %p100
      %p102 = scmp.ne.s32.totalorder %s88, %s89
      %p103 = scmp.eq.s32.totalorder %s34, 1
      %p104 = por %p102, %p103
      %p106 = scmp.ne.s32.totalorder %s89, %s105
      %p107 = scmp.eq.s32.totalorder %s34, 0
      %p108 = por %p106, %p107
      %s110 = sadd.s32 %s109, 1
      %p113 = scmp.eq.s32.totalorder %s28, 1
      %p114 = scmp.ne.s32.totalorder %s109, %s111
      %p115 = scmp.eq.s32.totalorder %s28, 0
      %p116 = por %p114, %p115
      %p117 = scmp.ne.s32.totalorder %s109, %s111
      %p118 = scmp.eq.s32.totalorder %s33, 1
      %p119 = por %p117, %p118
      %p120 = scmp.ne.s32.totalorder %s111, %s112
      %p121 = scmp.eq.s32.totalorder %s33, 0
      %p122 = por %p120, %p121
      %p123 = scmp.ne.s32.totalorder %s111, %s112
      %p124 = scmp.eq.s32.totalorder %s34, 1
      %p125 = por %p123, %p124
      %p127 = scmp.ne.s32.totalorder %s112, %s126
      %p128 = scmp.eq.s32.totalorder %s34, 0
      %p129 = por %p127, %p128
      %s131 = sadd.s32 %s130, 1
      %p134 = scmp.eq.s32.totalorder %s28, 1
      %p135 = scmp.ne.s32.totalorder %s130, %s132
      %p136 = scmp.eq.s32.totalorder %s28, 0
      %p137 = por %p135, %p136
      %p138 = scmp.ne.s32.totalorder %s130, %s132
      %p139 = scmp.eq.s32.totalorder %s33, 1
      %p140 = por %p138, %p139
      %p141 = scmp.ne.s32.totalorder %s132, %s133
      %p142 = scmp.eq.s32.totalorder %s33, 0
      %p143 = por %p141, %p142
      %p144 = scmp.ne.s32.totalorder %s132, %s133
      %p145 = scmp.eq.s32.totalorder %s34, 1
      %p146 = por %p144, %p145
      %p148 = scmp.ne.s32.totalorder %s133, %s147
      %p149 = scmp.eq.s32.totalorder %s34, 0
      %p150 = por %p148, %p149
      %s152 = sadd.s32 %s151, 1
      %p155 = scmp.eq.s32.totalorder %s28, 1
      %p156 = scmp.ne.s32.totalorder %s151, %s153
      %p157 = scmp.eq.s32.totalorder %s28, 0
      %p158 = por %p156, %p157
      %p159 = scmp.ne.s32.totalorder %s151, %s153
      %p160 = scmp.eq.s32.totalorder %s33, 1
      %p161 = por %p159, %p160
      %p162 = scmp.ne.s32.totalorder %s153, %s154
      %p163 = scmp.eq.s32.totalorder %s33, 0
      %p164 = por %p162, %p163
      %p165 = scmp.ne.s32.totalorder %s153, %s154
      %p166 = scmp.eq.s32.totalorder %s34, 1
      %p167 = por %p165, %p166
      %p169 = scmp.ne.s32.totalorder %s154, %s168
      %p170 = scmp.eq.s32.totalorder %s34, 0
      %p171 = por %p169, %p170
      %s173 = sadd.s32 %s172, 1
      %p176 = scmp.eq.s32.totalorder %s28, 1
      %p177 = scmp.ne.s32.totalorder %s172, %s174
      %p178 = scmp.eq.s32.totalorder %s28, 0
      %p179 = por %p177, %p178
      %p180 = scmp.ne.s32.totalorder %s172, %s174
      %p181 = scmp.eq.s32.totalorder %s33, 1
      %p182 = por %p180, %p181
      %p183 = scmp.ne.s32.totalorder %s174, %s175
      %p184 = scmp.eq.s32.totalorder %s33, 0
      %p185 = por %p183, %p184
      %p186 = scmp.ne.s32.totalorder %s174, %s175
      %p187 = scmp.eq.s32.totalorder %s34, 1
      %p188 = por %p186, %p187
      %p190 = scmp.ne.s32.totalorder %s175, %s189
      %p191 = scmp.eq.s32.totalorder %s34, 0
      %p192 = por %p190, %p191
      %s194 = sadd.s32 %s193, 1
      %p197 = scmp.eq.s32.totalorder %s28, 1
      %p198 = scmp.ne.s32.totalorder %s193, %s195
      %p199 = scmp.eq.s32.totalorder %s28, 0
      %p200 = por %p198, %p199
      %p201 = scmp.ne.s32.totalorder %s193, %s195
      %p202 = scmp.eq.s32.totalorder %s33, 1
      %p203 = por %p201, %p202
      %p204 = scmp.ne.s32.totalorder %s195, %s196
      %p205 = scmp.eq.s32.totalorder %s33, 0
      %p206 = por %p204, %p205
      %p207 = scmp.ne.s32.totalorder %s195, %s196
      %p208 = scmp.eq.s32.totalorder %s34, 1
      %p209 = por %p207, %p208
      %p211 = scmp.ne.s32.totalorder %s196, %s210
      %p212 = scmp.eq.s32.totalorder %s34, 0
      %p213 = por %p211, %p212
      %s215 = sadd.s32 %s214, 1
      %p218 = scmp.eq.s32.totalorder %s28, 1
      %p219 = scmp.ne.s32.totalorder %s214, %s216
      %p220 = scmp.eq.s32.totalorder %s28, 0
      %p221 = por %p219, %p220
      %p222 = scmp.ne.s32.totalorder %s214, %s216
      %p223 = scmp.eq.s32.totalorder %s33, 1
      %p224 = por %p222, %p223
      %p225 = scmp.ne.s32.totalorder %s216, %s217
      %p226 = scmp.eq.s32.totalorder %s33, 0
      %p227 = por %p225, %p226
      %p228 = scmp.ne.s32.totalorder %s216, %s217
      %p229 = scmp.eq.s32.totalorder %s34, 1
      %p230 = por %p228, %p229
      %p232 = scmp.ne.s32.totalorder %s217, %s231
      %p233 = scmp.eq.s32.totalorder %s34, 0
      %p234 = por %p232, %p233
      %s236 = sadd.s32 %s235, 1
      %p239 = scmp.eq.s32.totalorder %s28, 1
      %p240 = scmp.ne.s32.totalorder %s235, %s237
      %p241 = scmp.eq.s32.totalorder %s28, 0
      %p242 = por %p240, %p241
      %p243 = scmp.ne.s32.totalorder %s235, %s237
      %p244 = scmp.eq.s32.totalorder %s33, 1
      %p245 = por %p243, %p244
      %p246 = scmp.ne.s32.totalorder %s237, %s238
      %p247 = scmp.eq.s32.totalorder %s33, 0
      %p248 = por %p246, %p247
      %p249 = scmp.ne.s32.totalorder %s237, %s238
      %p250 = scmp.eq.s32.totalorder %s34, 1
      %p251 = por %p249, %p250
      %p253 = scmp.ne.s32.totalorder %s238, %s252
      %p254 = scmp.eq.s32.totalorder %s34, 0
      %p255 = por %p253, %p254
      %s257 = sadd.s32 %s256, 1
      %p260 = scmp.eq.s32.totalorder %s28, 1
      %p261 = scmp.ne.s32.totalorder %s256, %s258
      %p262 = scmp.eq.s32.totalorder %s28, 0
      %p263 = por %p261, %p262
      %p264 = scmp.ne.s32.totalorder %s256, %s258
      %p265 = scmp.eq.s32.totalorder %s33, 1
      %p266 = por %p264, %p265
      %p267 = scmp.ne.s32.totalorder %s258, %s259
      %p268 = scmp.eq.s32.totalorder %s33, 0
      %p269 = por %p267, %p268
      %p270 = scmp.ne.s32.totalorder %s258, %s259
      %p271 = scmp.eq.s32.totalorder %s34, 1
      %p272 = por %p270, %p271
      %p274 = scmp.ne.s32.totalorder %s259, %s273
      %p275 = scmp.eq.s32.totalorder %s34, 0
      %p276 = por %p274, %p275
      %s278 = sadd.s32 %s277, 1
      %p281 = scmp.eq.s32.totalorder %s28, 1
      %p282 = scmp.ne.s32.totalorder %s277, %s279
      %p283 = scmp.eq.s32.totalorder %s28, 0
      %p284 = por %p282, %p283
      %p285 = scmp.ne.s32.totalorder %s277, %s279
      %p286 = scmp.eq.s32.totalorder %s33, 1
      %p287 = por %p285, %p286
      %p288 = scmp.ne.s32.totalorder %s279, %s280
      %p289 = scmp.eq.s32.totalorder %s33, 0
      %p290 = por %p288, %p289
      %p291 = scmp.ne.s32.totalorder %s279, %s280
      %p292 = scmp.eq.s32.totalorder %s34, 1
      %p293 = por %p291, %p292
      %p295 = scmp.ne.s32.totalorder %s280, %s294
      %p296 = scmp.eq.s32.totalorder %s34, 0
      %p297 = por %p295, %p296
      %s299 = sadd.s32 %s298, 1
      %p302 = scmp.eq.s32.totalorder %s28, 1
      %p303 = scmp.ne.s32.totalorder %s298, %s300
      %p304 = scmp.eq.s32.totalorder %s28, 0
      %p305 = por %p303, %p304
      %p306 = scmp.ne.s32.totalorder %s298, %s300
      %p307 = scmp.eq.s32.totalorder %s33, 1
      %p308 = por %p306, %p307
      %p309 = scmp.ne.s32.totalorder %s300, %s301
      %p310 = scmp.eq.s32.totalorder %s33, 0
      %p311 = por %p309, %p310
      %p312 = scmp.ne.s32.totalorder %s300, %s301
      %p313 = scmp.eq.s32.totalorder %s34, 1
      %p314 = por %p312, %p313
      %p316 = scmp.ne.s32.totalorder %s301, %s315
      %p317 = scmp.eq.s32.totalorder %s34, 0
      %p318 = por %p316, %p317
      %s320 = sadd.s32 %s319, 1
      %p323 = scmp.eq.s32.totalorder %s28, 1
      %p324 = scmp.ne.s32.totalorder %s319, %s321
      %p325 = scmp.eq.s32.totalorder %s28, 0
      %p326 = por %p324, %p325
      %p327 = scmp.ne.s32.totalorder %s319, %s321
      %p328 = scmp.eq.s32.totalorder %s33, 1
      %p329 = por %p327, %p328
      %p330 = scmp.ne.s32.totalorder %s321, %s322
      %p331 = scmp.eq.s32.totalorder %s33, 0
      %p332 = por %p330, %p331
      %p333 = scmp.ne.s32.totalorder %s321, %s322
      %p334 = scmp.eq.s32.totalorder %s34, 1
      %p335 = por %p333, %p334
      %p337 = scmp.ne.s32.totalorder %s322, %s336
      %p338 = scmp.eq.s32.totalorder %s34, 0
      %p339 = por %p337, %p338
      %s341 = sadd.s32 %s340, 1
      %p344 = scmp.eq.s32.totalorder %s28, 1
      %p345 = scmp.ne.s32.totalorder %s340, %s342
      %p346 = scmp.eq.s32.totalorder %s28, 0
      %p347 = por %p345, %p346
      %p348 = scmp.ne.s32.totalorder %s340, %s342
      %p349 = scmp.eq.s32.totalorder %s33, 1
      %p350 = por %p348, %p349
      %p351 = scmp.ne.s32.totalorder %s342, %s343
      %p352 = scmp.eq.s32.totalorder %s33, 0
      %p353 = por %p351, %p352
      %p354 = scmp.ne.s32.totalorder %s342, %s343
      %p355 = scmp.eq.s32.totalorder %s34, 1
      %p356 = por %p354, %p355
      %p358 = scmp.ne.s32.totalorder %s343, %s357
      %p359 = scmp.eq.s32.totalorder %s34, 0
      %p360 = por %p358, %p359
      %s362 = sadd.s32 %s361, 1
      %p365 = scmp.eq.s32.totalorder %s28, 1
      %p366 = scmp.ne.s32.totalorder %s361, %s363
      %p367 = scmp.eq.s32.totalorder %s28, 0
      %p368 = por %p366, %p367
      %p369 = scmp.ne.s32.totalorder %s361, %s363
      %p370 = scmp.eq.s32.totalorder %s33, 1
      %p371 = por %p369, %p370
      %p372 = scmp.ne.s32.totalorder %s363, %s364
      %p373 = scmp.eq.s32.totalorder %s33, 0
      %p374 = por %p372, %p373
      %p375 = scmp.ne.s32.totalorder %s363, %s364
      %p376 = scmp.eq.s32.totalorder %s34, 1
      %p377 = por %p375, %p376
      %p379 = scmp.ne.s32.totalorder %s364, %s378
      %p380 = scmp.eq.s32.totalorder %s34, 0
      %p381 = por %p379, %p380
      %s383 = sadd.s32 %s382, 1
      %p386 = scmp.eq.s32.totalorder %s28, 1
      %p387 = scmp.ne.s32.totalorder %s382, %s384
      %p388 = scmp.eq.s32.totalorder %s28, 0
      %p389 = por %p387, %p388
      %p390 = scmp.ne.s32.totalorder %s382, %s384
      %p391 = scmp.eq.s32.totalorder %s33, 1
      %p392 = por %p390, %p391
      %p393 = scmp.ne.s32.totalorder %s384, %s385
      %p394 = scmp.eq.s32.totalorder %s33, 0
      %p395 = por %p393, %p394
      %p396 = scmp.ne.s32.totalorder %s384, %s385
      %p397 = scmp.eq.s32.totalorder %s34, 1
      %p398 = por %p396, %p397
      %p400 = scmp.ne.s32.totalorder %s385, %s399
      %p401 = scmp.eq.s32.totalorder %s34, 0
      %p402 = por %p400, %p401
      %s403 = ssub.s32 %s28, %s35
      %p404 = scmp.eq.s32.totalorder %s403, 0
      %s406 = sadd.s32 %s405, 1
      %s407 = scalar_select %p404, %s405, %s406
      %p410 = pneg %p404
      %p411 = scmp.eq.s32.totalorder %s28, 1
      %p412 = por %p410, %p411
      %p413 = scmp.ne.s32.totalorder %s405, %s408
      %p414 = scmp.eq.s32.totalorder %s28, 0
      %p415 = por %p413, %p414
      %p416 = scmp.ne.s32.totalorder %s405, %s408
      %p417 = scmp.eq.s32.totalorder %s33, 1
      %p418 = por %p416, %p417
      %p419 = scmp.ne.s32.totalorder %s408, %s409
      %p420 = scmp.eq.s32.totalorder %s33, 0
      %p421 = por %p419, %p420
      %p422 = scmp.ne.s32.totalorder %s408, %s409
      %p423 = scmp.eq.s32.totalorder %s34, 1
      %p424 = por %p422, %p423
      %p426 = scmp.ne.s32.totalorder %s409, %s425
      %p427 = scmp.eq.s32.totalorder %s34, 0
      %p428 = por %p426, %p427
      %p429 = scmp.le.s32.totalorder 1, %s28
      %p430 = scmp.lt.s32.totalorder %s28, 3
      %p431 = pnand %p429, %p430
      %p432 = pneg %p431
      // Predicated region
      $region9: #{multi_level_encoder_box_forward.4} parent=5 // pred_check
        _
      $region10: #{multi_level_encoder_box_forward.4} parent=5 // pred_check_branch
        %434 = sbr.rel (%p431) target = $region12
      $region11: #{multi_level_encoder_box_forward.4} parent=5 // pred_region
        %s435 = ssub.s32 %s28, 1
        // Predicated region
        $region13: #{multi_level_encoder_box_forward.4} parent=11 // pred_check
          %p436 = pneg %p75
        $region14: #{multi_level_encoder_box_forward.4} parent=11 // pred_check_branch
          %438 = sbr.rel (%p436) target = $region16
        $region15: #{multi_level_encoder_box_forward.4} parent=11 // pred_region
          _
        $region16: #{multi_level_encoder_box_forward.4} parent=11 // pred_fallthru
          _
        // Predicated region
        $region17: #{multi_level_encoder_box_forward.4} parent=11 // pred_check
          %p439 = pneg %p122
        $region18: #{multi_level_encoder_box_forward.4} parent=11 // pred_check_branch
          %441 = sbr.rel (%p439) target = $region20
        $region19: #{multi_level_encoder_box_forward.4} parent=11 // pred_region
          _
        $region20: #{multi_level_encoder_box_forward.4} parent=11 // pred_fallthru
          _
        // Predicated region
        $region21: #{multi_level_encoder_box_forward.4} parent=11 // pred_check
          %p442 = pneg %p143
        $region22: #{multi_level_encoder_box_forward.4} parent=11 // pred_check_branch
          %444 = sbr.rel (%p442) target = $region24
        $region23: #{multi_level_encoder_box_forward.4} parent=11 // pred_region
          %s446 = ssub.s32 16, 16
          %447 = vsyncadd [#allocation3], %s446
          %s449 = sshll.u32 [#allocation2], 4
          %s450 = int_to_ptr.vmem [resolvable:$true] %s449
          %452 = dma.hbm_to_vmem [thread:$0]  %s4, 16, %s450, [#allocation3]
        $region24: #{multi_level_encoder_box_forward.4} parent=11 // pred_fallthru
          _
        // Predicated region
        $region25: #{multi_level_encoder_box_forward.4} parent=11 // pred_check
          %p453 = pneg %p164
        $region26: #{multi_level_encoder_box_forward.4} parent=11 // pred_check_branch
          %455 = sbr.rel (%p453) target = $region28
        $region27: #{multi_level_encoder_box_forward.4} parent=11 // pred_region
          _
        $region28: #{multi_level_encoder_box_forward.4} parent=11 // pred_fallthru
          _
        // Predicated region
        $region29: #{multi_level_encoder_box_forward.4} parent=11 // pred_check
          %p456 = pneg %p185
        $region30: #{multi_level_encoder_box_forward.4} parent=11 // pred_check_branch
          %458 = sbr.rel (%p456) target = $region32
        $region31: #{multi_level_encoder_box_forward.4} parent=11 // pred_region
          %s460 = ssub.s32 16, 16
          %461 = vsyncadd [#allocation5], %s460
          %s463 = sshll.u32 [#allocation4], 4
          %s464 = int_to_ptr.vmem [resolvable:$true] %s463
          %466 = dma.hbm_to_vmem [thread:$0]  %s6, 16, %s464, [#allocation5]
        $region32: #{multi_level_encoder_box_forward.4} parent=11 // pred_fallthru
          _
        // Predicated region
        $region33: #{multi_level_encoder_box_forward.4} parent=11 // pred_check
          %p467 = pneg %p206
        $region34: #{multi_level_encoder_box_forward.4} parent=11 // pred_check_branch
          %469 = sbr.rel (%p467) target = $region36
        $region35: #{multi_level_encoder_box_forward.4} parent=11 // pred_region
          _
        $region36: #{multi_level_encoder_box_forward.4} parent=11 // pred_fallthru
          _
        // Predicated region
        $region37: #{multi_level_encoder_box_forward.4} parent=11 // pred_check
          %p470 = pneg %p227
        $region38: #{multi_level_encoder_box_forward.4} parent=11 // pred_check_branch
          %472 = sbr.rel (%p470) target = $region40
        $region39: #{multi_level_encoder_box_forward.4} parent=11 // pred_region
          %s474 = ssub.s32 16, 16
          %475 = vsyncadd [#allocation5], %s474
          %s477 = sshll.u32 [#allocation6], 4
          %s478 = int_to_ptr.vmem [resolvable:$true] %s477
          %480 = dma.hbm_to_vmem [thread:$0]  %s8, 16, %s478, [#allocation5]
        $region40: #{multi_level_encoder_box_forward.4} parent=11 // pred_fallthru
          _
        // Predicated region
        $region41: #{multi_level_encoder_box_forward.4} parent=11 // pred_check
          %p481 = pneg %p248
        $region42: #{multi_level_encoder_box_forward.4} parent=11 // pred_check_branch
          %483 = sbr.rel (%p481) target = $region44
        $region43: #{multi_level_encoder_box_forward.4} parent=11 // pred_region
          %s485 = ssub.s32 16, 16
          %486 = vsyncadd [#allocation8], %s485
          %s488 = sshll.u32 [#allocation7], 4
          %s489 = int_to_ptr.vmem [resolvable:$true] %s488
          %491 = dma.hbm_to_vmem [thread:$0]  %s9, 16, %s489, [#allocation8]
        $region44: #{multi_level_encoder_box_forward.4} parent=11 // pred_fallthru
          _
        // Predicated region
        $region45: #{multi_level_encoder_box_forward.4} parent=11 // pred_check
          %p492 = pneg %p269
        $region46: #{multi_level_encoder_box_forward.4} parent=11 // pred_check_branch
          %494 = sbr.rel (%p492) target = $region48
        $region47: #{multi_level_encoder_box_forward.4} parent=11 // pred_region
          %s496 = ssub.s32 16, 16
          %497 = vsyncadd [#allocation8], %s496
          %s499 = sshll.u32 [#allocation9], 4
          %s500 = int_to_ptr.vmem [resolvable:$true] %s499
          %502 = dma.hbm_to_vmem [thread:$0]  %s10, 16, %s500, [#allocation8]
        $region48: #{multi_level_encoder_box_forward.4} parent=11 // pred_fallthru
          _
        // Predicated region
        $region49: #{multi_level_encoder_box_forward.4} parent=11 // pred_check
          %p503 = pneg %p290
        $region50: #{multi_level_encoder_box_forward.4} parent=11 // pred_check_branch
          %505 = sbr.rel (%p503) target = $region52
        $region51: #{multi_level_encoder_box_forward.4} parent=11 // pred_region
          _
        $region52: #{multi_level_encoder_box_forward.4} parent=11 // pred_fallthru
          _
        // Predicated region
        $region53: #{multi_level_encoder_box_forward.4} parent=11 // pred_check
          %p506 = pneg %p311
        $region54: #{multi_level_encoder_box_forward.4} parent=11 // pred_check_branch
          %508 = sbr.rel (%p506) target = $region56
        $region55: #{multi_level_encoder_box_forward.4} parent=11 // pred_region
          %s510 = ssub.s32 16, 16
          %511 = vsyncadd [#allocation11], %s510
          %s513 = sshll.u32 [#allocation10], 4
          %s514 = int_to_ptr.vmem [resolvable:$true] %s513
          %516 = dma.hbm_to_vmem [thread:$0]  %s12, 16, %s514, [#allocation11]
        $region56: #{multi_level_encoder_box_forward.4} parent=11 // pred_fallthru
          _
        // Predicated region
        $region57: #{multi_level_encoder_box_forward.4} parent=11 // pred_check
          %p517 = pneg %p332
        $region58: #{multi_level_encoder_box_forward.4} parent=11 // pred_check_branch
          %519 = sbr.rel (%p517) target = $region60
        $region59: #{multi_level_encoder_box_forward.4} parent=11 // pred_region
          _
        $region60: #{multi_level_encoder_box_forward.4} parent=11 // pred_fallthru
          _
        // Predicated region
        $region61: #{multi_level_encoder_box_forward.4} parent=11 // pred_check
          %p520 = pneg %p353
        $region62: #{multi_level_encoder_box_forward.4} parent=11 // pred_check_branch
          %522 = sbr.rel (%p520) target = $region64
        $region63: #{multi_level_encoder_box_forward.4} parent=11 // pred_region
          %s524 = ssub.s32 16, 16
          %525 = vsyncadd [#allocation11], %s524
          %s527 = sshll.u32 [#allocation12], 4
          %s528 = int_to_ptr.vmem [resolvable:$true] %s527
          %530 = dma.hbm_to_vmem [thread:$0]  %s14, 16, %s528, [#allocation11]
        $region64: #{multi_level_encoder_box_forward.4} parent=11 // pred_fallthru
          _
        // Predicated region
        $region65: #{multi_level_encoder_box_forward.4} parent=11 // pred_check
          %p531 = pneg %p374
        $region66: #{multi_level_encoder_box_forward.4} parent=11 // pred_check_branch
          %533 = sbr.rel (%p531) target = $region68
        $region67: #{multi_level_encoder_box_forward.4} parent=11 // pred_region
          %s535 = ssub.s32 16, 16
          %536 = vsyncadd [#allocation14], %s535
          %s538 = sshll.u32 [#allocation13], 4
          %s539 = int_to_ptr.vmem [resolvable:$true] %s538
          %541 = dma.hbm_to_vmem [thread:$0]  %s15, 16, %s539, [#allocation14]
        $region68: #{multi_level_encoder_box_forward.4} parent=11 // pred_fallthru
          _
        // Predicated region
        $region69: #{multi_level_encoder_box_forward.4} parent=11 // pred_check
          %p542 = pneg %p395
        $region70: #{multi_level_encoder_box_forward.4} parent=11 // pred_check_branch
          %544 = sbr.rel (%p542) target = $region72
        $region71: #{multi_level_encoder_box_forward.4} parent=11 // pred_region
          %s546 = ssub.s32 16, 16
          %547 = vsyncadd [#allocation14], %s546
          %s549 = sshll.u32 [#allocation15], 4
          %s550 = int_to_ptr.vmem [resolvable:$true] %s549
          %552 = dma.hbm_to_vmem [thread:$0]  %s16, 16, %s550, [#allocation14]
        $region72: #{multi_level_encoder_box_forward.4} parent=11 // pred_fallthru
          _
      $region12: #{multi_level_encoder_box_forward.4} parent=5 // pred_fallthru
        _
      %p553 = scmp.lt.s32.totalorder %s28, 2
      // Predicated region
      $region73: #{multi_level_encoder_box_forward.4} parent=5 // pred_check
        %p554 = pneg %p553
      $region74: #{multi_level_encoder_box_forward.4} parent=5 // pred_check_branch
        %556 = sbr.rel (%p554) target = $region76
      $region75: #{multi_level_encoder_box_forward.4} parent=5 // pred_region
        // Predicated region
        $region77: #{multi_level_encoder_box_forward.4} parent=75 // pred_check
          %p557 = pneg %p48
        $region78: #{multi_level_encoder_box_forward.4} parent=75 // pred_check_branch
          %559 = sbr.rel (%p557) target = $region80
        $region79: #{multi_level_encoder_box_forward.4} parent=75 // pred_region
          %p560 = scmp.lt.s32.totalorder %s28, 1
          %s561 = scalar_select %p560, %s28, 1
          %s562 = smul.addr %s561, 8
          %s563 = scalar_lea.vmem %s0, %s562
        $region80: #{multi_level_encoder_box_forward.4} parent=75 // pred_fallthru
          _
        // Predicated region
        $region81: #{multi_level_encoder_box_forward.4} parent=75 // pred_check
          %p564 = pneg %p95
        $region82: #{multi_level_encoder_box_forward.4} parent=75 // pred_check_branch
          %566 = sbr.rel (%p564) target = $region84
        $region83: #{multi_level_encoder_box_forward.4} parent=75 // pred_region
          %p567 = scmp.lt.s32.totalorder %s28, 1
          %s568 = scalar_select %p567, %s28, 1
          %s569 = scalar_lea.vmem %s2, %s568
        $region84: #{multi_level_encoder_box_forward.4} parent=75 // pred_fallthru
          _
      $region76: #{multi_level_encoder_box_forward.4} parent=5 // pred_fallthru
        _
      %p570 = scmp.le.s32.totalorder 1, %s28
      %p571 = scmp.lt.s32.totalorder %s28, 3
      %p572 = pnand %p570, %p571
      %p573 = pneg %p572
      // Predicated region
      $region85: #{multi_level_encoder_box_forward.4} parent=5 // pred_check
        _
      $region86: #{multi_level_encoder_box_forward.4} parent=5 // pred_check_branch
        %575 = sbr.rel (%p572) target = $region88
      $region87: #{multi_level_encoder_box_forward.4} parent=5 // pred_region
        %s576 = ssub.s32 %s28, 1
        // Predicated region
        $region89: #{multi_level_encoder_box_forward.4} parent=87 // pred_check
          %p577 = pneg %p143
        $region90: #{multi_level_encoder_box_forward.4} parent=87 // pred_check_branch
          %579 = sbr.rel (%p577) target = $region92
        $region91: #{multi_level_encoder_box_forward.4} parent=87 // pred_region
          %580 = dma.done [#allocation3], 16
        $region92: #{multi_level_encoder_box_forward.4} parent=87 // pred_fallthru
          _
        // Predicated region
        $region93: #{multi_level_encoder_box_forward.4} parent=87 // pred_check
          %p581 = pneg %p185
        $region94: #{multi_level_encoder_box_forward.4} parent=87 // pred_check_branch
          %583 = sbr.rel (%p581) target = $region96
        $region95: #{multi_level_encoder_box_forward.4} parent=87 // pred_region
          %584 = dma.done [#allocation5], 16
        $region96: #{multi_level_encoder_box_forward.4} parent=87 // pred_fallthru
          _
        // Predicated region
        $region97: #{multi_level_encoder_box_forward.4} parent=87 // pred_check
          %p585 = pneg %p227
        $region98: #{multi_level_encoder_box_forward.4} parent=87 // pred_check_branch
          %587 = sbr.rel (%p585) target = $region100
        $region99: #{multi_level_encoder_box_forward.4} parent=87 // pred_region
          %588 = dma.done [#allocation5], 16
        $region100: #{multi_level_encoder_box_forward.4} parent=87 // pred_fallthru
          _
        // Predicated region
        $region101: #{multi_level_encoder_box_forward.4} parent=87 // pred_check
          %p589 = pneg %p248
        $region102: #{multi_level_encoder_box_forward.4} parent=87 // pred_check_branch
          %591 = sbr.rel (%p589) target = $region104
        $region103: #{multi_level_encoder_box_forward.4} parent=87 // pred_region
          %592 = dma.done [#allocation8], 16
        $region104: #{multi_level_encoder_box_forward.4} parent=87 // pred_fallthru
          _
        // Predicated region
        $region105: #{multi_level_encoder_box_forward.4} parent=87 // pred_check
          %p593 = pneg %p269
        $region106: #{multi_level_encoder_box_forward.4} parent=87 // pred_check_branch
          %595 = sbr.rel (%p593) target = $region108
        $region107: #{multi_level_encoder_box_forward.4} parent=87 // pred_region
          %596 = dma.done [#allocation8], 16
        $region108: #{multi_level_encoder_box_forward.4} parent=87 // pred_fallthru
          _
        // Predicated region
        $region109: #{multi_level_encoder_box_forward.4} parent=87 // pred_check
          %p597 = pneg %p311
        $region110: #{multi_level_encoder_box_forward.4} parent=87 // pred_check_branch
          %599 = sbr.rel (%p597) target = $region112
        $region111: #{multi_level_encoder_box_forward.4} parent=87 // pred_region
          %600 = dma.done [#allocation11], 16
        $region112: #{multi_level_encoder_box_forward.4} parent=87 // pred_fallthru
          _
        // Predicated region
        $region113: #{multi_level_encoder_box_forward.4} parent=87 // pred_check
          %p601 = pneg %p353
        $region114: #{multi_level_encoder_box_forward.4} parent=87 // pred_check_branch
          %603 = sbr.rel (%p601) target = $region116
        $region115: #{multi_level_encoder_box_forward.4} parent=87 // pred_region
          %604 = dma.done [#allocation11], 16
        $region116: #{multi_level_encoder_box_forward.4} parent=87 // pred_fallthru
          _
        // Predicated region
        $region117: #{multi_level_encoder_box_forward.4} parent=87 // pred_check
          %p605 = pneg %p374
        $region118: #{multi_level_encoder_box_forward.4} parent=87 // pred_check_branch
          %607 = sbr.rel (%p605) target = $region120
        $region119: #{multi_level_encoder_box_forward.4} parent=87 // pred_region
          %608 = dma.done [#allocation14], 16
        $region120: #{multi_level_encoder_box_forward.4} parent=87 // pred_fallthru
          _
        // Predicated region
        $region121: #{multi_level_encoder_box_forward.4} parent=87 // pred_check
          %p609 = pneg %p395
        $region122: #{multi_level_encoder_box_forward.4} parent=87 // pred_check_branch
          %611 = sbr.rel (%p609) target = $region124
        $region123: #{multi_level_encoder_box_forward.4} parent=87 // pred_region
          %612 = dma.done [#allocation14], 16
        $region124: #{multi_level_encoder_box_forward.4} parent=87 // pred_fallthru
          _
        %p613 = scmp.lt.s32.totalorder %s33, 1
        %s614 = scalar_select %p613, %s33, 1
        %s615 = smul.addr %s614, 8
        %s616 = scalar_lea.vmem %s0, %s615
        %p617 = pneg %p54
        %p618 = pneg %p51
        %p619 = pneg %p75
        %p620 = pneg %p72
        %p621 = scmp.lt.s32.totalorder %s33, 1
        %s622 = scalar_select %p621, %s33, 1
        %s623 = scalar_lea.vmem %s2, %s622
        %p624 = pneg %p101
        %p625 = pneg %p98
        %p626 = pneg %p122
        %p627 = pneg %p119
        %p628 = pneg %p143
        %p629 = pneg %p140
        %p630 = pneg %p164
        %p631 = pneg %p161
        %p632 = pneg %p185
        %p633 = pneg %p182
        %p634 = pneg %p206
        %p635 = pneg %p203
        %p636 = pneg %p227
        %p637 = pneg %p224
        %p638 = pneg %p248
        %p639 = pneg %p245
        %p640 = pneg %p269
        %p641 = pneg %p266
        %p642 = pneg %p290
        %p643 = pneg %p287
        %p644 = pneg %p311
        %p645 = pneg %p308
        %p646 = pneg %p332
        %p647 = pneg %p329
        %p648 = pneg %p353
        %p649 = pneg %p350
        %p650 = pneg %p374
        %p651 = pneg %p371
        %p652 = pneg %p395
        %p653 = pneg %p392
        %p654 = pneg %p421
        %p655 = pneg %p418
        %p656 = scmp.lt.s32.totalorder %s33, 1
        %s657 = scalar_select %p656, %s33, 1
        %s658 = smul.addr %s657, 8
        %s659 = scalar_lea.vmem %s17, %s658
        %p660 = scmp.lt.s32.totalorder %s33, 1
        %s661 = scalar_select %p660, %s33, 1
        %s662 = smul.addr %s661, 8
        %s663 = scalar_lea.vmem %s0, %s662
        %p664 = scmp.lt.s32.totalorder %s33, 1
        %s665 = scalar_select %p664, %s33, 1
        %s666 = scalar_lea.vmem %s2, %s665
        %p667 = scmp.lt.s32.totalorder %s33, 1
        %s668 = scalar_select %p667, %s33, 1
        %s669 = smul.addr %s668, 8
        %s670 = scalar_lea.vmem %s17, %s669
        %v672 = vld [vmem:[%s663] sm:$0xff]
        %v673 = vld [vmem:[%s1] sm:$0xff]
        %v674 = vld [vmem:[%s666] sm:$0x1]
        %v675 = vadd.f32 %v672, %v673
        %v676 = vld [vmem:[%s3] sm:$0xff]
        %v677 = vld [vmem:[%s3 + $0x8] sm:$0xff]
        %v678 = vld [vmem:[%s3 + $0x10] sm:$0xff]
        %v679 = vld [vmem:[%s3 + $0x18] sm:$0xff]
        %v680 = vpack.c.bf16 %v675, %v675
        %v681 = vpack.c.bf16 %v677, %v676
        %v682 = vpack.c.bf16 %v679, %v678
        %v683 = vld [vmem:[#allocation2] sm:$0x1]
        %v685 = vlaneseq
        %v686 = vshrl.u32 %v685, 7
        %v687 = vsub.s32 0, %v686
        %v688 = vrot.slane %v683, %v687
        %vm690 = vcmask 261120
        %v692 = vsel %vm690, %v680, 0
        %694 = vmatprep.subr.bf16.mxu0 0
        %695 = vmatpush1.bf16.msra.mxu0 0
        %696 = vmatprep.subr.bf16.mxu0 0
        %697 = vmatpush1.bf16.msra.mxu0 0
        %698 = vmatprep.subr.bf16.mxu0 0
        %699 = vmatpush1.bf16.msra.mxu0 0
        %700 = vmatprep.subr.bf16.mxu0 0
        %701 = vmatpush1.bf16.msra.mxu0 0
        %702 = vmatprep.subr.bf16.mxu0 0
        %703 = vmatpush1.bf16.msra.mxu0 0
        %704 = vmatprep.subr.bf16.mxu0 0
        %705 = vmatpush1.bf16.msra.mxu0 0
        %706 = vmatprep.subr.bf16.mxu0 0
        %707 = vmatpush1.bf16.msra.mxu0 %v682
        %708 = vmatprep.subr.bf16.mxu0 0
        %709 = vmatpush1.bf16.msra.mxu0 %v681
        %710 = vmatprep.subr.bf16.mxu0 0
        %711 = vmatpush2.bf16.msra.mxu0 0
        %712 = vmatprep.subr.bf16.mxu0 0
        %713 = vmatpush2.bf16.msra.mxu0 0
        %714 = vmatprep.subr.bf16.mxu0 0
        %715 = vmatpush2.bf16.msra.mxu0 0
        %716 = vmatprep.subr.bf16.mxu0 0
        %717 = vmatpush2.bf16.msra.mxu0 0
        %718 = vmatprep.subr.bf16.mxu0 0
        %719 = vmatpush2.bf16.msra.mxu0 0
        %720 = vmatprep.subr.bf16.mxu0 0
        %721 = vmatpush2.bf16.msra.mxu0 0
        %722 = vmatprep.subr.bf16.mxu0 0
        %723 = vmatpush2.bf16.msra.mxu0 0
        %724 = vmatprep.subr.bf16.mxu0 0
        %725 = vmatpush2.bf16.msra.mxu0 0
        %726 = vmatprep.mubr.bf16.mxu0 0
        %727 = vmatmul.mubr.bf16.gmra.mxu0 %v692
        %v728 = vpop.f32.mrf.mxu0
        %v729 = vadd.f32 %v688, %v728
        %v730 = vpop.f32.mrf.mxu0
        %v731 = vpop.f32.mrf.mxu0
        %v732 = vpop.f32.mrf.mxu0
        %733 = vdwg.mxu0
        %v734 = vld [vmem:[%s5] sm:$0xff]
        %v735 = vld [vmem:[%s5 + $0x8] sm:$0xff]
        %v736 = vld [vmem:[%s5 + $0x10] sm:$0xff]
        %v737 = vld [vmem:[%s5 + $0x18] sm:$0xff]
        %v738 = vpack.c.bf16 %v672, %v672
        %v739 = vpack.c.bf16 %v735, %v734
        %v740 = vpack.c.bf16 %v737, %v736
        %v741 = vld [vmem:[#allocation4] sm:$0x1]
        %v743 = vlaneseq
        %v744 = vshrl.u32 %v743, 7
        %v745 = vsub.s32 0, %v744
        %v746 = vrot.slane %v741, %v745
        %v749 = vsel %vm690, %v738, 0
        %751 = vmatprep.subr.bf16.mxu0 0
        %752 = vmatpush1.bf16.msra.mxu0 0
        %753 = vmatprep.subr.bf16.mxu0 0
        %754 = vmatpush1.bf16.msra.mxu0 0
        %755 = vmatprep.subr.bf16.mxu0 0
        %756 = vmatpush1.bf16.msra.mxu0 0
        %757 = vmatprep.subr.bf16.mxu0 0
        %758 = vmatpush1.bf16.msra.mxu0 0
        %759 = vmatprep.subr.bf16.mxu0 0
        %760 = vmatpush1.bf16.msra.mxu0 0
        %761 = vmatprep.subr.bf16.mxu0 0
        %762 = vmatpush1.bf16.msra.mxu0 0
        %763 = vmatprep.subr.bf16.mxu0 0
        %764 = vmatpush1.bf16.msra.mxu0 %v740
        %765 = vmatprep.subr.bf16.mxu0 0
        %766 = vmatpush1.bf16.msra.mxu0 %v739
        %767 = vmatprep.subr.bf16.mxu0 0
        %768 = vmatpush2.bf16.msra.mxu0 0
        %769 = vmatprep.subr.bf16.mxu0 0
        %770 = vmatpush2.bf16.msra.mxu0 0
        %771 = vmatprep.subr.bf16.mxu0 0
        %772 = vmatpush2.bf16.msra.mxu0 0
        %773 = vmatprep.subr.bf16.mxu0 0
        %774 = vmatpush2.bf16.msra.mxu0 0
        %775 = vmatprep.subr.bf16.mxu0 0
        %776 = vmatpush2.bf16.msra.mxu0 0
        %777 = vmatprep.subr.bf16.mxu0 0
        %778 = vmatpush2.bf16.msra.mxu0 0
        %779 = vmatprep.subr.bf16.mxu0 0
        %780 = vmatpush2.bf16.msra.mxu0 0
        %781 = vmatprep.subr.bf16.mxu0 0
        %782 = vmatpush2.bf16.msra.mxu0 0
        %783 = vmatprep.mubr.bf16.mxu0 0
        %784 = vmatmul.mubr.bf16.gmra.mxu0 %v749
        %v785 = vpop.f32.mrf.mxu0
        %v786 = vadd.f32 %v746, %v785
        %v787 = vpop.f32.mrf.mxu0
        %v788 = vpop.f32.mrf.mxu0
        %v789 = vpop.f32.mrf.mxu0
        %790 = vdwg.mxu0
        %v791 = vpack.c.bf16 %v729, %v729
        %793 = vrot.lane.b32.xlu0 %v791, 96
        %v794 = vpop.permute.xlu0 %793
        %vm795 = vcmask 64512
        %v797 = vsel %vm795, %v791, 0
        %v800 = vsel %vm795, %v794, 0
        %802 = vmatprep.subr.bf16.mxu0 0
        %803 = vmatpush1.bf16.xpose.msra.mxu0 0
        %804 = vmatprep.subr.bf16.mxu0 0
        %805 = vmatpush1.bf16.xpose.msra.mxu0 0
        %806 = vmatprep.subr.bf16.mxu0 0
        %807 = vmatpush1.bf16.xpose.msra.mxu0 0
        %808 = vmatprep.subr.bf16.mxu0 0
        %809 = vmatpush1.bf16.xpose.msra.mxu0 0
        %810 = vmatprep.subr.bf16.mxu0 0
        %811 = vmatpush1.bf16.xpose.msra.mxu0 0
        %812 = vmatprep.subr.bf16.mxu0 0
        %813 = vmatpush1.bf16.xpose.msra.mxu0 0
        %814 = vmatprep.subr.bf16.mxu0 0
        %815 = vmatpush1.bf16.xpose.msra.mxu0 0
        %816 = vmatprep.subr.bf16.mxu0 0
        %817 = vmatpush1.bf16.xpose.msra.mxu0 %v800
        %818 = vmatprep.subr.bf16.mxu0 0
        %819 = vmatpush2.bf16.xpose.msra.mxu0 0
        %820 = vmatprep.subr.bf16.mxu0 0
        %821 = vmatpush2.bf16.xpose.msra.mxu0 0
        %822 = vmatprep.subr.bf16.mxu0 0
        %823 = vmatpush2.bf16.xpose.msra.mxu0 0
        %824 = vmatprep.subr.bf16.mxu0 0
        %825 = vmatpush2.bf16.xpose.msra.mxu0 0
        %826 = vmatprep.subr.bf16.mxu0 0
        %827 = vmatpush2.bf16.xpose.msra.mxu0 0
        %828 = vmatprep.subr.bf16.mxu0 0
        %829 = vmatpush2.bf16.xpose.msra.mxu0 0
        %830 = vmatprep.subr.bf16.mxu0 0
        %831 = vmatpush2.bf16.xpose.msra.mxu0 0
        %832 = vmatprep.subr.bf16.mxu0 0
        %833 = vmatpush2.bf16.xpose.msra.mxu0 0
        %834 = vmatprep.mubr.bf16.mxu0 0
        %835 = vmatmul.mubr.bf16.gmra.mxu0 %v797
        %v836 = vpop.f32.mrf.mxu0
        %v837 = vadd.f32 0.0, %v836
        %v838 = vpop.f32.mrf.mxu0
        %v839 = vpop.f32.mrf.mxu0
        %v840 = vpop.f32.mrf.mxu0
        %841 = vdwg.mxu0
        %v842 = vmul.f32 %v837, 0.35355338
        %vm843 = vcmp.gt.f32.partialorder %v674, 0.5
        %v844 = vsel %vm843, 1, 0
        %v845 = vlaneseq
        %v846 = vshrl.u32 %v845, 7
        %v847 = vsub.s32 0, %v846
        %v848 = vrot.slane %v844, %v847
        %vm849 = vcmp.eq.s32.totalorder %v848, 1
        %v850 = vsel %vm849, -1e+30, %v842
        %v851 = vsel %vm795, %v850, -inf
        %852 = vmax.xlane.f32.xlu0 %v851
        %v853 = vpop.xlane.xlu0 %852
        %v854 = vsub.f32 %v850, %v853
        %v855 = vmul.f32 %v854, 1.442695
        %v856 = vpow.pop %v855
        %v857 = vsel %vm795, %v856, 0.0
        %858 = vadd.xlane.f32.xlu0 %v857
        %v859 = vpop.xlane.xlu0 %858
        %v860 = vrcp.pop %v859
        %v861 = vmul.f32 %v856, %v860
        %v862 = vpack.c.bf16 %v861, %v861
        %v863 = vpack.c.bf16 %v786, %v786
        %v865 = vsel %vm795, %v862, 0
        %vm867 = vcmask 1043456
        %v869 = vsel %vm867, %v863, 0
        %871 = vmatprep.subr.bf16.mxu0 0
        %872 = vmatpush1.bf16.msra.mxu0 0
        %873 = vmatprep.subr.bf16.mxu0 0
        %874 = vmatpush1.bf16.msra.mxu0 0
        %875 = vmatprep.subr.bf16.mxu0 0
        %876 = vmatpush1.bf16.msra.mxu0 0
        %877 = vmatprep.subr.bf16.mxu0 0
        %878 = vmatpush1.bf16.msra.mxu0 0
        %879 = vmatprep.subr.bf16.mxu0 0
        %880 = vmatpush1.bf16.msra.mxu0 0
        %881 = vmatprep.subr.bf16.mxu0 0
        %882 = vmatpush1.bf16.msra.mxu0 0
        %883 = vmatprep.subr.bf16.mxu0 0
        %884 = vmatpush1.bf16.msra.mxu0 0
        %885 = vmatprep.subr.bf16.mxu0 0
        %886 = vmatpush1.bf16.msra.mxu0 %v869
        %887 = vmatprep.subr.bf16.mxu0 0
        %888 = vmatpush2.bf16.msra.mxu0 0
        %889 = vmatprep.subr.bf16.mxu0 0
        %890 = vmatpush2.bf16.msra.mxu0 0
        %891 = vmatprep.subr.bf16.mxu0 0
        %892 = vmatpush2.bf16.msra.mxu0 0
        %893 = vmatprep.subr.bf16.mxu0 0
        %894 = vmatpush2.bf16.msra.mxu0 0
        %895 = vmatprep.subr.bf16.mxu0 0
        %896 = vmatpush2.bf16.msra.mxu0 0
        %897 = vmatprep.subr.bf16.mxu0 0
        %898 = vmatpush2.bf16.msra.mxu0 0
        %899 = vmatprep.subr.bf16.mxu0 0
        %900 = vmatpush2.bf16.msra.mxu0 0
        %901 = vmatprep.subr.bf16.mxu0 0
        %902 = vmatpush2.bf16.msra.mxu0 0
        %903 = vmatprep.mubr.bf16.mxu0 0
        %904 = vmatmul.mubr.bf16.gmra.mxu0 %v865
        %v905 = vpop.f32.mrf.mxu0
        %v906 = vadd.f32 0.0, %v905
        %v907 = vpop.f32.mrf.mxu0
        %v908 = vpop.f32.mrf.mxu0
        %v909 = vpop.f32.mrf.mxu0
        %910 = vdwg.mxu0
        %911 = vrot.lane.b32.xlu0 %v791, 120
        %v912 = vpop.permute.xlu0 %911
        %913 = vrot.lane.b32.xlu0 %v791, 88
        %v914 = vpop.permute.xlu0 %913
        %v916 = vsel %vm795, %v912, 0
        %v919 = vsel %vm795, %v914, 0
        %921 = vmatprep.subr.bf16.mxu0 0
        %922 = vmatpush1.bf16.xpose.msra.mxu0 0
        %923 = vmatprep.subr.bf16.mxu0 0
        %924 = vmatpush1.bf16.xpose.msra.mxu0 0
        %925 = vmatprep.subr.bf16.mxu0 0
        %926 = vmatpush1.bf16.xpose.msra.mxu0 0
        %927 = vmatprep.subr.bf16.mxu0 0
        %928 = vmatpush1.bf16.xpose.msra.mxu0 0
        %929 = vmatprep.subr.bf16.mxu0 0
        %930 = vmatpush1.bf16.xpose.msra.mxu0 0
        %931 = vmatprep.subr.bf16.mxu0 0
        %932 = vmatpush1.bf16.xpose.msra.mxu0 0
        %933 = vmatprep.subr.bf16.mxu0 0
        %934 = vmatpush1.bf16.xpose.msra.mxu0 0
        %935 = vmatprep.subr.bf16.mxu0 0
        %936 = vmatpush1.bf16.xpose.msra.mxu0 %v919
        %937 = vmatprep.subr.bf16.mxu0 0
        %938 = vmatpush2.bf16.xpose.msra.mxu0 0
        %939 = vmatprep.subr.bf16.mxu0 0
        %940 = vmatpush2.bf16.xpose.msra.mxu0 0
        %941 = vmatprep.subr.bf16.mxu0 0
        %942 = vmatpush2.bf16.xpose.msra.mxu0 0
        %943 = vmatprep.subr.bf16.mxu0 0
        %944 = vmatpush2.bf16.xpose.msra.mxu0 0
        %945 = vmatprep.subr.bf16.mxu0 0
        %946 = vmatpush2.bf16.xpose.msra.mxu0 0
        %947 = vmatprep.subr.bf16.mxu0 0
        %948 = vmatpush2.bf16.xpose.msra.mxu0 0
        %949 = vmatprep.subr.bf16.mxu0 0
        %950 = vmatpush2.bf16.xpose.msra.mxu0 0
        %951 = vmatprep.subr.bf16.mxu0 0
        %952 = vmatpush2.bf16.xpose.msra.mxu0 0
        %953 = vmatprep.mubr.bf16.mxu0 0
        %954 = vmatmul.mubr.bf16.gmra.mxu0 %v916
        %v955 = vpop.f32.mrf.mxu0
        %v956 = vadd.f32 0.0, %v955
        %v957 = vpop.f32.mrf.mxu0
        %v958 = vpop.f32.mrf.mxu0
        %v959 = vpop.f32.mrf.mxu0
        %960 = vdwg.mxu0
        %v961 = vmul.f32 %v956, 0.35355338
        %v962 = vsel %vm849, -1e+30, %v961
        %v963 = vsel %vm795, %v962, -inf
        %964 = vmax.xlane.f32.xlu0 %v963
        %v965 = vpop.xlane.xlu0 %964
        %v966 = vsub.f32 %v962, %v965
        %v967 = vmul.f32 %v966, 1.442695
        %v968 = vpow.pop %v967
        %v969 = vsel %vm795, %v968, 0.0
        %970 = vadd.xlane.f32.xlu0 %v969
        %v971 = vpop.xlane.xlu0 %970
        %v972 = vrcp.pop %v971
        %v973 = vmul.f32 %v968, %v972
        %v974 = vpack.c.bf16 %v973, %v973
        %976 = vrot.lane.b32.xlu0 %v863, 120
        %v977 = vpop.permute.xlu0 %976
        %v979 = vsel %vm795, %v974, 0
        %v982 = vsel %vm867, %v977, 0
        %984 = vmatprep.subr.bf16.mxu0 0
        %985 = vmatpush1.bf16.msra.mxu0 0
        %986 = vmatprep.subr.bf16.mxu0 0
        %987 = vmatpush1.bf16.msra.mxu0 0
        %988 = vmatprep.subr.bf16.mxu0 0
        %989 = vmatpush1.bf16.msra.mxu0 0
        %990 = vmatprep.subr.bf16.mxu0 0
        %991 = vmatpush1.bf16.msra.mxu0 0
        %992 = vmatprep.subr.bf16.mxu0 0
        %993 = vmatpush1.bf16.msra.mxu0 0
        %994 = vmatprep.subr.bf16.mxu0 0
        %995 = vmatpush1.bf16.msra.mxu0 0
        %996 = vmatprep.subr.bf16.mxu0 0
        %997 = vmatpush1.bf16.msra.mxu0 0
        %998 = vmatprep.subr.bf16.mxu0 0
        %999 = vmatpush1.bf16.msra.mxu0 %v982
        %1000 = vmatprep.subr.bf16.mxu0 0
        %1001 = vmatpush2.bf16.msra.mxu0 0
        %1002 = vmatprep.subr.bf16.mxu0 0
        %1003 = vmatpush2.bf16.msra.mxu0 0
        %1004 = vmatprep.subr.bf16.mxu0 0
        %1005 = vmatpush2.bf16.msra.mxu0 0
        %1006 = vmatprep.subr.bf16.mxu0 0
        %1007 = vmatpush2.bf16.msra.mxu0 0
        %1008 = vmatprep.subr.bf16.mxu0 0
        %1009 = vmatpush2.bf16.msra.mxu0 0
        %1010 = vmatprep.subr.bf16.mxu0 0
        %1011 = vmatpush2.bf16.msra.mxu0 0
        %1012 = vmatprep.subr.bf16.mxu0 0
        %1013 = vmatpush2.bf16.msra.mxu0 0
        %1014 = vmatprep.subr.bf16.mxu0 0
        %1015 = vmatpush2.bf16.msra.mxu0 0
        %1016 = vmatprep.mubr.bf16.mxu0 0
        %1017 = vmatmul.mubr.bf16.gmra.mxu0 %v979
        %v1018 = vpop.f32.mrf.mxu0
        %v1019 = vadd.f32 0.0, %v1018
        %v1020 = vpop.f32.mrf.mxu0
        %v1021 = vpop.f32.mrf.mxu0
        %v1022 = vpop.f32.mrf.mxu0
        %1023 = vdwg.mxu0
        %1024 = vrot.lane.b32.xlu0 %v791, 112
        %v1025 = vpop.permute.xlu0 %1024
        %1026 = vrot.lane.b32.xlu0 %v791, 80
        %v1027 = vpop.permute.xlu0 %1026
        %v1029 = vsel %vm795, %v1025, 0
        %v1032 = vsel %vm795, %v1027, 0
        %1034 = vmatprep.subr.bf16.mxu0 0
        %1035 = vmatpush1.bf16.xpose.msra.mxu0 0
        %1036 = vmatprep.subr.bf16.mxu0 0
        %1037 = vmatpush1.bf16.xpose.msra.mxu0 0
        %1038 = vmatprep.subr.bf16.mxu0 0
        %1039 = vmatpush1.bf16.xpose.msra.mxu0 0
        %1040 = vmatprep.subr.bf16.mxu0 0
        %1041 = vmatpush1.bf16.xpose.msra.mxu0 0
        %1042 = vmatprep.subr.bf16.mxu0 0
        %1043 = vmatpush1.bf16.xpose.msra.mxu0 0
        %1044 = vmatprep.subr.bf16.mxu0 0
        %1045 = vmatpush1.bf16.xpose.msra.mxu0 0
        %1046 = vmatprep.subr.bf16.mxu0 0
        %1047 = vmatpush1.bf16.xpose.msra.mxu0 0
        %1048 = vmatprep.subr.bf16.mxu0 0
        %1049 = vmatpush1.bf16.xpose.msra.mxu0 %v1032
        %1050 = vmatprep.subr.bf16.mxu0 0
        %1051 = vmatpush2.bf16.xpose.msra.mxu0 0
        %1052 = vmatprep.subr.bf16.mxu0 0
        %1053 = vmatpush2.bf16.xpose.msra.mxu0 0
        %1054 = vmatprep.subr.bf16.mxu0 0
        %1055 = vmatpush2.bf16.xpose.msra.mxu0 0
        %1056 = vmatprep.subr.bf16.mxu0 0
        %1057 = vmatpush2.bf16.xpose.msra.mxu0 0
        %1058 = vmatprep.subr.bf16.mxu0 0
        %1059 = vmatpush2.bf16.xpose.msra.mxu0 0
        %1060 = vmatprep.subr.bf16.mxu0 0
        %1061 = vmatpush2.bf16.xpose.msra.mxu0 0
        %1062 = vmatprep.subr.bf16.mxu0 0
        %1063 = vmatpush2.bf16.xpose.msra.mxu0 0
        %1064 = vmatprep.subr.bf16.mxu0 0
        %1065 = vmatpush2.bf16.xpose.msra.mxu0 0
        %1066 = vmatprep.mubr.bf16.mxu0 0
        %1067 = vmatmul.mubr.bf16.gmra.mxu0 %v1029
        %v1068 = vpop.f32.mrf.mxu0
        %v1069 = vadd.f32 0.0, %v1068
        %v1070 = vpop.f32.mrf.mxu0
        %v1071 = vpop.f32.mrf.mxu0
        %v1072 = vpop.f32.mrf.mxu0
        %1073 = vdwg.mxu0
        %v1074 = vmul.f32 %v1069, 0.35355338
        %v1075 = vsel %vm849, -1e+30, %v1074
        %v1076 = vsel %vm795, %v1075, -inf
        %1077 = vmax.xlane.f32.xlu0 %v1076
        %v1078 = vpop.xlane.xlu0 %1077
        %v1079 = vsub.f32 %v1075, %v1078
        %v1080 = vmul.f32 %v1079, 1.442695
        %v1081 = vpow.pop %v1080
        %v1082 = vsel %vm795, %v1081, 0.0
        %1083 = vadd.xlane.f32.xlu0 %v1082
        %v1084 = vpop.xlane.xlu0 %1083
        %v1085 = vrcp.pop %v1084
        %v1086 = vmul.f32 %v1081, %v1085
        %v1087 = vpack.c.bf16 %v1086, %v1086
        %1088 = vrot.lane.b32.xlu0 %v863, 112
        %v1089 = vpop.permute.xlu0 %1088
        %v1091 = vsel %vm795, %v1087, 0
        %v1094 = vsel %vm867, %v1089, 0
        %1096 = vmatprep.subr.bf16.mxu0 0
        %1097 = vmatpush1.bf16.msra.mxu0 0
        %1098 = vmatprep.subr.bf16.mxu0 0
        %1099 = vmatpush1.bf16.msra.mxu0 0
        %1100 = vmatprep.subr.bf16.mxu0 0
        %1101 = vmatpush1.bf16.msra.mxu0 0
        %1102 = vmatprep.subr.bf16.mxu0 0
        %1103 = vmatpush1.bf16.msra.mxu0 0
        %1104 = vmatprep.subr.bf16.mxu0 0
        %1105 = vmatpush1.bf16.msra.mxu0 0
        %1106 = vmatprep.subr.bf16.mxu0 0
        %1107 = vmatpush1.bf16.msra.mxu0 0
        %1108 = vmatprep.subr.bf16.mxu0 0
        %1109 = vmatpush1.bf16.msra.mxu0 0
        %1110 = vmatprep.subr.bf16.mxu0 0
        %1111 = vmatpush1.bf16.msra.mxu0 %v1094
        %1112 = vmatprep.subr.bf16.mxu0 0
        %1113 = vmatpush2.bf16.msra.mxu0 0
        %1114 = vmatprep.subr.bf16.mxu0 0
        %1115 = vmatpush2.bf16.msra.mxu0 0
        %1116 = vmatprep.subr.bf16.mxu0 0
        %1117 = vmatpush2.bf16.msra.mxu0 0
        %1118 = vmatprep.subr.bf16.mxu0 0
        %1119 = vmatpush2.bf16.msra.mxu0 0
        %1120 = vmatprep.subr.bf16.mxu0 0
        %1121 = vmatpush2.bf16.msra.mxu0 0
        %1122 = vmatprep.subr.bf16.mxu0 0
        %1123 = vmatpush2.bf16.msra.mxu0 0
        %1124 = vmatprep.subr.bf16.mxu0 0
        %1125 = vmatpush2.bf16.msra.mxu0 0
        %1126 = vmatprep.subr.bf16.mxu0 0
        %1127 = vmatpush2.bf16.msra.mxu0 0
        %1128 = vmatprep.mubr.bf16.mxu0 0
        %1129 = vmatmul.mubr.bf16.gmra.mxu0 %v1091
        %v1130 = vpop.f32.mrf.mxu0
        %v1131 = vadd.f32 0.0, %v1130
        %v1132 = vpop.f32.mrf.mxu0
        %v1133 = vpop.f32.mrf.mxu0
        %v1134 = vpop.f32.mrf.mxu0
        %1135 = vdwg.mxu0
        %1136 = vrot.lane.b32.xlu0 %v791, 104
        %v1137 = vpop.permute.xlu0 %1136
        %1138 = vrot.lane.b32.xlu0 %v791, 72
        %v1139 = vpop.permute.xlu0 %1138
        %v1141 = vsel %vm795, %v1137, 0
        %v1144 = vsel %vm795, %v1139, 0
        %1146 = vmatprep.subr.bf16.mxu0 0
        %1147 = vmatpush1.bf16.xpose.msra.mxu0 0
        %1148 = vmatprep.subr.bf16.mxu0 0
        %1149 = vmatpush1.bf16.xpose.msra.mxu0 0
        %1150 = vmatprep.subr.bf16.mxu0 0
        %1151 = vmatpush1.bf16.xpose.msra.mxu0 0
        %1152 = vmatprep.subr.bf16.mxu0 0
        %1153 = vmatpush1.bf16.xpose.msra.mxu0 0
        %1154 = vmatprep.subr.bf16.mxu0 0
        %1155 = vmatpush1.bf16.xpose.msra.mxu0 0
        %1156 = vmatprep.subr.bf16.mxu0 0
        %1157 = vmatpush1.bf16.xpose.msra.mxu0 0
        %1158 = vmatprep.subr.bf16.mxu0 0
        %1159 = vmatpush1.bf16.xpose.msra.mxu0 0
        %1160 = vmatprep.subr.bf16.mxu0 0
        %1161 = vmatpush1.bf16.xpose.msra.mxu0 %v1144
        %1162 = vmatprep.subr.bf16.mxu0 0
        %1163 = vmatpush2.bf16.xpose.msra.mxu0 0
        %1164 = vmatprep.subr.bf16.mxu0 0
        %1165 = vmatpush2.bf16.xpose.msra.mxu0 0
        %1166 = vmatprep.subr.bf16.mxu0 0
        %1167 = vmatpush2.bf16.xpose.msra.mxu0 0
        %1168 = vmatprep.subr.bf16.mxu0 0
        %1169 = vmatpush2.bf16.xpose.msra.mxu0 0
        %1170 = vmatprep.subr.bf16.mxu0 0
        %1171 = vmatpush2.bf16.xpose.msra.mxu0 0
        %1172 = vmatprep.subr.bf16.mxu0 0
        %1173 = vmatpush2.bf16.xpose.msra.mxu0 0
        %1174 = vmatprep.subr.bf16.mxu0 0
        %1175 = vmatpush2.bf16.xpose.msra.mxu0 0
        %1176 = vmatprep.subr.bf16.mxu0 0
        %1177 = vmatpush2.bf16.xpose.msra.mxu0 0
        %1178 = vmatprep.mubr.bf16.mxu0 0
        %1179 = vmatmul.mubr.bf16.gmra.mxu0 %v1141
        %v1180 = vpop.f32.mrf.mxu0
        %v1181 = vadd.f32 0.0, %v1180
        %v1182 = vpop.f32.mrf.mxu0
        %v1183 = vpop.f32.mrf.mxu0
        %v1184 = vpop.f32.mrf.mxu0
        %1185 = vdwg.mxu0
        %v1186 = vmul.f32 %v1181, 0.35355338
        %v1187 = vsel %vm849, -1e+30, %v1186
        %v1188 = vsel %vm795, %v1187, -inf
        %1189 = vmax.xlane.f32.xlu0 %v1188
        %v1190 = vpop.xlane.xlu0 %1189
        %v1191 = vsub.f32 %v1187, %v1190
        %v1192 = vmul.f32 %v1191, 1.442695
        %v1193 = vpow.pop %v1192
        %v1194 = vsel %vm795, %v1193, 0.0
        %1195 = vadd.xlane.f32.xlu0 %v1194
        %v1196 = vpop.xlane.xlu0 %1195
        %v1197 = vrcp.pop %v1196
        %v1198 = vmul.f32 %v1193, %v1197
        %v1199 = vpack.c.bf16 %v1198, %v1198
        %1200 = vrot.lane.b32.xlu0 %v863, 104
        %v1201 = vpop.permute.xlu0 %1200
        %v1203 = vsel %vm795, %v1199, 0
        %v1206 = vsel %vm867, %v1201, 0
        %1208 = vmatprep.subr.bf16.mxu0 0
        %1209 = vmatpush1.bf16.msra.mxu0 0
        %1210 = vmatprep.subr.bf16.mxu0 0
        %1211 = vmatpush1.bf16.msra.mxu0 0
        %1212 = vmatprep.subr.bf16.mxu0 0
        %1213 = vmatpush1.bf16.msra.mxu0 0
        %1214 = vmatprep.subr.bf16.mxu0 0
        %1215 = vmatpush1.bf16.msra.mxu0 0
        %1216 = vmatprep.subr.bf16.mxu0 0
        %1217 = vmatpush1.bf16.msra.mxu0 0
        %1218 = vmatprep.subr.bf16.mxu0 0
        %1219 = vmatpush1.bf16.msra.mxu0 0
        %1220 = vmatprep.subr.bf16.mxu0 0
        %1221 = vmatpush1.bf16.msra.mxu0 0
        %1222 = vmatprep.subr.bf16.mxu0 0
        %1223 = vmatpush1.bf16.msra.mxu0 %v1206
        %1224 = vmatprep.subr.bf16.mxu0 0
        %1225 = vmatpush2.bf16.msra.mxu0 0
        %1226 = vmatprep.subr.bf16.mxu0 0
        %1227 = vmatpush2.bf16.msra.mxu0 0
        %1228 = vmatprep.subr.bf16.mxu0 0
        %1229 = vmatpush2.bf16.msra.mxu0 0
        %1230 = vmatprep.subr.bf16.mxu0 0
        %1231 = vmatpush2.bf16.msra.mxu0 0
        %1232 = vmatprep.subr.bf16.mxu0 0
        %1233 = vmatpush2.bf16.msra.mxu0 0
        %1234 = vmatprep.subr.bf16.mxu0 0
        %1235 = vmatpush2.bf16.msra.mxu0 0
        %1236 = vmatprep.subr.bf16.mxu0 0
        %1237 = vmatpush2.bf16.msra.mxu0 0
        %1238 = vmatprep.subr.bf16.mxu0 0
        %1239 = vmatpush2.bf16.msra.mxu0 0
        %1240 = vmatprep.mubr.bf16.mxu0 0
        %1241 = vmatmul.mubr.bf16.gmra.mxu0 %v1203
        %v1242 = vpop.f32.mrf.mxu0
        %v1243 = vadd.f32 0.0, %v1242
        %v1244 = vpop.f32.mrf.mxu0
        %v1245 = vpop.f32.mrf.mxu0
        %v1246 = vpop.f32.mrf.mxu0
        %1247 = vdwg.mxu0
        %1249 = vrot.lane.b32.xlu0 %v1019, 8
        %v1250 = vpop.permute.xlu0 %1249
        %1253 = vrot.lane.b32.xlu0 %v1131, 16
        %v1254 = vpop.permute.xlu0 %1253
        %1257 = vrot.lane.b32.xlu0 %v1243, 24
        %v1258 = vpop.permute.xlu0 %1257
        %v1260 = vsel %vm795, %v906, %v1250
        %vm1261 = vcmask 130048
        %v1262 = vsel %vm1261, %v1260, %v1254
        %vm1263 = vcmask 195584
        %v1264 = vsel %vm1263, %v1262, %v1258
        %v1265 = vld [vmem:[%s7] sm:$0xff]
        %v1266 = vld [vmem:[%s7 + $0x8] sm:$0xff]
        %v1267 = vld [vmem:[%s7 + $0x10] sm:$0xff]
        %v1268 = vld [vmem:[%s7 + $0x18] sm:$0xff]
        %v1269 = vpack.c.bf16 %v1264, %v1264
        %v1270 = vpack.c.bf16 %v1266, %v1265
        %v1271 = vpack.c.bf16 %v1268, %v1267
        %v1272 = vld [vmem:[#allocation6] sm:$0x1]
        %v1274 = vlaneseq
        %v1275 = vshrl.u32 %v1274, 7
        %v1276 = vsub.s32 0, %v1275
        %v1277 = vrot.slane %v1272, %v1276
        %v1280 = vsel %vm690, %v1269, 0
        %1282 = vmatprep.subr.bf16.mxu0 0
        %1283 = vmatpush1.bf16.msra.mxu0 0
        %1284 = vmatprep.subr.bf16.mxu0 0
        %1285 = vmatpush1.bf16.msra.mxu0 0
        %1286 = vmatprep.subr.bf16.mxu0 0
        %1287 = vmatpush1.bf16.msra.mxu0 0
        %1288 = vmatprep.subr.bf16.mxu0 0
        %1289 = vmatpush1.bf16.msra.mxu0 0
        %1290 = vmatprep.subr.bf16.mxu0 0
        %1291 = vmatpush1.bf16.msra.mxu0 0
        %1292 = vmatprep.subr.bf16.mxu0 0
        %1293 = vmatpush1.bf16.msra.mxu0 0
        %1294 = vmatprep.subr.bf16.mxu0 0
        %1295 = vmatpush1.bf16.msra.mxu0 %v1271
        %1296 = vmatprep.subr.bf16.mxu0 0
        %1297 = vmatpush1.bf16.msra.mxu0 %v1270
        %1298 = vmatprep.subr.bf16.mxu0 0
        %1299 = vmatpush2.bf16.msra.mxu0 0
        %1300 = vmatprep.subr.bf16.mxu0 0
        %1301 = vmatpush2.bf16.msra.mxu0 0
        %1302 = vmatprep.subr.bf16.mxu0 0
        %1303 = vmatpush2.bf16.msra.mxu0 0
        %1304 = vmatprep.subr.bf16.mxu0 0
        %1305 = vmatpush2.bf16.msra.mxu0 0
        %1306 = vmatprep.subr.bf16.mxu0 0
        %1307 = vmatpush2.bf16.msra.mxu0 0
        %1308 = vmatprep.subr.bf16.mxu0 0
        %1309 = vmatpush2.bf16.msra.mxu0 0
        %1310 = vmatprep.subr.bf16.mxu0 0
        %1311 = vmatpush2.bf16.msra.mxu0 0
        %1312 = vmatprep.subr.bf16.mxu0 0
        %1313 = vmatpush2.bf16.msra.mxu0 0
        %1314 = vmatprep.mubr.bf16.mxu0 0
        %1315 = vmatmul.mubr.bf16.gmra.mxu0 %v1280
        %v1316 = vpop.f32.mrf.mxu0
        %v1317 = vadd.f32 %v1277, %v1316
        %v1318 = vpop.f32.mrf.mxu0
        %v1319 = vpop.f32.mrf.mxu0
        %v1320 = vpop.f32.mrf.mxu0
        %1321 = vdwg.mxu0
        %v1322 = vadd.f32 %v675, %v1317
        %v1323 = vld [vmem:[#allocation7] sm:$0x1]
        %v1324 = vld [vmem:[#allocation9] sm:$0x1]
        %v1325 = vsel %vm690, %v1322, 0.0
        %1326 = vadd.xlane.f32.xlu0 %v1325
        %v1327 = vpop.xlane.xlu0 %1326
        %v1328 = vrcp.pop 32.0
        %v1329 = vmul.f32 %v1327, %v1328
        %v1330 = vsub.f32 %v1322, %v1329
        %v1331 = vmul.f32 %v1330, %v1330
        %v1332 = vsel %vm690, %v1331, 0.0
        %1333 = vadd.xlane.f32.xlu0 %v1332
        %v1334 = vpop.xlane.xlu0 %1333
        %v1335 = vmul.f32 %v1334, %v1328
        %v1336 = vadd.f32 %v1335, 1e-05
        %v1337 = vrsqrt.pop %v1336
        %v1338 = vmul.f32 %v1330, %v1337
        %v1340 = vlaneseq
        %v1341 = vshrl.u32 %v1340, 7
        %v1342 = vsub.s32 0, %v1341
        %v1343 = vrot.slane %v1323, %v1342
        %v1345 = vmul.f32 %v1338, %v1343
        %v1347 = vlaneseq
        %v1348 = vshrl.u32 %v1347, 7
        %v1349 = vsub.s32 0, %v1348
        %v1350 = vrot.slane %v1324, %v1349
        %v1352 = vadd.f32 %v1345, %v1350
        %v1353 = vld [vmem:[%s11] sm:$0xff]
        %v1354 = vld [vmem:[%s11 + $0x8] sm:$0xff]
        %v1355 = vld [vmem:[%s11 + $0x10] sm:$0xff]
        %v1356 = vld [vmem:[%s11 + $0x18] sm:$0xff]
        %v1357 = vpack.c.bf16 %v1352, %v1352
        %v1358 = vpack.c.bf16 %v1354, %v1353
        %v1359 = vpack.c.bf16 %v1356, %v1355
        %v1360 = vld [vmem:[#allocation10] sm:$0x1]
        %v1362 = vlaneseq
        %v1363 = vshrl.u32 %v1362, 7
        %v1364 = vsub.s32 0, %v1363
        %v1365 = vrot.slane %v1360, %v1364
        %v1368 = vsel %vm690, %v1357, 0
        %1370 = vmatprep.subr.bf16.mxu0 0
        %1371 = vmatpush1.bf16.msra.mxu0 0
        %1372 = vmatprep.subr.bf16.mxu0 0
        %1373 = vmatpush1.bf16.msra.mxu0 0
        %1374 = vmatprep.subr.bf16.mxu0 0
        %1375 = vmatpush1.bf16.msra.mxu0 0
        %1376 = vmatprep.subr.bf16.mxu0 0
        %1377 = vmatpush1.bf16.msra.mxu0 0
        %1378 = vmatprep.subr.bf16.mxu0 0
        %1379 = vmatpush1.bf16.msra.mxu0 0
        %1380 = vmatprep.subr.bf16.mxu0 0
        %1381 = vmatpush1.bf16.msra.mxu0 0
        %1382 = vmatprep.subr.bf16.mxu0 0
        %1383 = vmatpush1.bf16.msra.mxu0 %v1359
        %1384 = vmatprep.subr.bf16.mxu0 0
        %1385 = vmatpush1.bf16.msra.mxu0 %v1358
        %1386 = vmatprep.subr.bf16.mxu0 0
        %1387 = vmatpush2.bf16.msra.mxu0 0
        %1388 = vmatprep.subr.bf16.mxu0 0
        %1389 = vmatpush2.bf16.msra.mxu0 0
        %1390 = vmatprep.subr.bf16.mxu0 0
        %1391 = vmatpush2.bf16.msra.mxu0 0
        %1392 = vmatprep.subr.bf16.mxu0 0
        %1393 = vmatpush2.bf16.msra.mxu0 0
        %1394 = vmatprep.subr.bf16.mxu0 0
        %1395 = vmatpush2.bf16.msra.mxu0 0
        %1396 = vmatprep.subr.bf16.mxu0 0
        %1397 = vmatpush2.bf16.msra.mxu0 0
        %1398 = vmatprep.subr.bf16.mxu0 0
        %1399 = vmatpush2.bf16.msra.mxu0 0
        %1400 = vmatprep.subr.bf16.mxu0 0
        %1401 = vmatpush2.bf16.msra.mxu0 0
        %1402 = vmatprep.mubr.bf16.mxu0 0
        %1403 = vmatmul.mubr.bf16.gmra.mxu0 %v1368
        %v1404 = vpop.f32.mrf.mxu0
        %v1405 = vadd.f32 %v1365, %v1404
        %v1406 = vpop.f32.mrf.mxu0
        %v1407 = vpop.f32.mrf.mxu0
        %v1408 = vpop.f32.mrf.mxu0
        %1409 = vdwg.mxu0
        %v1410 = vmax.f32 %v1405, 0.0
        %v1411 = vld [vmem:[%s13] sm:$0xff]
        %v1412 = vld [vmem:[%s13 + $0x8] sm:$0xff]
        %v1413 = vld [vmem:[%s13 + $0x10] sm:$0xff]
        %v1414 = vld [vmem:[%s13 + $0x18] sm:$0xff]
        %v1415 = vld [vmem:[%s13 + $0x20] sm:$0xff]
        %v1416 = vld [vmem:[%s13 + $0x28] sm:$0xff]
        %v1417 = vld [vmem:[%s13 + $0x30] sm:$0xff]
        %v1418 = vld [vmem:[%s13 + $0x38] sm:$0xff]
        %v1419 = vpack.c.bf16 %v1410, %v1410
        %v1420 = vpack.c.bf16 %v1412, %v1411
        %v1421 = vpack.c.bf16 %v1414, %v1413
        %v1422 = vpack.c.bf16 %v1416, %v1415
        %v1423 = vpack.c.bf16 %v1418, %v1417
        %v1424 = vld [vmem:[#allocation12] sm:$0x1]
        %v1426 = vlaneseq
        %v1427 = vshrl.u32 %v1426, 7
        %v1428 = vsub.s32 0, %v1427
        %v1429 = vrot.slane %v1424, %v1428
        %vm1431 = vcmask 523264
        %v1433 = vsel %vm1431, %v1419, 0
        %1435 = vmatprep.subr.bf16.mxu0 0
        %1436 = vmatpush1.bf16.msra.mxu0 0
        %1437 = vmatprep.subr.bf16.mxu0 0
        %1438 = vmatpush1.bf16.msra.mxu0 0
        %1439 = vmatprep.subr.bf16.mxu0 0
        %1440 = vmatpush1.bf16.msra.mxu0 0
        %1441 = vmatprep.subr.bf16.mxu0 0
        %1442 = vmatpush1.bf16.msra.mxu0 0
        %1443 = vmatprep.subr.bf16.mxu0 0
        %1444 = vmatpush1.bf16.msra.mxu0 %v1423
        %1445 = vmatprep.subr.bf16.mxu0 0
        %1446 = vmatpush1.bf16.msra.mxu0 %v1422
        %1447 = vmatprep.subr.bf16.mxu0 0
        %1448 = vmatpush1.bf16.msra.mxu0 %v1421
        %1449 = vmatprep.subr.bf16.mxu0 0
        %1450 = vmatpush1.bf16.msra.mxu0 %v1420
        %1451 = vmatprep.subr.bf16.mxu0 0
        %1452 = vmatpush2.bf16.msra.mxu0 0
        %1453 = vmatprep.subr.bf16.mxu0 0
        %1454 = vmatpush2.bf16.msra.mxu0 0
        %1455 = vmatprep.subr.bf16.mxu0 0
        %1456 = vmatpush2.bf16.msra.mxu0 0
        %1457 = vmatprep.subr.bf16.mxu0 0
        %1458 = vmatpush2.bf16.msra.mxu0 0
        %1459 = vmatprep.subr.bf16.mxu0 0
        %1460 = vmatpush2.bf16.msra.mxu0 0
        %1461 = vmatprep.subr.bf16.mxu0 0
        %1462 = vmatpush2.bf16.msra.mxu0 0
        %1463 = vmatprep.subr.bf16.mxu0 0
        %1464 = vmatpush2.bf16.msra.mxu0 0
        %1465 = vmatprep.subr.bf16.mxu0 0
        %1466 = vmatpush2.bf16.msra.mxu0 0
        %1467 = vmatprep.mubr.bf16.mxu0 0
        %1468 = vmatmul.mubr.bf16.gmra.mxu0 %v1433
        %v1469 = vpop.f32.mrf.mxu0
        %v1470 = vadd.f32 %v1429, %v1469
        %v1471 = vpop.f32.mrf.mxu0
        %v1472 = vpop.f32.mrf.mxu0
        %v1473 = vpop.f32.mrf.mxu0
        %1474 = vdwg.mxu0
        %v1475 = vadd.f32 %v1352, %v1470
        %v1476 = vld [vmem:[#allocation13] sm:$0x1]
        %v1477 = vld [vmem:[#allocation15] sm:$0x1]
        %v1478 = vsel %vm690, %v1475, 0.0
        %1479 = vadd.xlane.f32.xlu0 %v1478
        %v1480 = vpop.xlane.xlu0 %1479
        %v1481 = vmul.f32 %v1480, %v1328
        %v1482 = vsub.f32 %v1475, %v1481
        %v1483 = vmul.f32 %v1482, %v1482
        %v1484 = vsel %vm690, %v1483, 0.0
        %1485 = vadd.xlane.f32.xlu0 %v1484
        %v1486 = vpop.xlane.xlu0 %1485
        %v1487 = vmul.f32 %v1486, %v1328
        %v1488 = vadd.f32 %v1487, 1e-05
        %v1489 = vrsqrt.pop %v1488
        %v1490 = vmul.f32 %v1482, %v1489
        %v1492 = vlaneseq
        %v1493 = vshrl.u32 %v1492, 7
        %v1494 = vsub.s32 0, %v1493
        %v1495 = vrot.slane %v1476, %v1494
        %v1497 = vmul.f32 %v1490, %v1495
        %v1499 = vlaneseq
        %v1500 = vshrl.u32 %v1499, 7
        %v1501 = vsub.s32 0, %v1500
        %v1502 = vrot.slane %v1477, %v1501
        %v1504 = vadd.f32 %v1497, %v1502
        %1505 = vst.msk [vmem:[%s670] sm:$0xff] %vm690, %v1504
        %p1506 = scmp.lt.s32.totalorder %s33, 1
        %s1507 = scalar_select %p1506, %s33, 1
        %s1508 = smul.addr %s1507, 8
        %s1509 = scalar_lea.vmem %s17, %s1508
        // Predicated region
        $region125: #{multi_level_encoder_box_forward.4} parent=87 // pred_check
          %p1510 = pneg %p418
        $region126: #{multi_level_encoder_box_forward.4} parent=87 // pred_check_branch
          %1512 = sbr.rel (%p1510) target = $region128
        $region127: #{multi_level_encoder_box_forward.4} parent=87 // pred_region
          _
        $region128: #{multi_level_encoder_box_forward.4} parent=87 // pred_fallthru
          _
      $region88: #{multi_level_encoder_box_forward.4} parent=5 // pred_fallthru
        _
      %p1513 = scmp.le.s32.totalorder 2, %s28
      // Predicated region
      $region129: #{multi_level_encoder_box_forward.4} parent=5 // pred_check
        %p1514 = pneg %p1513
      $region130: #{multi_level_encoder_box_forward.4} parent=5 // pred_check_branch
        %1516 = sbr.rel (%p1514) target = $region132
      $region131: #{multi_level_encoder_box_forward.4} parent=5 // pred_region
        %s1517 = ssub.s32 %s28, 2
        // Predicated region
        $region133: #{multi_level_encoder_box_forward.4} parent=131 // pred_check
          %p1518 = pneg %p424
        $region134: #{multi_level_encoder_box_forward.4} parent=131 // pred_check_branch
          %1520 = sbr.rel (%p1518) target = $region136
        $region135: #{multi_level_encoder_box_forward.4} parent=131 // pred_region
          %p1521 = scmp.lt.s32.totalorder %s34, 1
          %s1522 = scalar_select %p1521, %s34, 1
          %s1523 = smul.addr %s1522, 8
          %s1524 = scalar_lea.vmem %s17, %s1523
        $region136: #{multi_level_encoder_box_forward.4} parent=131 // pred_fallthru
          _
      $region132: #{multi_level_encoder_box_forward.4} parent=5 // pred_fallthru
        _
    $region6: #{multi_level_encoder_box_forward.4} parent=1 // loop_footer
      %s32 = sadd.s32 1, %s28
    $region7: #{multi_level_encoder_box_forward.4} parent=1 // loop_footer_branch
      %27 = sbr.rel target = $region3
    $region8: #{multi_level_encoder_box_forward.4} parent=1 // loop_exit
      _
    %1525 = vsyncpa [#allocation3], 1
    %s1526 = scalar_lea.sflag [#allocation3], 1
    %1527 = vsyncpa %s1526, 1
    %1528 = vsyncpa [#allocation5], 1
    %1529 = vsyncpa [#allocation8], 1
    %1530 = vsyncpa [#allocation11], 1
    %1531 = vsyncpa [#allocation14], 1

</llo_original>
